<compile_context>
chip_gen: v5e
topology: v5e:2x2
jax: 0.10.0
libtpu: 0.0.40
codegen_flags: <defaults>
</compile_context>

<pallas_src>
import functools

import jax
import jax.numpy as jnp
import numpy as np
from jax import lax
from jax.experimental import pallas as pl
from jax.experimental.pallas import tpu as pltpu

BN_EPS = 1e-5
LEAKY_SLOPE = 0.2      # GATConv default negative_slope
LANE = 128
NEG_INF = -1e30


def _round_up(v, m):
    return (v + m - 1) // m * m


def _fit_tile(total, want, unit):
    """Largest multiple of `unit` dividing `total`, not exceeding max(unit, min(want, total))."""
    want = max(unit, min(want, total))
    t = (want // unit) * unit
    while t > unit and total % t:
        t -= unit
    return t


def _pad2(a, rows, cols, dtype=jnp.float32):
    a = jnp.asarray(a, jnp.float32)
    out = jnp.zeros((rows, cols), jnp.float32).at[: a.shape[0], : a.shape[1]].set(a)
    return out.astype(dtype)


def _safe_inv(x):
    """1/x via EUP approx reciprocal + one Newton step; 0 where x <= 0."""
    xs = jnp.maximum(x, 1e-12)
    r = pl.reciprocal(xs, approx=True)
    r = r * (2.0 - xs * r)
    return jnp.where(x > 0.0, r, 0.0)


def intra_gcn_forward(x, adj_w, adj_b, params, *, tile_m=512, tile_k=512,
                      vmem_limit_bytes=None):
    """Eval-mode forward of Intra_GCN.  Returns (fea, x) == (out, out)."""
    f32, bf16 = jnp.float32, jnp.bfloat16
    N, F = x.shape
    H = params["w2l"].shape[0]            # n_hidden
    O = params["w4l"].shape[1]            # out_feats
    assert params["w11"].shape[1] == H, "conv1 out_channels must equal n_hidden"

    # Lane-dense padded widths.  Hp has one spare lane carrying <xg, att_dst>.
    Fp = _round_up(F, LANE)
    Hp = _round_up(H + 1, LANE)
    Op = _round_up(O, LANE)
    ADST = H                              # lane of xg holding <xg_i, att_dst>
    ADST_GRP, ADST_IN = ADST // LANE, ADST % LANE

    # Tiling: TM target rows per step (multiple of 16 for bf16 blocks), TK source
    # columns per reduction step (multiple of 128).  Both divide the padded node count.
    Np = _round_up(N, LANE)
    TM = _fit_tile(Np, tile_m, 16)
    if Np // TM < 2:                      # >=2 row tiles so "parallel" engages TC#2 (v7x)
        TM = max(16, Np // 2)
    TK = _fit_tile(Np, tile_k, LANE)
    n_row, n_k = Np // TM, Np // TK

    if vmem_limit_bytes is None:
        try:
            cap = pltpu.get_tpu_info().vmem_capacity_bytes
        except Exception:
            cap = 128 * 1024 * 1024
        # ~75% of physical VMEM, capped: v5e/v6e (128 MiB) -> 96 MiB, v7x (64 MiB) -> 48 MiB.
        vmem_limit_bytes = int(min(100 * 1024 * 1024, cap * 3 // 4))

    # ---------------- padded graph operands (N^2 streams in bf16; masks are exact) ----------
    xp = _pad2(x, Np, Fp)                                    # f32, row-blocked only
    awp = _pad2(adj_w, Np, Np, bf16)                         # weighted adjacency (LEConv)
    abp = _pad2(adj_b, Np, Np, bf16)                         # 0/1 adjacency (SAGE, GAT)
    # TODO(synk): on v7x the 0/1 adjacency could be stored fp8 for another 2x on that stream.

    # Degrees precomputed once (exact f32), delivered as lanes of a small row-blocked array.
    adj_w32 = jnp.asarray(adj_w, f32)
    adj_b32 = jnp.asarray(adj_b, f32)
    deg_w = jnp.sum(adj_w32, axis=1)
    deg_b = jnp.sum(adj_b32, axis=1)
    inv_deg = jnp.where(deg_b > 0.0, 1.0 / deg_b, 0.0)
    degs = jnp.zeros((Np, LANE), f32)
    degs = degs.at[:N, 0].set(deg_w)      # lane 0: weighted in-degree (LEConv)
    degs = degs.at[:N, 1].set(inv_deg)    # lane 1: 1/in-degree        (both SAGEConvs)

    # ---------------- parameter slabs: one lane-dense f32 slab per pallas_call ---------------
    def vec(name):
        return jnp.asarray(params[name], f32).reshape(-1)

    bn_scale = vec("bn_gamma") * lax.rsqrt(vec("bn_var") + BN_EPS)
    bn_shift = vec("bn_beta") - vec("bn_mean") * bn_scale

    W1 = max(Fp, Hp)
    r_w11, r_w12, r_w13 = 16, 16 + Fp, 16 + 2 * Fp
    r_b11, r_b13 = 16 + 3 * Fp, 24 + 3 * Fp
    R1 = 32 + 3 * Fp
    slab1 = jnp.zeros((R1, W1), f32)
    slab1 = slab1.at[0, :F].set(bn_scale)
    slab1 = slab1.at[8, :F].set(bn_shift)
    slab1 = slab1.at[r_w11:r_w11 + F, :H].set(jnp.asarray(params["w11"], f32))
    slab1 = slab1.at[r_w12:r_w12 + F, :H].set(jnp.asarray(params["w12"], f32))
    slab1 = slab1.at[r_w13:r_w13 + F, :H].set(jnp.asarray(params["w13"], f32))
    slab1 = slab1.at[r_b11, :H].set(vec("b11"))
    slab1 = slab1.at[r_b13, :H].set(vec("b13"))

    R2 = 2 * Hp + 8
    slab2 = jnp.zeros((R2, Hp), f32)
    slab2 = slab2.at[0:H, :H].set(jnp.asarray(params["w2l"], f32))
    slab2 = slab2.at[Hp:Hp + H, :H].set(jnp.asarray(params["w2r"], f32))
    slab2 = slab2.at[2 * Hp, :H].set(vec("b2l"))

    # GAT lin weight with <., att_dst> folded in as output lane ADST (no per-tile dot needed).
    w3 = jnp.asarray(params["w3"], f32)
    slab3 = jnp.zeros((Hp, Hp), f32)
    slab3 = slab3.at[:H, :H].set(w3)
    slab3 = slab3.at[:H, ADST].set(w3 @ vec("att_dst"))

    W4 = max(Hp, Op)
    r_att, r_b3 = 0, 8
    r_w4l, r_w4r, r_b4l = 16, 16 + Hp, 16 + 2 * Hp
    R4 = 24 + 2 * Hp
    slab4 = jnp.zeros((R4, W4), f32)
    slab4 = slab4.at[r_att, :H].set(vec("att_src"))
    slab4 = slab4.at[r_b3, :H].set(vec("b3"))
    slab4 = slab4.at[r_w4l:r_w4l + H, :O].set(jnp.asarray(params["w4l"], f32))
    slab4 = slab4.at[r_w4r:r_w4r + H, :O].set(jnp.asarray(params["w4r"], f32))
    slab4 = slab4.at[r_b4l, :O].set(vec("b4l"))

    def launch(kernel, grid, semantics, in_arrays, in_specs, out_shapes, out_specs,
               scratch_shapes=()):
        return pl.pallas_call(
            kernel,
            out_shape=out_shapes,
            grid_spec=pltpu.PrefetchScalarGridSpec(
                num_scalar_prefetch=0, grid=grid,
                in_specs=in_specs, out_specs=out_specs,
                scratch_shapes=list(scratch_shapes)),
            compiler_params=pltpu.CompilerParams(
                dimension_semantics=semantics,
                vmem_limit_bytes=vmem_limit_bytes),
        )(*in_arrays)

    # Block-spec helpers for the 2-D grid (i = target-row tile, k = source-column tile).
    row2 = lambda w: pl.BlockSpec((TM, w), lambda i, k: (i, 0))      # per target-row tile
    col2 = lambda w: pl.BlockSpec((TK, w), lambda i, k: (k, 0))      # per source-row tile
    adj2 = pl.BlockSpec((TM, TK), lambda i, k: (i, k))               # adjacency tile
    full2 = lambda r, c: pl.BlockSpec((r, c), lambda i, k: (0, 0))   # grid-invariant slab

    # ---------------- call 1: BatchNorm + LEConv per-node linear transforms ------------------
    def k_prep(x_ref, p_ref, a1_ref, bc_ref):
        h0 = x_ref[...] * p_ref[0:1, 0:Fp] + p_ref[8:9, 0:Fp]        # BatchNorm1d (eval)
        a1 = (jnp.dot(h0, p_ref[r_w11:r_w11 + Fp, 0:Hp], preferred_element_type=jnp.float32)
              + p_ref[r_b11:r_b11 + 1, 0:Hp])
        a1_ref[...] = a1.astype(a1_ref.dtype)
        bc_ref[:, 0:Hp] = jnp.dot(h0, p_ref[r_w12:r_w12 + Fp, 0:Hp],
                                  preferred_element_type=jnp.float32)
        bc_ref[:, Hp:2 * Hp] = (jnp.dot(h0, p_ref[r_w13:r_w13 + Fp, 0:Hp],
                                        preferred_element_type=jnp.float32)
                                + p_ref[r_b13:r_b13 + 1, 0:Hp])

    a1_full, bc_full = launch(
        k_prep, (n_row,), ("parallel",),
        (xp, slab1),
        [pl.BlockSpec((TM, Fp), lambda i: (i, 0)),
         pl.BlockSpec((R1, W1), lambda i: (0, 0))],
        (jax.ShapeDtypeStruct((Np, Hp), bf16), jax.ShapeDtypeStruct((Np, 2 * Hp), f32)),
        [pl.BlockSpec((TM, Hp), lambda i: (i, 0)),
         pl.BlockSpec((TM, 2 * Hp), lambda i: (i, 0))],
    )

    # ---------------- call 2: LEConv aggregation (+relu), SAGE2 per-node transforms ----------
    def k_leconv(aw_ref, a1_ref, bc_ref, dg_ref, p_ref, s2_ref, r2_ref, acc_ref):
        k = pl.program_id(1)

        @pl.when(k == 0)
        def _():
            acc_ref[...] = jnp.zeros_like(acc_ref)

        acc_ref[...] += jnp.dot(aw_ref[...], a1_ref[...],
                                preferred_element_type=jnp.float32)

        @pl.when(k == pl.num_programs(1) - 1)
        def _():
            deg = dg_ref[:, 0:1]                                     # weighted in-degree
            h1 = jnp.maximum(acc_ref[...] - deg * bc_ref[:, 0:Hp] + bc_ref[:, Hp:2 * Hp], 0.0)
            s2 = jnp.dot(h1, p_ref[0:Hp, :], preferred_element_type=jnp.float32)
            s2_ref[...] = s2.astype(s2_ref.dtype)
            r2_ref[...] = (jnp.dot(h1, p_ref[Hp:2 * Hp, :], preferred_element_type=jnp.float32)
                           + p_ref[2 * Hp:2 * Hp + 1, :])

    s2_full, r2_full = launch(
        k_leconv, (n_row, n_k), ("parallel", "arbitrary"),
        (awp, a1_full, bc_full, degs, slab2),
        [adj2, col2(Hp), row2(2 * Hp), row2(LANE), full2(R2, Hp)],
        (jax.ShapeDtypeStruct((Np, Hp), bf16), jax.ShapeDtypeStruct((Np, Hp), f32)),
        [row2(Hp), row2(Hp)],
        scratch_shapes=[pltpu.VMEM((TM, Hp), jnp.float32)],
    )

    # ---------------- call 3: SAGE2 aggregation (+relu), GAT per-node transform --------------
    def k_sage2(ab_ref, s2_ref, r2_ref, dg_ref, p_ref, xg_ref, acc_ref):
        k = pl.program_id(1)

        @pl.when(k == 0)
        def _():
            acc_ref[...] = jnp.zeros_like(acc_ref)

        acc_ref[...] += jnp.dot(ab_ref[...], s2_ref[...],
                                preferred_element_type=jnp.float32)

        @pl.when(k == pl.num_programs(1) - 1)
        def _():
            h2 = jnp.maximum(acc_ref[...] * dg_ref[:, 1:2] + r2_ref[...], 0.0)
            xg = jnp.dot(h2, p_ref[...], preferred_element_type=jnp.float32)
            xg_ref[...] = xg.astype(xg_ref.dtype)

    xg_full = launch(
        k_sage2, (n_row, n_k), ("parallel", "arbitrary"),
        (abp, s2_full, r2_full, degs, slab3),
        [adj2, col2(Hp), row2(Hp), row2(LANE), full2(Hp, Hp)],
        jax.ShapeDtypeStruct((Np, Hp), bf16),
        row2(Hp),
        scratch_shapes=[pltpu.VMEM((TM, Hp), jnp.float32)],
    )

    # --------- call 4: GAT (online softmax over source blocks) + SAGE4 per-node transforms ---
    def k_gat(ab_ref, xgs_ref, xgt_ref, p_ref, s4_ref, r4_ref, m_sc, l_sc, acc_sc):
        i, k = pl.program_id(0), pl.program_id(1)

        @pl.when(k == 0)
        def _():
            m_sc[...] = jnp.full_like(m_sc, NEG_INF)
            l_sc[...] = jnp.zeros_like(l_sc)
            acc_sc[...] = jnp.zeros_like(acc_sc)

        xg_blk = xgs_ref[...]                                        # (TK, Hp) source feats
        adst = xgt_ref[:, ADST_IN:ADST_IN + 1].astype(jnp.float32)   # (TM, 1)  <xg_i, att_dst>
        asrc = lax.dot_general(p_ref[r_att:r_att + 1, 0:Hp].astype(jnp.bfloat16), xg_blk,
                               (((1,), (1,)), ((), ())),
                               preferred_element_type=jnp.float32)   # (1, TK)  <xg_j, att_src>
        # 0/1 adjacency with the self-loop diagonal OR'd in per tile (no separate gmask array).
        rows = lax.broadcasted_iota(jnp.int32, (TM, TK), 0) + i * TM
        cols = lax.broadcasted_iota(jnp.int32, (TM, TK), 1) + k * TK
        mask = jnp.where(rows == cols, 1.0, ab_ref[...].astype(jnp.float32))

        e = adst + asrc
        e = jnp.where(e > 0.0, e, LEAKY_SLOPE * e)                   # leaky_relu(0.2)
        e = jnp.where(mask > 0.0, e, NEG_INF)
        # Online softmax (flash-attention style) over the K source blocks.
        m_new = jnp.maximum(m_sc[...], jnp.max(e, axis=1, keepdims=True))
        corr = jnp.exp(m_sc[...] - m_new)
        p = jnp.exp(e - m_new) * mask
        l_sc[...] = corr * l_sc[...] + jnp.sum(p, axis=1, keepdims=True)
        acc_sc[...] = corr * acc_sc[...] + jnp.dot(p.astype(jnp.bfloat16), xg_blk,
                                                   preferred_element_type=jnp.float32)
        m_sc[...] = m_new

        @pl.when(k == pl.num_programs(1) - 1)
        def _():
            inv_l = _safe_inv(l_sc[...])
            h3 = jnp.maximum(acc_sc[...] * inv_l + p_ref[r_b3:r_b3 + 1, 0:Hp], 0.0)
            s4 = jnp.dot(h3, p_ref[r_w4l:r_w4l + Hp, 0:Op], preferred_element_type=jnp.float32)
            s4_ref[...] = s4.astype(s4_ref.dtype)
            r4_ref[...] = (jnp.dot(h3, p_ref[r_w4r:r_w4r + Hp, 0:Op],
                                   preferred_element_type=jnp.float32)
                           + p_ref[r_b4l:r_b4l + 1, 0:Op])

    s4_full, r4_full = launch(
        k_gat, (n_row, n_k), ("parallel", "arbitrary"),
        (abp, xg_full, xg_full, slab4),
        [adj2, col2(Hp),
         pl.BlockSpec((TM, LANE), lambda i, k: (i, ADST_GRP)),       # target rows, adst lane
         full2(R4, W4)],
        (jax.ShapeDtypeStruct((Np, Op), bf16), jax.ShapeDtypeStruct((Np, Op), f32)),
        [row2(Op), row2(Op)],
        scratch_shapes=[pltpu.VMEM((TM, 1), jnp.float32),            # running max
                        pltpu.VMEM((TM, 1), jnp.float32),            # running denominator
                        pltpu.VMEM((TM, Hp), jnp.float32)],          # running numerator
    )

    # ---------------- call 5: SAGE4 aggregation (no relu; eval dropout = identity) -----------
    def k_sage4(ab_ref, s4_ref, r4_ref, dg_ref, o_ref, acc_ref):
        k = pl.program_id(1)

        @pl.when(k == 0)
        def _():
            acc_ref[...] = jnp.zeros_like(acc_ref)

        acc_ref[...] += jnp.dot(ab_ref[...], s4_ref[...],
                                preferred_element_type=jnp.float32)

        @pl.when(k == pl.num_programs(1) - 1)
        def _():
            o_ref[...] = acc_ref[...] * dg_ref[:, 1:2] + r4_ref[...]

    out_full = launch(
        k_sage4, (n_row, n_k), ("parallel", "arbitrary"),
        (abp, s4_full, r4_full, degs),
        [adj2, col2(Op), row2(Op), row2(LANE)],
        jax.ShapeDtypeStruct((Np, Op), f32),
        row2(Op),
        scratch_shapes=[pltpu.VMEM((TM, Op), jnp.float32)],
    )

    fea = out_full[:N, :O]
    return fea, fea


def _reference_forward(x, adj_w, adj_b, params):
    """Pure-JAX f32 (unpadded, untiled) reference of the eval-mode Intra_GCN forward."""
    f32 = jnp.float32
    hi = lax.Precision.HIGHEST
    x = x.astype(f32)
    n = x.shape[0]

    x = (x - params["bn_mean"]) * lax.rsqrt(params["bn_var"] + BN_EPS)
    x = x * params["bn_gamma"] + params["bn_beta"]

    a1 = jnp.dot(x, params["w11"], precision=hi) + params["b11"]
    b1 = jnp.dot(x, params["w12"], precision=hi)
    c1 = jnp.dot(x, params["w13"], precision=hi) + params["b13"]
    deg_w = jnp.sum(adj_w, axis=1, keepdims=True)
    h = jnp.dot(adj_w, a1, precision=hi) - deg_w * b1 + c1
    h = jnp.maximum(h, 0.0)

    deg = jnp.sum(adj_b, axis=1, keepdims=True)
    inv_deg = jnp.where(deg > 0.0, 1.0 / deg, 0.0)
    neigh = jnp.dot(adj_b, h, precision=hi) * inv_deg
    h = (jnp.dot(neigh, params["w2l"], precision=hi) + params["b2l"]
         + jnp.dot(h, params["w2r"], precision=hi))
    h = jnp.maximum(h, 0.0)

    xg = jnp.dot(h, params["w3"], precision=hi)
    adst = jnp.dot(xg, params["att_dst"].T, precision=hi)            # [n, 1]
    asrc = jnp.dot(xg, params["att_src"].T, precision=hi).T          # [1, n]
    e = adst + asrc
    e = jnp.where(e > 0.0, e, LEAKY_SLOPE * e)
    mask = jnp.logical_or(adj_b > 0.0, jnp.eye(n, dtype=bool))
    e = jnp.where(mask, e, NEG_INF)
    p = jnp.exp(e - jnp.max(e, axis=1, keepdims=True)) * mask.astype(f32)
    alpha = p / jnp.sum(p, axis=1, keepdims=True)
    h = jnp.dot(alpha, xg, precision=hi) + params["b3"]
    h = jnp.maximum(h, 0.0)

    neigh = jnp.dot(adj_b, h, precision=hi) * inv_deg
    h = (jnp.dot(neigh, params["w4l"], precision=hi) + params["b4l"]
         + jnp.dot(h, params["w4r"], precision=hi))
    return h  # F.dropout(p=0.2, training=False) -> identity


def _check(out, ref):
    """bf16-streamed kernel vs f32 reference: tolerance scales with the output magnitude."""
    out, ref = np.asarray(out), np.asarray(ref)
    scale = max(1.0, float(np.abs(ref).max()))
    np.testing.assert_allclose(out, ref, rtol=4e-2, atol=4e-2 * scale)


def _make_graph(key, n, in_feats, p_edge):
    k0, k1, k2 = jax.random.split(key, 3)
    x = jax.random.normal(k0, (n, in_feats), jnp.float32)
    adj_b = (jax.random.uniform(k1, (n, n)) < p_edge).astype(jnp.float32)
    adj_b = adj_b * (1.0 - jnp.eye(n, dtype=jnp.float32))
    adj_w = adj_b * jax.random.uniform(k2, (n, n), jnp.float32, 0.1, 1.0)
    return x, adj_w, adj_b


if __name__ == "__main__":
    key = jax.random.PRNGKey(0)
    # out_feats must equal n_hidden for the module's layer chain to be shape-consistent.
    in_feats, n_hidden, out_feats = 8, 32, 32
    ks = jax.random.split(key, 32)

    def lin(k, shape, scale=0.2):
        return scale * jax.random.normal(k, shape, jnp.float32)

    params = dict(
        # BatchNorm1d(in_feats) eval-mode parameters / running stats
        bn_gamma=1.0 + lin(ks[3], (1, in_feats), 0.1),
        bn_beta=lin(ks[4], (1, in_feats), 0.1),
        bn_mean=lin(ks[5], (1, in_feats), 0.1),
        bn_var=1.0 + jnp.abs(lin(ks[6], (1, in_feats), 0.1)),
        # LEConv(in_feats -> out_feats): lin1(w,b), lin2(w), lin3(w,b)
        w11=lin(ks[7], (in_feats, out_feats)),
        b11=lin(ks[8], (1, out_feats)),
        w12=lin(ks[9], (in_feats, out_feats)),
        w13=lin(ks[10], (in_feats, out_feats)),
        b13=lin(ks[11], (1, out_feats)),
        # SAGEConv(n_hidden -> n_hidden): lin_l(w,b), lin_r(w)
        w2l=lin(ks[12], (n_hidden, n_hidden)),
        b2l=lin(ks[13], (1, n_hidden)),
        w2r=lin(ks[14], (n_hidden, n_hidden)),
        # GATConv(n_hidden -> n_hidden), heads=1: lin(w), att_src, att_dst, bias
        w3=lin(ks[15], (n_hidden, n_hidden)),
        att_src=lin(ks[16], (1, n_hidden)),
        att_dst=lin(ks[17], (1, n_hidden)),
        b3=lin(ks[18], (1, n_hidden)),
        # SAGEConv(n_hidden -> out_feats): lin_l(w,b), lin_r(w)
        w4l=lin(ks[19], (n_hidden, out_feats)),
        b4l=lin(ks[20], (1, out_feats)),
        w4r=lin(ks[21], (n_hidden, out_feats)),
    )

    # Test A: small graph, default tiles (single K block, >=2 row tiles enforced).
    x1, aw1, ab1 = _make_graph(ks[0], 16, in_feats, 0.3)
    fwd1 = jax.jit(functools.partial(intra_gcn_forward))
    fea1, x_out1 = fwd1(x1, aw1, ab1, params)
    jax.block_until_ready(fea1)
    _check(fea1, _reference_forward(x1, aw1, ab1, params))
    np.testing.assert_allclose(np.asarray(x_out1), np.asarray(fea1))

    # Test B: non-multiple-of-tile node count, deliberately small row tile (4 row tiles).
    x2, aw2, ab2 = _make_graph(ks[22], 40, in_feats, 0.2)
    fwd2 = jax.jit(functools.partial(intra_gcn_forward, tile_m=32, tile_k=128))
    fea2, _ = fwd2(x2, aw2, ab2, params)
    jax.block_until_ready(fea2)
    _check(fea2, _reference_forward(x2, aw2, ab2, params))

    # Test C: exercises the K-reduction axis (2 source blocks) and the online GAT softmax.
    x3, aw3, ab3 = _make_graph(ks[23], 200, in_feats, 0.1)
    fwd3 = jax.jit(functools.partial(intra_gcn_forward, tile_m=128, tile_k=128))
    fea3, _ = fwd3(x3, aw3, ab3, params)
    jax.block_until_ready(fea3)
    _check(fea3, _reference_forward(x3, aw3, ab3, params))

    print("KERNEL_OK")
</pallas_src>

<mosaic_0001>
module attributes {stable_mosaic.version = 11 : i64} {
  func.func @k_prep(%arg0: i32, %arg1: memref<64x128xf32, #tpu.memory_space<vmem>>, %arg2: memref<416x128xf32, #tpu.memory_space<vmem>>, %arg3: memref<64x128xbf16, #tpu.memory_space<vmem>>, %arg4: memref<64x256xf32, #tpu.memory_space<vmem>>) attributes {dimension_semantics = [#tpu.dimension_semantics<parallel>], iteration_bounds = array<i64: 2>, scalar_prefetch = 0 : i64, scratch_operands = 0 : i64, tpu.core_type = #tpu.core_type<tc>, window_params = [{transform_indices = @transform_0, window_bounds = array<i64: 64, 128>}, {pipeline_mode = #tpu.pipeline_mode<synchronous>, transform_indices = @transform_1, window_bounds = array<i64: 416, 128>}, {transform_indices = @transform_2, window_bounds = array<i64: 64, 128>}, {transform_indices = @transform_3, window_bounds = array<i64: 64, 256>}]} {
    %c0 = arith.constant 0 : index
    %c0_0 = arith.constant 0 : index
    %0 = vector.load %arg1[%c0, %c0_0] : memref<64x128xf32, #tpu.memory_space<vmem>>, vector<64x128xf32>
    %c0_1 = arith.constant 0 : index
    %c0_2 = arith.constant 0 : index
    %1 = vector.load %arg2[%c0_1, %c0_2] : memref<416x128xf32, #tpu.memory_space<vmem>>, vector<1x128xf32>
    %2 = vector.broadcast %1 : vector<1x128xf32> to vector<64x128xf32>
    %3 = arith.mulf %0, %2 : vector<64x128xf32>
    %c8 = arith.constant 8 : index
    %c0_3 = arith.constant 0 : index
    %4 = vector.load %arg2[%c8, %c0_3] : memref<416x128xf32, #tpu.memory_space<vmem>>, vector<1x128xf32>
    %5 = vector.broadcast %4 : vector<1x128xf32> to vector<64x128xf32>
    %6 = arith.addf %3, %5 : vector<64x128xf32>
    %c16 = arith.constant 16 : index
    %c0_4 = arith.constant 0 : index
    %7 = vector.load %arg2[%c16, %c0_4] : memref<416x128xf32, #tpu.memory_space<vmem>>, vector<128x128xf32>
    %cst = arith.constant dense<0.000000e+00> : vector<64x128xf32>
    %8 = tpu.matmul %6, %7, %cst {dimension_numbers = #tpu.dot_dimension_numbers<[1], [0], [0], [1], [0, 0, 1, 1], [], []>} : vector<64x128xf32>, vector<128x128xf32>, vector<64x128xf32> -> vector<64x128xf32>
    %c400 = arith.constant 400 : index
    %c0_5 = arith.constant 0 : index
    %9 = vector.load %arg2[%c400, %c0_5] : memref<416x128xf32, #tpu.memory_space<vmem>>, vector<1x128xf32>
    %10 = vector.broadcast %9 : vector<1x128xf32> to vector<64x128xf32>
    %11 = arith.addf %8, %10 : vector<64x128xf32>
    %12 = arith.truncf %11 : vector<64x128xf32> to vector<64x128xbf16>
    %c0_6 = arith.constant 0 : index
    %c0_7 = arith.constant 0 : index
    %13 = vector.load %arg3[%c0_6, %c0_7] : memref<64x128xbf16, #tpu.memory_space<vmem>>, vector<64x128xbf16>
    tpu.vector_store %arg3[%c0_6, %c0_7], %12 {strides = array<i32>} : memref<64x128xbf16, #tpu.memory_space<vmem>>, vector<64x128xbf16>,
    %c144 = arith.constant 144 : index
    %c0_8 = arith.constant 0 : index
    %14 = vector.load %arg2[%c144, %c0_8] : memref<416x128xf32, #tpu.memory_space<vmem>>, vector<128x128xf32>
    %cst_9 = arith.constant dense<0.000000e+00> : vector<64x128xf32>
    %15 = tpu.matmul %6, %14, %cst_9 {dimension_numbers = #tpu.dot_dimension_numbers<[1], [0], [0], [1], [0, 0, 1, 1], [], []>} : vector<64x128xf32>, vector<128x128xf32>, vector<64x128xf32> -> vector<64x128xf32>
    %c0_10 = arith.constant 0 : index
    %c0_11 = arith.constant 0 : index
    %16 = vector.load %arg4[%c0_10, %c0_11] : memref<64x256xf32, #tpu.memory_space<vmem>>, vector<64x128xf32>
    tpu.vector_store %arg4[%c0_10, %c0_11], %15 {strides = array<i32>} : memref<64x256xf32, #tpu.memory_space<vmem>>, vector<64x128xf32>,
    %c272 = arith.constant 272 : index
    %c0_12 = arith.constant 0 : index
    %17 = vector.load %arg2[%c272, %c0_12] : memref<416x128xf32, #tpu.memory_space<vmem>>, vector<128x128xf32>
    %cst_13 = arith.constant dense<0.000000e+00> : vector<64x128xf32>
    %18 = tpu.matmul %6, %17, %cst_13 {dimension_numbers = #tpu.dot_dimension_numbers<[1], [0], [0], [1], [0, 0, 1, 1], [], []>} : vector<64x128xf32>, vector<128x128xf32>, vector<64x128xf32> -> vector<64x128xf32>
    %c408 = arith.constant 408 : index
    %c0_14 = arith.constant 0 : index
    %19 = vector.load %arg2[%c408, %c0_14] : memref<416x128xf32, #tpu.memory_space<vmem>>, vector<1x128xf32>
    %20 = vector.broadcast %19 : vector<1x128xf32> to vector<64x128xf32>
    %21 = arith.addf %18, %20 : vector<64x128xf32>
    %c0_15 = arith.constant 0 : index
    %c128 = arith.constant 128 : index
    %22 = vector.load %arg4[%c0_15, %c128] : memref<64x256xf32, #tpu.memory_space<vmem>>, vector<64x128xf32>
    tpu.vector_store %arg4[%c0_15, %c128], %21 {strides = array<i32>} : memref<64x256xf32, #tpu.memory_space<vmem>>, vector<64x128xf32>,
    return
  }
  func.func @transform_0(%arg0: i32) -> (i32, i32) {
    %c0_i32 = arith.constant 0 : i32
    %c0_i32_0 = arith.constant 0 : i32
    return %arg0, %c0_i32 : i32, i32
  }
  func.func @transform_1(%arg0: i32) -> (i32, i32) {
    %c0_i32 = arith.constant 0 : i32
    %c0_i32_0 = arith.constant 0 : i32
    %c0_i32_1 = arith.constant 0 : i32
    return %c0_i32, %c0_i32_0 : i32, i32
  }
  func.func @transform_2(%arg0: i32) -> (i32, i32) {
    %c0_i32 = arith.constant 0 : i32
    %c0_i32_0 = arith.constant 0 : i32
    return %arg0, %c0_i32 : i32, i32
  }
  func.func @transform_3(%arg0: i32) -> (i32, i32) {
    %c0_i32 = arith.constant 0 : i32
    %c0_i32_0 = arith.constant 0 : i32
    return %arg0, %c0_i32 : i32, i32
  }
}

module attributes {stable_mosaic.version = 11 : i64} {
  func.func @k_leconv(%arg0: i32, %arg1: i32, %arg2: memref<64x128xbf16, #tpu.memory_space<vmem>>, %arg3: memref<128x128xbf16, #tpu.memory_space<vmem>>, %arg4: memref<64x256xf32, #tpu.memory_space<vmem>>, %arg5: memref<64x128xf32, #tpu.memory_space<vmem>>, %arg6: memref<264x128xf32, #tpu.memory_space<vmem>>, %arg7: memref<64x128xbf16, #tpu.memory_space<vmem>>, %arg8: memref<64x128xf32, #tpu.memory_space<vmem>>, %arg9: memref<64x128xf32, #tpu.memory_space<vmem>>) attributes {dimension_semantics = [#tpu.dimension_semantics<parallel>, #tpu.dimension_semantics<arbitrary>], iteration_bounds = array<i64: 2, 1>, scalar_prefetch = 0 : i64, scratch_operands = 1 : i64, tpu.core_type = #tpu.core_type<tc>, window_params = [{transform_indices = @transform_0, window_bounds = array<i64: 64, 128>}, {transform_indices = @transform_1, window_bounds = array<i64: 128, 128>}, {transform_indices = @transform_2, window_bounds = array<i64: 64, 256>}, {transform_indices = @transform_3, window_bounds = array<i64: 64, 128>}, {pipeline_mode = #tpu.pipeline_mode<synchronous>, transform_indices = @transform_4, window_bounds = array<i64: 264, 128>}, {transform_indices = @transform_5, window_bounds = array<i64: 64, 128>}, {transform_indices = @transform_6, window_bounds = array<i64: 64, 128>}]} {
    %c0_i32 = arith.constant 0 : i32
    %0 = arith.cmpi eq, %arg1, %c0_i32 : i32
    %1 = arith.extui %0 : i1 to i32
    %c0_i32_0 = arith.constant 0 : i32
    %2 = arith.cmpi ne, %1, %c0_i32_0 : i32
    scf.if %2 {
      %cst_10 = arith.constant 0.000000e+00 : f32
      %12 = vector.broadcast %cst_10 : f32 to vector<64x128xf32>
      %c0_11 = arith.constant 0 : index
      %c0_12 = arith.constant 0 : index
      %13 = vector.load %arg9[%c0_11, %c0_12] : memref<64x128xf32, #tpu.memory_space<vmem>>, vector<64x128xf32>
      tpu.vector_store %arg9[%c0_11, %c0_12], %12 {strides = array<i32>} : memref<64x128xf32, #tpu.memory_space<vmem>>, vector<64x128xf32>,
    } else {
    }
    %c0 = arith.constant 0 : index
    %c0_1 = arith.constant 0 : index
    %3 = vector.load %arg9[%c0, %c0_1] : memref<64x128xf32, #tpu.memory_space<vmem>>, vector<64x128xf32>
    %c0_2 = arith.constant 0 : index
    %c0_3 = arith.constant 0 : index
    %4 = vector.load %arg2[%c0_2, %c0_3] : memref<64x128xbf16, #tpu.memory_space<vmem>>, vector<64x128xbf16>
    %c0_4 = arith.constant 0 : index
    %c0_5 = arith.constant 0 : index
    %5 = vector.load %arg3[%c0_4, %c0_5] : memref<128x128xbf16, #tpu.memory_space<vmem>>, vector<128x128xbf16>
    %cst = arith.constant dense<0.000000e+00> : vector<64x128xf32>
    %6 = tpu.matmul %4, %5, %cst {dimension_numbers = #tpu.dot_dimension_numbers<[1], [0], [0], [1], [0, 0, 1, 1], [], []>} : vector<64x128xbf16>, vector<128x128xbf16>, vector<64x128xf32> -> vector<64x128xf32>
    %7 = arith.addf %3, %6 : vector<64x128xf32>
    %c0_6 = arith.constant 0 : index
    %c0_7 = arith.constant 0 : index
    %8 = vector.load %arg9[%c0_6, %c0_7] : memref<64x128xf32, #tpu.memory_space<vmem>>, vector<64x128xf32>
    tpu.vector_store %arg9[%c0_6, %c0_7], %7 {strides = array<i32>} : memref<64x128xf32, #tpu.memory_space<vmem>>, vector<64x128xf32>,
    %c0_i32_8 = arith.constant 0 : i32
    %9 = arith.cmpi eq, %arg1, %c0_i32_8 : i32
    %10 = arith.extui %9 : i1 to i32
    %c0_i32_9 = arith.constant 0 : i32
    %11 = arith.cmpi ne, %10, %c0_i32_9 : i32
    scf.if %11 {
      %c0_10 = arith.constant 0 : index
      %c0_11 = arith.constant 0 : index
      %12 = vector.load %arg5[%c0_10, %c0_11] : memref<64x128xf32, #tpu.memory_space<vmem>>, vector<64x1xf32>
      %c0_12 = arith.constant 0 : index
      %c0_13 = arith.constant 0 : index
      %13 = vector.load %arg9[%c0_12, %c0_13] : memref<64x128xf32, #tpu.memory_space<vmem>>, vector<64x128xf32>
      %c0_14 = arith.constant 0 : index
      %c0_15 = arith.constant 0 : index
      %14 = vector.load %arg4[%c0_14, %c0_15] : memref<64x256xf32, #tpu.memory_space<vmem>>, vector<64x128xf32>
      %15 = vector.broadcast %12 : vector<64x1xf32> to vector<64x128xf32>
      %16 = arith.mulf %15, %14 : vector<64x128xf32>
      %17 = arith.subf %13, %16 : vector<64x128xf32>
      %c0_16 = arith.constant 0 : index
      %c128 = arith.constant 128 : index
      %18 = vector.load %arg4[%c0_16, %c128] : memref<64x256xf32, #tpu.memory_space<vmem>>, vector<64x128xf32>
      %19 = arith.addf %17, %18 : vector<64x128xf32>
      %cst_17 = arith.constant 0.000000e+00 : f32
      %20 = vector.broadcast %cst_17 : f32 to vector<64x128xf32>
      %21 = arith.maximumf %19, %20 : vector<64x128xf32>
      %c0_18 = arith.constant 0 : index
      %c0_19 = arith.constant 0 : index
      %22 = vector.load %arg6[%c0_18, %c0_19] : memref<264x128xf32, #tpu.memory_space<vmem>>, vector<128x128xf32>
      %cst_20 = arith.constant dense<0.000000e+00> : vector<64x128xf32>
      %23 = tpu.matmul %21, %22, %cst_20 {dimension_numbers = #tpu.dot_dimension_numbers<[1], [0], [0], [1], [0, 0, 1, 1], [], []>} : vector<64x128xf32>, vector<128x128xf32>, vector<64x128xf32> -> vector<64x128xf32>
      %24 = arith.truncf %23 : vector<64x128xf32> to vector<64x128xbf16>
      %c0_21 = arith.constant 0 : index
      %c0_22 = arith.constant 0 : index
      %25 = vector.load %arg7[%c0_21, %c0_22] : memref<64x128xbf16, #tpu.memory_space<vmem>>, vector<64x128xbf16>
      tpu.vector_store %arg7[%c0_21, %c0_22], %24 {strides = array<i32>} : memref<64x128xbf16, #tpu.memory_space<vmem>>, vector<64x128xbf16>,
      %c128_23 = arith.constant 128 : index
      %c0_24 = arith.constant 0 : index
      %26 = vector.load %arg6[%c128_23, %c0_24] : memref<264x128xf32, #tpu.memory_space<vmem>>, vector<128x128xf32>
      %cst_25 = arith.constant dense<0.000000e+00> : vector<64x128xf32>
      %27 = tpu.matmul %21, %26, %cst_25 {dimension_numbers = #tpu.dot_dimension_numbers<[1], [0], [0], [1], [0, 0, 1, 1], [], []>} : vector<64x128xf32>, vector<128x128xf32>, vector<64x128xf32> -> vector<64x128xf32>
      %c256 = arith.constant 256 : index
      %c0_26 = arith.constant 0 : index
      %28 = vector.load %arg6[%c256, %c0_26] : memref<264x128xf32, #tpu.memory_space<vmem>>, vector<1x128xf32>
      %29 = vector.broadcast %28 : vector<1x128xf32> to vector<64x128xf32>
      %30 = arith.addf %27, %29 : vector<64x128xf32>
      %c0_27 = arith.constant 0 : index
      %c0_28 = arith.constant 0 : index
      %31 = vector.load %arg8[%c0_27, %c0_28] : memref<64x128xf32, #tpu.memory_space<vmem>>, vector<64x128xf32>
      tpu.vector_store %arg8[%c0_27, %c0_28], %30 {strides = array<i32>} : memref<64x128xf32, #tpu.memory_space<vmem>>, vector<64x128xf32>,
    } else {
    }
    return
  }
  func.func @transform_0(%arg0: i32, %arg1: i32) -> (i32, i32) {
    %c0_i32 = arith.constant 0 : i32
    return %arg0, %arg1 : i32, i32
  }
  func.func @transform_1(%arg0: i32, %arg1: i32) -> (i32, i32) {
    %c0_i32 = arith.constant 0 : i32
    %c0_i32_0 = arith.constant 0 : i32
    return %arg1, %c0_i32 : i32, i32
  }
  func.func @transform_2(%arg0: i32, %arg1: i32) -> (i32, i32) {
    %c0_i32 = arith.constant 0 : i32
    %c0_i32_0 = arith.constant 0 : i32
    return %arg0, %c0_i32 : i32, i32
  }
  func.func @transform_3(%arg0: i32, %arg1: i32) -> (i32, i32) {
    %c0_i32 = arith.constant 0 : i32
    %c0_i32_0 = arith.constant 0 : i32
    return %arg0, %c0_i32 : i32, i32
  }
  func.func @transform_4(%arg0: i32, %arg1: i32) -> (i32, i32) {
    %c0_i32 = arith.constant 0 : i32
    %c0_i32_0 = arith.constant 0 : i32
    %c0_i32_1 = arith.constant 0 : i32
    return %c0_i32, %c0_i32_0 : i32, i32
  }
  func.func @transform_5(%arg0: i32, %arg1: i32) -> (i32, i32) {
    %c0_i32 = arith.constant 0 : i32
    %c0_i32_0 = arith.constant 0 : i32
    return %arg0, %c0_i32 : i32, i32
  }
  func.func @transform_6(%arg0: i32, %arg1: i32) -> (i32, i32) {
    %c0_i32 = arith.constant 0 : i32
    %c0_i32_0 = arith.constant 0 : i32
    return %arg0, %c0_i32 : i32, i32
  }
}

module attributes {stable_mosaic.version = 11 : i64} {
  func.func @k_sage2(%arg0: i32, %arg1: i32, %arg2: memref<64x128xbf16, #tpu.memory_space<vmem>>, %arg3: memref<128x128xbf16, #tpu.memory_space<vmem>>, %arg4: memref<64x128xf32, #tpu.memory_space<vmem>>, %arg5: memref<64x128xf32, #tpu.memory_space<vmem>>, %arg6: memref<128x128xf32, #tpu.memory_space<vmem>>, %arg7: memref<64x128xbf16, #tpu.memory_space<vmem>>, %arg8: memref<64x128xf32, #tpu.memory_space<vmem>>) attributes {dimension_semantics = [#tpu.dimension_semantics<parallel>, #tpu.dimension_semantics<arbitrary>], iteration_bounds = array<i64: 2, 1>, scalar_prefetch = 0 : i64, scratch_operands = 1 : i64, tpu.core_type = #tpu.core_type<tc>, window_params = [{transform_indices = @transform_0, window_bounds = array<i64: 64, 128>}, {transform_indices = @transform_1, window_bounds = array<i64: 128, 128>}, {transform_indices = @transform_2, window_bounds = array<i64: 64, 128>}, {transform_indices = @transform_3, window_bounds = array<i64: 64, 128>}, {pipeline_mode = #tpu.pipeline_mode<synchronous>, transform_indices = @transform_4, window_bounds = array<i64: 128, 128>}, {transform_indices = @transform_5, window_bounds = array<i64: 64, 128>}]} {
    %c0_i32 = arith.constant 0 : i32
    %0 = arith.cmpi eq, %arg1, %c0_i32 : i32
    %1 = arith.extui %0 : i1 to i32
    %c0_i32_0 = arith.constant 0 : i32
    %2 = arith.cmpi ne, %1, %c0_i32_0 : i32
    scf.if %2 {
      %cst_10 = arith.constant 0.000000e+00 : f32
      %12 = vector.broadcast %cst_10 : f32 to vector<64x128xf32>
      %c0_11 = arith.constant 0 : index
      %c0_12 = arith.constant 0 : index
      %13 = vector.load %arg8[%c0_11, %c0_12] : memref<64x128xf32, #tpu.memory_space<vmem>>, vector<64x128xf32>
      tpu.vector_store %arg8[%c0_11, %c0_12], %12 {strides = array<i32>} : memref<64x128xf32, #tpu.memory_space<vmem>>, vector<64x128xf32>,
    } else {
    }
    %c0 = arith.constant 0 : index
    %c0_1 = arith.constant 0 : index
    %3 = vector.load %arg8[%c0, %c0_1] : memref<64x128xf32, #tpu.memory_space<vmem>>, vector<64x128xf32>
    %c0_2 = arith.constant 0 : index
    %c0_3 = arith.constant 0 : index
    %4 = vector.load %arg2[%c0_2, %c0_3] : memref<64x128xbf16, #tpu.memory_space<vmem>>, vector<64x128xbf16>
    %c0_4 = arith.constant 0 : index
    %c0_5 = arith.constant 0 : index
    %5 = vector.load %arg3[%c0_4, %c0_5] : memref<128x128xbf16, #tpu.memory_space<vmem>>, vector<128x128xbf16>
    %cst = arith.constant dense<0.000000e+00> : vector<64x128xf32>
    %6 = tpu.matmul %4, %5, %cst {dimension_numbers = #tpu.dot_dimension_numbers<[1], [0], [0], [1], [0, 0, 1, 1], [], []>} : vector<64x128xbf16>, vector<128x128xbf16>, vector<64x128xf32> -> vector<64x128xf32>
    %7 = arith.addf %3, %6 : vector<64x128xf32>
    %c0_6 = arith.constant 0 : index
    %c0_7 = arith.constant 0 : index
    %8 = vector.load %arg8[%c0_6, %c0_7] : memref<64x128xf32, #tpu.memory_space<vmem>>, vector<64x128xf32>
    tpu.vector_store %arg8[%c0_6, %c0_7], %7 {strides = array<i32>} : memref<64x128xf32, #tpu.memory_space<vmem>>, vector<64x128xf32>,
    %c0_i32_8 = arith.constant 0 : i32
    %9 = arith.cmpi eq, %arg1, %c0_i32_8 : i32
    %10 = arith.extui %9 : i1 to i32
    %c0_i32_9 = arith.constant 0 : i32
    %11 = arith.cmpi ne, %10, %c0_i32_9 : i32
    scf.if %11 {
      %c0_10 = arith.constant 0 : index
      %c0_11 = arith.constant 0 : index
      %12 = vector.load %arg8[%c0_10, %c0_11] : memref<64x128xf32, #tpu.memory_space<vmem>>, vector<64x128xf32>
      %c0_12 = arith.constant 0 : index
      %c1 = arith.constant 1 : index
      %13 = vector.load %arg5[%c0_12, %c1] : memref<64x128xf32, #tpu.memory_space<vmem>>, vector<64x1xf32>
      %14 = vector.broadcast %13 : vector<64x1xf32> to vector<64x128xf32>
      %15 = arith.mulf %12, %14 : vector<64x128xf32>
      %c0_13 = arith.constant 0 : index
      %c0_14 = arith.constant 0 : index
      %16 = vector.load %arg4[%c0_13, %c0_14] : memref<64x128xf32, #tpu.memory_space<vmem>>, vector<64x128xf32>
      %17 = arith.addf %15, %16 : vector<64x128xf32>
      %cst_15 = arith.constant 0.000000e+00 : f32
      %18 = vector.broadcast %cst_15 : f32 to vector<64x128xf32>
      %19 = arith.maximumf %17, %18 : vector<64x128xf32>
      %c0_16 = arith.constant 0 : index
      %c0_17 = arith.constant 0 : index
      %20 = vector.load %arg6[%c0_16, %c0_17] : memref<128x128xf32, #tpu.memory_space<vmem>>, vector<128x128xf32>
      %cst_18 = arith.constant dense<0.000000e+00> : vector<64x128xf32>
      %21 = tpu.matmul %19, %20, %cst_18 {dimension_numbers = #tpu.dot_dimension_numbers<[1], [0], [0], [1], [0, 0, 1, 1], [], []>} : vector<64x128xf32>, vector<128x128xf32>, vector<64x128xf32> -> vector<64x128xf32>
      %22 = arith.truncf %21 : vector<64x128xf32> to vector<64x128xbf16>
      %c0_19 = arith.constant 0 : index
      %c0_20 = arith.constant 0 : index
      %23 = vector.load %arg7[%c0_19, %c0_20] : memref<64x128xbf16, #tpu.memory_space<vmem>>, vector<64x128xbf16>
      tpu.vector_store %arg7[%c0_19, %c0_20], %22 {strides = array<i32>} : memref<64x128xbf16, #tpu.memory_space<vmem>>, vector<64x128xbf16>,
    } else {
    }
    return
  }
  func.func @transform_0(%arg0: i32, %arg1: i32) -> (i32, i32) {
    %c0_i32 = arith.constant 0 : i32
    return %arg0, %arg1 : i32, i32
  }
  func.func @transform_1(%arg0: i32, %arg1: i32) -> (i32, i32) {
    %c0_i32 = arith.constant 0 : i32
    %c0_i32_0 = arith.constant 0 : i32
    return %arg1, %c0_i32 : i32, i32
  }
  func.func @transform_2(%arg0: i32, %arg1: i32) -> (i32, i32) {
    %c0_i32 = arith.constant 0 : i32
    %c0_i32_0 = arith.constant 0 : i32
    return %arg0, %c0_i32 : i32, i32
  }
  func.func @transform_3(%arg0: i32, %arg1: i32) -> (i32, i32) {
    %c0_i32 = arith.constant 0 : i32
    %c0_i32_0 = arith.constant 0 : i32
    return %arg0, %c0_i32 : i32, i32
  }
  func.func @transform_4(%arg0: i32, %arg1: i32) -> (i32, i32) {
    %c0_i32 = arith.constant 0 : i32
    %c0_i32_0 = arith.constant 0 : i32
    %c0_i32_1 = arith.constant 0 : i32
    return %c0_i32, %c0_i32_0 : i32, i32
  }
  func.func @transform_5(%arg0: i32, %arg1: i32) -> (i32, i32) {
    %c0_i32 = arith.constant 0 : i32
    %c0_i32_0 = arith.constant 0 : i32
    return %arg0, %c0_i32 : i32, i32
  }
}

module attributes {stable_mosaic.version = 11 : i64} {
  func.func @k_sage4(%arg0: i32, %arg1: i32, %arg2: memref<64x128xbf16, #tpu.memory_space<vmem>>, %arg3: memref<128x128xbf16, #tpu.memory_space<vmem>>, %arg4: memref<64x128xf32, #tpu.memory_space<vmem>>, %arg5: memref<64x128xf32, #tpu.memory_space<vmem>>, %arg6: memref<64x128xf32, #tpu.memory_space<vmem>>, %arg7: memref<64x128xf32, #tpu.memory_space<vmem>>) attributes {dimension_semantics = [#tpu.dimension_semantics<parallel>, #tpu.dimension_semantics<arbitrary>], iteration_bounds = array<i64: 2, 1>, scalar_prefetch = 0 : i64, scratch_operands = 1 : i64, tpu.core_type = #tpu.core_type<tc>, window_params = [{transform_indices = @transform_0, window_bounds = array<i64: 64, 128>}, {transform_indices = @transform_1, window_bounds = array<i64: 128, 128>}, {transform_indices = @transform_2, window_bounds = array<i64: 64, 128>}, {transform_indices = @transform_3, window_bounds = array<i64: 64, 128>}, {transform_indices = @transform_4, window_bounds = array<i64: 64, 128>}]} {
    %c0_i32 = arith.constant 0 : i32
    %0 = arith.cmpi eq, %arg1, %c0_i32 : i32
    %1 = arith.extui %0 : i1 to i32
    %c0_i32_0 = arith.constant 0 : i32
    %2 = arith.cmpi ne, %1, %c0_i32_0 : i32
    scf.if %2 {
      %cst_10 = arith.constant 0.000000e+00 : f32
      %12 = vector.broadcast %cst_10 : f32 to vector<64x128xf32>
      %c0_11 = arith.constant 0 : index
      %c0_12 = arith.constant 0 : index
      %13 = vector.load %arg7[%c0_11, %c0_12] : memref<64x128xf32, #tpu.memory_space<vmem>>, vector<64x128xf32>
      tpu.vector_store %arg7[%c0_11, %c0_12], %12 {strides = array<i32>} : memref<64x128xf32, #tpu.memory_space<vmem>>, vector<64x128xf32>,
    } else {
    }
    %c0 = arith.constant 0 : index
    %c0_1 = arith.constant 0 : index
    %3 = vector.load %arg7[%c0, %c0_1] : memref<64x128xf32, #tpu.memory_space<vmem>>, vector<64x128xf32>
    %c0_2 = arith.constant 0 : index
    %c0_3 = arith.constant 0 : index
    %4 = vector.load %arg2[%c0_2, %c0_3] : memref<64x128xbf16, #tpu.memory_space<vmem>>, vector<64x128xbf16>
    %c0_4 = arith.constant 0 : index
    %c0_5 = arith.constant 0 : index
    %5 = vector.load %arg3[%c0_4, %c0_5] : memref<128x128xbf16, #tpu.memory_space<vmem>>, vector<128x128xbf16>
    %cst = arith.constant dense<0.000000e+00> : vector<64x128xf32>
    %6 = tpu.matmul %4, %5, %cst {dimension_numbers = #tpu.dot_dimension_numbers<[1], [0], [0], [1], [0, 0, 1, 1], [], []>} : vector<64x128xbf16>, vector<128x128xbf16>, vector<64x128xf32> -> vector<64x128xf32>
    %7 = arith.addf %3, %6 : vector<64x128xf32>
    %c0_6 = arith.constant 0 : index
    %c0_7 = arith.constant 0 : index
    %8 = vector.load %arg7[%c0_6, %c0_7] : memref<64x128xf32, #tpu.memory_space<vmem>>, vector<64x128xf32>
    tpu.vector_store %arg7[%c0_6, %c0_7], %7 {strides = array<i32>} : memref<64x128xf32, #tpu.memory_space<vmem>>, vector<64x128xf32>,
    %c0_i32_8 = arith.constant 0 : i32
    %9 = arith.cmpi eq, %arg1, %c0_i32_8 : i32
    %10 = arith.extui %9 : i1 to i32
    %c0_i32_9 = arith.constant 0 : i32
    %11 = arith.cmpi ne, %10, %c0_i32_9 : i32
    scf.if %11 {
      %c0_10 = arith.constant 0 : index
      %c0_11 = arith.constant 0 : index
      %12 = vector.load %arg7[%c0_10, %c0_11] : memref<64x128xf32, #tpu.memory_space<vmem>>, vector<64x128xf32>
      %c0_12 = arith.constant 0 : index
      %c1 = arith.constant 1 : index
      %13 = vector.load %arg5[%c0_12, %c1] : memref<64x128xf32, #tpu.memory_space<vmem>>, vector<64x1xf32>
      %14 = vector.broadcast %13 : vector<64x1xf32> to vector<64x128xf32>
      %15 = arith.mulf %12, %14 : vector<64x128xf32>
      %c0_13 = arith.constant 0 : index
      %c0_14 = arith.constant 0 : index
      %16 = vector.load %arg4[%c0_13, %c0_14] : memref<64x128xf32, #tpu.memory_space<vmem>>, vector<64x128xf32>
      %17 = arith.addf %15, %16 : vector<64x128xf32>
      %c0_15 = arith.constant 0 : index
      %c0_16 = arith.constant 0 : index
      %18 = vector.load %arg6[%c0_15, %c0_16] : memref<64x128xf32, #tpu.memory_space<vmem>>, vector<64x128xf32>
      tpu.vector_store %arg6[%c0_15, %c0_16], %17 {strides = array<i32>} : memref<64x128xf32, #tpu.memory_space<vmem>>, vector<64x128xf32>,
    } else {
    }
    return
  }
  func.func @transform_0(%arg0: i32, %arg1: i32) -> (i32, i32) {
    %c0_i32 = arith.constant 0 : i32
    return %arg0, %arg1 : i32, i32
  }
  func.func @transform_1(%arg0: i32, %arg1: i32) -> (i32, i32) {
    %c0_i32 = arith.constant 0 : i32
    %c0_i32_0 = arith.constant 0 : i32
    return %arg1, %c0_i32 : i32, i32
  }
  func.func @transform_2(%arg0: i32, %arg1: i32) -> (i32, i32) {
    %c0_i32 = arith.constant 0 : i32
    %c0_i32_0 = arith.constant 0 : i32
    return %arg0, %c0_i32 : i32, i32
  }
  func.func @transform_3(%arg0: i32, %arg1: i32) -> (i32, i32) {
    %c0_i32 = arith.constant 0 : i32
    %c0_i32_0 = arith.constant 0 : i32
    return %arg0, %c0_i32 : i32, i32
  }
  func.func @transform_4(%arg0: i32, %arg1: i32) -> (i32, i32) {
    %c0_i32 = arith.constant 0 : i32
    %c0_i32_0 = arith.constant 0 : i32
    return %arg0, %c0_i32 : i32, i32
  }
}

module attributes {stable_mosaic.version = 11 : i64} {
  func.func @k_gat(%arg0: i32, %arg1: i32, %arg2: memref<64x128xbf16, #tpu.memory_space<vmem>>, %arg3: memref<128x128xbf16, #tpu.memory_space<vmem>>, %arg4: memref<64x128xbf16, #tpu.memory_space<vmem>>, %arg5: memref<280x128xf32, #tpu.memory_space<vmem>>, %arg6: memref<64x128xbf16, #tpu.memory_space<vmem>>, %arg7: memref<64x128xf32, #tpu.memory_space<vmem>>, %arg8: memref<64x1xf32, #tpu.memory_space<vmem>>, %arg9: memref<64x1xf32, #tpu.memory_space<vmem>>, %arg10: memref<64x128xf32, #tpu.memory_space<vmem>>) attributes {dimension_semantics = [#tpu.dimension_semantics<parallel>, #tpu.dimension_semantics<arbitrary>], iteration_bounds = array<i64: 2, 1>, scalar_prefetch = 0 : i64, scratch_operands = 3 : i64, tpu.core_type = #tpu.core_type<tc>, window_params = [{transform_indices = @transform_0, window_bounds = array<i64: 64, 128>}, {transform_indices = @transform_1, window_bounds = array<i64: 128, 128>}, {transform_indices = @transform_2, window_bounds = array<i64: 64, 128>}, {pipeline_mode = #tpu.pipeline_mode<synchronous>, transform_indices = @transform_3, window_bounds = array<i64: 280, 128>}, {transform_indices = @transform_4, window_bounds = array<i64: 64, 128>}, {transform_indices = @transform_5, window_bounds = array<i64: 64, 128>}]} {
    %c0_i32 = arith.constant 0 : i32
    %0 = arith.cmpi eq, %arg1, %c0_i32 : i32
    %1 = arith.extui %0 : i1 to i32
    %c0_i32_0 = arith.constant 0 : i32
    %2 = arith.cmpi ne, %1, %c0_i32_0 : i32
    scf.if %2 {
      %cst_31 = arith.constant -1.000000e+30 : f32
      %62 = vector.broadcast %cst_31 : f32 to vector<64x1xf32>
      %c0_32 = arith.constant 0 : index
      %c0_33 = arith.constant 0 : index
      %63 = vector.load %arg8[%c0_32, %c0_33] : memref<64x1xf32, #tpu.memory_space<vmem>>, vector<64x1xf32>
      tpu.vector_store %arg8[%c0_32, %c0_33], %62 {strides = array<i32>} : memref<64x1xf32, #tpu.memory_space<vmem>>, vector<64x1xf32>,
      %cst_34 = arith.constant 0.000000e+00 : f32
      %64 = vector.broadcast %cst_34 : f32 to vector<64x1xf32>
      %c0_35 = arith.constant 0 : index
      %c0_36 = arith.constant 0 : index
      %65 = vector.load %arg9[%c0_35, %c0_36] : memref<64x1xf32, #tpu.memory_space<vmem>>, vector<64x1xf32>
      tpu.vector_store %arg9[%c0_35, %c0_36], %64 {strides = array<i32>} : memref<64x1xf32, #tpu.memory_space<vmem>>, vector<64x1xf32>,
      %cst_37 = arith.constant 0.000000e+00 : f32
      %66 = vector.broadcast %cst_37 : f32 to vector<64x128xf32>
      %c0_38 = arith.constant 0 : index
      %c0_39 = arith.constant 0 : index
      %67 = vector.load %arg10[%c0_38, %c0_39] : memref<64x128xf32, #tpu.memory_space<vmem>>, vector<64x128xf32>
      tpu.vector_store %arg10[%c0_38, %c0_39], %66 {strides = array<i32>} : memref<64x128xf32, #tpu.memory_space<vmem>>, vector<64x128xf32>,
    } else {
    }
    %c0 = arith.constant 0 : index
    %c0_1 = arith.constant 0 : index
    %3 = vector.load %arg3[%c0, %c0_1] : memref<128x128xbf16, #tpu.memory_space<vmem>>, vector<128x128xbf16>
    %c0_2 = arith.constant 0 : index
    %c32 = arith.constant 32 : index
    %4 = vector.load %arg4[%c0_2, %c32] : memref<64x128xbf16, #tpu.memory_space<vmem>>, vector<64x1xbf16>
    %5 = arith.extf %4 : vector<64x1xbf16> to vector<64x1xf32>
    %c0_3 = arith.constant 0 : index
    %c0_4 = arith.constant 0 : index
    %6 = vector.load %arg5[%c0_3, %c0_4] : memref<280x128xf32, #tpu.memory_space<vmem>>, vector<1x128xf32>
    %7 = arith.truncf %6 : vector<1x128xf32> to vector<1x128xbf16>
    %cst = arith.constant dense<0.000000e+00> : vector<1x128xf32>
    %8 = tpu.matmul %7, %3, %cst {dimension_numbers = #tpu.dot_dimension_numbers<[1], [1], [0], [0], [0, 0, 1, 0], [], []>} : vector<1x128xbf16>, vector<128x128xbf16>, vector<1x128xf32> -> vector<1x128xf32>
    %9 = tpu.iota {dimensions = array<i32: 0>} : vector<64x128xi32>
    %c64_i32 = arith.constant 64 : i32
    %10 = arith.muli %arg0, %c64_i32 : i32
    %11 = vector.broadcast %10 : i32 to vector<64x128xi32>
    %12 = arith.addi %9, %11 : vector<64x128xi32>
    %13 = tpu.iota {dimensions = array<i32: 1>} : vector<64x128xi32>
    %c128_i32 = arith.constant 128 : i32
    %14 = arith.muli %arg1, %c128_i32 : i32
    %15 = vector.broadcast %14 : i32 to vector<64x128xi32>
    %16 = arith.addi %13, %15 : vector<64x128xi32>
    %17 = arith.cmpi eq, %12, %16 : vector<64x128xi32>
    %c0_5 = arith.constant 0 : index
    %c0_6 = arith.constant 0 : index
    %18 = vector.load %arg2[%c0_5, %c0_6] : memref<64x128xbf16, #tpu.memory_space<vmem>>, vector<64x128xbf16>
    %19 = arith.extf %18 : vector<64x128xbf16> to vector<64x128xf32>
    %cst_7 = arith.constant 1.000000e+00 : f32
    %20 = vector.broadcast %cst_7 : f32 to vector<64x128xf32>
    %21 = arith.select %17, %20, %19 : vector<64x128xi1>, vector<64x128xf32>
    %22 = vector.broadcast %5 : vector<64x1xf32> to vector<64x128xf32>
    %23 = vector.broadcast %8 : vector<1x128xf32> to vector<64x128xf32>
    %24 = arith.addf %22, %23 : vector<64x128xf32>
    %cst_8 = arith.constant 0.000000e+00 : f32
    %25 = vector.broadcast %cst_8 : f32 to vector<64x128xf32>
    %26 = arith.cmpf ogt, %24, %25 : vector<64x128xf32>
    %cst_9 = arith.constant 2.000000e-01 : f32
    %27 = vector.broadcast %cst_9 : f32 to vector<64x128xf32>
    %28 = arith.mulf %27, %24 : vector<64x128xf32>
    %29 = arith.select %26, %24, %28 : vector<64x128xi1>, vector<64x128xf32>
    %cst_10 = arith.constant 0.000000e+00 : f32
    %30 = vector.broadcast %cst_10 : f32 to vector<64x128xf32>
    %31 = arith.cmpf ogt, %21, %30 : vector<64x128xf32>
    %cst_11 = arith.constant -1.000000e+30 : f32
    %32 = vector.broadcast %cst_11 : f32 to vector<64x128xf32>
    %33 = arith.select %31, %29, %32 : vector<64x128xi1>, vector<64x128xf32>
    %c0_12 = arith.constant 0 : index
    %c0_13 = arith.constant 0 : index
    %34 = vector.load %arg8[%c0_12, %c0_13] : memref<64x1xf32, #tpu.memory_space<vmem>>, vector<64x1xf32>
    %cst_14 = arith.constant dense<0xFF800000> : vector<64xf32>
    %35 = vector.multi_reduction <maximumf>, %33, %cst_14 [1] : vector<64x128xf32> to vector<64xf32>
    %36 = vector.shape_cast %35 : vector<64xf32> to vector<64x1xf32>
    %37 = arith.maximumf %34, %36 : vector<64x1xf32>
    %c0_15 = arith.constant 0 : index
    %c0_16 = arith.constant 0 : index
    %38 = vector.load %arg8[%c0_15, %c0_16] : memref<64x1xf32, #tpu.memory_space<vmem>>, vector<64x1xf32>
    %39 = arith.subf %38, %37 : vector<64x1xf32>
    %40 = math.exp %39 : vector<64x1xf32>
    %41 = vector.broadcast %37 : vector<64x1xf32> to vector<64x128xf32>
    %42 = arith.subf %33, %41 : vector<64x128xf32>
    %43 = math.exp %42 : vector<64x128xf32>
    %44 = arith.mulf %43, %21 : vector<64x128xf32>
    %c0_17 = arith.constant 0 : index
    %c0_18 = arith.constant 0 : index
    %45 = vector.load %arg9[%c0_17, %c0_18] : memref<64x1xf32, #tpu.memory_space<vmem>>, vector<64x1xf32>
    %46 = arith.mulf %40, %45 : vector<64x1xf32>
    %cst_19 = arith.constant dense<0.000000e+00> : vector<64xf32>
    %47 = vector.multi_reduction <add>, %44, %cst_19 [1] : vector<64x128xf32> to vector<64xf32>
    %48 = vector.shape_cast %47 : vector<64xf32> to vector<64x1xf32>
    %49 = arith.addf %46, %48 : vector<64x1xf32>
    %c0_20 = arith.constant 0 : index
    %c0_21 = arith.constant 0 : index
    %50 = vector.load %arg9[%c0_20, %c0_21] : memref<64x1xf32, #tpu.memory_space<vmem>>, vector<64x1xf32>
    tpu.vector_store %arg9[%c0_20, %c0_21], %49 {strides = array<i32>} : memref<64x1xf32, #tpu.memory_space<vmem>>, vector<64x1xf32>,
    %c0_22 = arith.constant 0 : index
    %c0_23 = arith.constant 0 : index
    %51 = vector.load %arg10[%c0_22, %c0_23] : memref<64x128xf32, #tpu.memory_space<vmem>>, vector<64x128xf32>
    %52 = vector.broadcast %40 : vector<64x1xf32> to vector<64x128xf32>
    %53 = arith.mulf %52, %51 : vector<64x128xf32>
    %54 = arith.truncf %44 : vector<64x128xf32> to vector<64x128xbf16>
    %cst_24 = arith.constant dense<0.000000e+00> : vector<64x128xf32>
    %55 = tpu.matmul %54, %3, %cst_24 {dimension_numbers = #tpu.dot_dimension_numbers<[1], [0], [0], [1], [0, 0, 1, 1], [], []>} : vector<64x128xbf16>, vector<128x128xbf16>, vector<64x128xf32> -> vector<64x128xf32>
    %56 = arith.addf %53, %55 : vector<64x128xf32>
    %c0_25 = arith.constant 0 : index
    %c0_26 = arith.constant 0 : index
    %57 = vector.load %arg10[%c0_25, %c0_26] : memref<64x128xf32, #tpu.memory_space<vmem>>, vector<64x128xf32>
    tpu.vector_store %arg10[%c0_25, %c0_26], %56 {strides = array<i32>} : memref<64x128xf32, #tpu.memory_space<vmem>>, vector<64x128xf32>,
    %c0_27 = arith.constant 0 : index
    %c0_28 = arith.constant 0 : index
    %58 = vector.load %arg8[%c0_27, %c0_28] : memref<64x1xf32, #tpu.memory_space<vmem>>, vector<64x1xf32>
    tpu.vector_store %arg8[%c0_27, %c0_28], %37 {strides = array<i32>} : memref<64x1xf32, #tpu.memory_space<vmem>>, vector<64x1xf32>,
    %c0_i32_29 = arith.constant 0 : i32
    %59 = arith.cmpi eq, %arg1, %c0_i32_29 : i32
    %60 = arith.extui %59 : i1 to i32
    %c0_i32_30 = arith.constant 0 : i32
    %61 = arith.cmpi ne, %60, %c0_i32_30 : i32
    scf.if %61 {
      %c0_31 = arith.constant 0 : index
      %c0_32 = arith.constant 0 : index
      %62 = vector.load %arg9[%c0_31, %c0_32] : memref<64x1xf32, #tpu.memory_space<vmem>>, vector<64x1xf32>
      %cst_33 = arith.constant 9.99999996E-13 : f32
      %63 = vector.broadcast %cst_33 : f32 to vector<64x1xf32>
      %64 = arith.maximumf %62, %63 : vector<64x1xf32>
      %65 = tpu.reciprocal %64 {approx = true} : vector<64x1xf32> -> vector<64x1xf32>
      %66 = arith.mulf %64, %65 : vector<64x1xf32>
      %cst_34 = arith.constant 2.000000e+00 : f32
      %67 = vector.broadcast %cst_34 : f32 to vector<64x1xf32>
      %68 = arith.subf %67, %66 : vector<64x1xf32>
      %69 = arith.mulf %65, %68 : vector<64x1xf32>
      %cst_35 = arith.constant 0.000000e+00 : f32
      %70 = vector.broadcast %cst_35 : f32 to vector<64x1xf32>
      %71 = arith.cmpf ogt, %62, %70 : vector<64x1xf32>
      %cst_36 = arith.constant 0.000000e+00 : f32
      %72 = vector.broadcast %cst_36 : f32 to vector<64x1xf32>
      %73 = arith.select %71, %69, %72 : vector<64x1xi1>, vector<64x1xf32>
      %c0_37 = arith.constant 0 : index
      %c0_38 = arith.constant 0 : index
      %74 = vector.load %arg10[%c0_37, %c0_38] : memref<64x128xf32, #tpu.memory_space<vmem>>, vector<64x128xf32>
      %75 = vector.broadcast %73 : vector<64x1xf32> to vector<64x128xf32>
      %76 = arith.mulf %74, %75 : vector<64x128xf32>
      %c8 = arith.constant 8 : index
      %c0_39 = arith.constant 0 : index
      %77 = vector.load %arg5[%c8, %c0_39] : memref<280x128xf32, #tpu.memory_space<vmem>>, vector<1x128xf32>
      %78 = vector.broadcast %77 : vector<1x128xf32> to vector<64x128xf32>
      %79 = arith.addf %76, %78 : vector<64x128xf32>
      %cst_40 = arith.constant 0.000000e+00 : f32
      %80 = vector.broadcast %cst_40 : f32 to vector<64x128xf32>
      %81 = arith.maximumf %79, %80 : vector<64x128xf32>
      %c16 = arith.constant 16 : index
      %c0_41 = arith.constant 0 : index
      %82 = vector.load %arg5[%c16, %c0_41] : memref<280x128xf32, #tpu.memory_space<vmem>>, vector<128x128xf32>
      %cst_42 = arith.constant dense<0.000000e+00> : vector<64x128xf32>
      %83 = tpu.matmul %81, %82, %cst_42 {dimension_numbers = #tpu.dot_dimension_numbers<[1], [0], [0], [1], [0, 0, 1, 1], [], []>} : vector<64x128xf32>, vector<128x128xf32>, vector<64x128xf32> -> vector<64x128xf32>
      %84 = arith.truncf %83 : vector<64x128xf32> to vector<64x128xbf16>
      %c0_43 = arith.constant 0 : index
      %c0_44 = arith.constant 0 : index
      %85 = vector.load %arg6[%c0_43, %c0_44] : memref<64x128xbf16, #tpu.memory_space<vmem>>, vector<64x128xbf16>
      tpu.vector_store %arg6[%c0_43, %c0_44], %84 {strides = array<i32>} : memref<64x128xbf16, #tpu.memory_space<vmem>>, vector<64x128xbf16>,
      %c144 = arith.constant 144 : index
      %c0_45 = arith.constant 0 : index
      %86 = vector.load %arg5[%c144, %c0_45] : memref<280x128xf32, #tpu.memory_space<vmem>>, vector<128x128xf32>
      %cst_46 = arith.constant dense<0.000000e+00> : vector<64x128xf32>
      %87 = tpu.matmul %81, %86, %cst_46 {dimension_numbers = #tpu.dot_dimension_numbers<[1], [0], [0], [1], [0, 0, 1, 1], [], []>} : vector<64x128xf32>, vector<128x128xf32>, vector<64x128xf32> -> vector<64x128xf32>
      %c272 = arith.constant 272 : index
      %c0_47 = arith.constant 0 : index
      %88 = vector.load %arg5[%c272, %c0_47] : memref<280x128xf32, #tpu.memory_space<vmem>>, vector<1x128xf32>
      %89 = vector.broadcast %88 : vector<1x128xf32> to vector<64x128xf32>
      %90 = arith.addf %87, %89 : vector<64x128xf32>
      %c0_48 = arith.constant 0 : index
      %c0_49 = arith.constant 0 : index
      %91 = vector.load %arg7[%c0_48, %c0_49] : memref<64x128xf32, #tpu.memory_space<vmem>>, vector<64x128xf32>
      tpu.vector_store %arg7[%c0_48, %c0_49], %90 {strides = array<i32>} : memref<64x128xf32, #tpu.memory_space<vmem>>, vector<64x128xf32>,
    } else {
    }
    return
  }
  func.func @transform_0(%arg0: i32, %arg1: i32) -> (i32, i32) {
    %c0_i32 = arith.constant 0 : i32
    return %arg0, %arg1 : i32, i32
  }
  func.func @transform_1(%arg0: i32, %arg1: i32) -> (i32, i32) {
    %c0_i32 = arith.constant 0 : i32
    %c0_i32_0 = arith.constant 0 : i32
    return %arg1, %c0_i32 : i32, i32
  }
  func.func @transform_2(%arg0: i32, %arg1: i32) -> (i32, i32) {
    %c0_i32 = arith.constant 0 : i32
    %c0_i32_0 = arith.constant 0 : i32
    return %arg0, %c0_i32 : i32, i32
  }
  func.func @transform_3(%arg0: i32, %arg1: i32) -> (i32, i32) {
    %c0_i32 = arith.constant 0 : i32
    %c0_i32_0 = arith.constant 0 : i32
    %c0_i32_1 = arith.constant 0 : i32
    return %c0_i32, %c0_i32_0 : i32, i32
  }
  func.func @transform_4(%arg0: i32, %arg1: i32) -> (i32, i32) {
    %c0_i32 = arith.constant 0 : i32
    %c0_i32_0 = arith.constant 0 : i32
    return %arg0, %c0_i32 : i32, i32
  }
  func.func @transform_5(%arg0: i32, %arg1: i32) -> (i32, i32) {
    %c0_i32 = arith.constant 0 : i32
    %c0_i32_0 = arith.constant 0 : i32
    return %arg0, %c0_i32 : i32, i32
  }
}

</mosaic_0001>

<llo_original>
// kernel: intra_gcn_forward.5
$region0: #{intra_gcn_forward.5}
  #allocation0 [shape = 'u32[]', space=smem, size = 0x4, offset = 0x4, fixed_abs, tag = 'smem constant byte address 0x4 - core index']
  #allocation1 [shape = 'u32[72,128]{1,0:T(1,128)}', space=vmem, size = 0x9000, scoped, tag = 'internal scratch']
  %s0 = inlined_call_operand.vmem [shape: f32[128,128], index: 0, kind: input, shape index: {}]
  %s1 = inlined_call_operand.vmem [shape: f32[416,128], index: 1, kind: input, shape index: {}]
  %s2 = inlined_call_operand.vmem [shape: bf16[128,128], index: 2, kind: output, shape index: {0}]
  %s3 = inlined_call_operand.vmem [shape: f32[128,256], index: 3, kind: output, shape index: {1}]
  %4 = xla_tuple %s2, %s3
  %s5 = sld [smem:[#allocation0]]
  $region49: #{intra_gcn_forward.5} parent=0
    _
  %s7 = ssub.s32 1, %s5
  %s8 = scalar_select 0, %s7, %s5
  loop: start=0, step=1, limit=4
  $region2: #{intra_gcn_forward.5} parent=0 // loop_pre_header
    _
  $region3: #{intra_gcn_forward.5} parent=0 // loop_header
    %s10 = sphi 0, %s14
    %p11 = scmp.ge.s32.totalorder %s10, 4
    %s20 = sphi 0, %s22
    %s23 = sphi 0, %s20
    %s24 = sphi 0, %s23
    %s40 = sphi 0, %s24
    %s44 = sphi 0, %s44
    %s46 = sphi 0, %s44
    %s47 = sphi 0, %s46
    %s61 = sphi 0, %s47
    %s67 = sphi 0, %s69
    %s70 = sphi 0, %s67
    %s71 = sphi 0, %s70
    %s87 = sphi 0, %s71
    %s93 = sphi 0, %s95
    %s96 = sphi 0, %s93
    %s97 = sphi 0, %s96
    %s113 = sphi 0, %s97
  $region4: #{intra_gcn_forward.5} parent=0 // loop_header_branch
    %13 = sbr.rel (%p11) target = $region8
  $region5: #{intra_gcn_forward.5} parent=0 // loop_body
    %s15 = ssub.s32 %s10, 1
    %s16 = ssub.s32 %s10, 2
    %s17 = sadd.s32 %s10, 1
    %s18 = ssub.s32 %s10, %s17
    %p19 = scmp.eq.s32.totalorder %s18, 0
    %s21 = sadd.s32 %s20, 1
    %s22 = scalar_select %p19, %s20, %s21
    %p25 = pneg %p19
    %p26 = scmp.eq.s32.totalorder %s10, 1
    %p27 = por %p25, %p26
    %p28 = scmp.ne.s32.totalorder %s20, %s23
    %p29 = scmp.eq.s32.totalorder %s10, 0
    %p30 = por %p28, %p29
    %p31 = scmp.ne.s32.totalorder %s20, %s23
    %p32 = scmp.eq.s32.totalorder %s15, 1
    %p33 = por %p31, %p32
    %p34 = scmp.ne.s32.totalorder %s23, %s24
    %p35 = scmp.eq.s32.totalorder %s15, 0
    %p36 = por %p34, %p35
    %p37 = scmp.ne.s32.totalorder %s23, %s24
    %p38 = scmp.eq.s32.totalorder %s16, 1
    %p39 = por %p37, %p38
    %p41 = scmp.ne.s32.totalorder %s24, %s40
    %p42 = scmp.eq.s32.totalorder %s16, 0
    %p43 = por %p41, %p42
    %s45 = sadd.s32 %s44, 1
    %p48 = scmp.eq.s32.totalorder %s10, 1
    %p49 = scmp.ne.s32.totalorder %s44, %s46
    %p50 = scmp.eq.s32.totalorder %s10, 0
    %p51 = por %p49, %p50
    %p52 = scmp.ne.s32.totalorder %s44, %s46
    %p53 = scmp.eq.s32.totalorder %s15, 1
    %p54 = por %p52, %p53
    %p55 = scmp.ne.s32.totalorder %s46, %s47
    %p56 = scmp.eq.s32.totalorder %s15, 0
    %p57 = por %p55, %p56
    %p58 = scmp.ne.s32.totalorder %s46, %s47
    %p59 = scmp.eq.s32.totalorder %s16, 1
    %p60 = por %p58, %p59
    %p62 = scmp.ne.s32.totalorder %s47, %s61
    %p63 = scmp.eq.s32.totalorder %s16, 0
    %p64 = por %p62, %p63
    %s65 = ssub.s32 %s10, %s17
    %p66 = scmp.eq.s32.totalorder %s65, 0
    %s68 = sadd.s32 %s67, 1
    %s69 = scalar_select %p66, %s67, %s68
    %p72 = pneg %p66
    %p73 = scmp.eq.s32.totalorder %s10, 1
    %p74 = por %p72, %p73
    %p75 = scmp.ne.s32.totalorder %s67, %s70
    %p76 = scmp.eq.s32.totalorder %s10, 0
    %p77 = por %p75, %p76
    %p78 = scmp.ne.s32.totalorder %s67, %s70
    %p79 = scmp.eq.s32.totalorder %s15, 1
    %p80 = por %p78, %p79
    %p81 = scmp.ne.s32.totalorder %s70, %s71
    %p82 = scmp.eq.s32.totalorder %s15, 0
    %p83 = por %p81, %p82
    %p84 = scmp.ne.s32.totalorder %s70, %s71
    %p85 = scmp.eq.s32.totalorder %s16, 1
    %p86 = por %p84, %p85
    %p88 = scmp.ne.s32.totalorder %s71, %s87
    %p89 = scmp.eq.s32.totalorder %s16, 0
    %p90 = por %p88, %p89
    %s91 = ssub.s32 %s10, %s17
    %p92 = scmp.eq.s32.totalorder %s91, 0
    %s94 = sadd.s32 %s93, 1
    %s95 = scalar_select %p92, %s93, %s94
    %p98 = pneg %p92
    %p99 = scmp.eq.s32.totalorder %s10, 1
    %p100 = por %p98, %p99
    %p101 = scmp.ne.s32.totalorder %s93, %s96
    %p102 = scmp.eq.s32.totalorder %s10, 0
    %p103 = por %p101, %p102
    %p104 = scmp.ne.s32.totalorder %s93, %s96
    %p105 = scmp.eq.s32.totalorder %s15, 1
    %p106 = por %p104, %p105
    %p107 = scmp.ne.s32.totalorder %s96, %s97
    %p108 = scmp.eq.s32.totalorder %s15, 0
    %p109 = por %p107, %p108
    %p110 = scmp.ne.s32.totalorder %s96, %s97
    %p111 = scmp.eq.s32.totalorder %s16, 1
    %p112 = por %p110, %p111
    %p114 = scmp.ne.s32.totalorder %s97, %s113
    %p115 = scmp.eq.s32.totalorder %s16, 0
    %p116 = por %p114, %p115
    %p117 = scmp.le.s32.totalorder 1, %s10
    %p118 = scmp.lt.s32.totalorder %s10, 3
    %p119 = pnand %p117, %p118
    %p120 = pneg %p119
    // Predicated region
    $region9: #{intra_gcn_forward.5} parent=5 // pred_check
      _
    $region10: #{intra_gcn_forward.5} parent=5 // pred_check_branch
      %122 = sbr.rel (%p119) target = $region12
    $region11: #{intra_gcn_forward.5} parent=5 // pred_region
      %s123 = ssub.s32 %s10, 1
      // Predicated region
      $region13: #{intra_gcn_forward.5} parent=11 // pred_check
        %p124 = pneg %p57
      $region14: #{intra_gcn_forward.5} parent=11 // pred_check_branch
        %126 = sbr.rel (%p124) target = $region16
      $region15: #{intra_gcn_forward.5} parent=11 // pred_region
        _
      $region16: #{intra_gcn_forward.5} parent=11 // pred_fallthru
        _
    $region12: #{intra_gcn_forward.5} parent=5 // pred_fallthru
      _
    %p127 = scmp.lt.s32.totalorder %s10, 2
    // Predicated region
    $region17: #{intra_gcn_forward.5} parent=5 // pred_check
      %p128 = pneg %p127
    $region18: #{intra_gcn_forward.5} parent=5 // pred_check_branch
      %130 = sbr.rel (%p128) target = $region20
    $region19: #{intra_gcn_forward.5} parent=5 // pred_region
      // Predicated region
      $region21: #{intra_gcn_forward.5} parent=19 // pred_check
        %p131 = pneg %p30
      $region22: #{intra_gcn_forward.5} parent=19 // pred_check_branch
        %133 = sbr.rel (%p131) target = $region24
      $region23: #{intra_gcn_forward.5} parent=19 // pred_region
        %s134 = smul.u32 8, %s10
        %p135 = scmp.lt.s32.totalorder %s134, 15
        %s136 = scalar_select %p135, %s134, 15
        %s137 = smul.addr %s136, 8
        %s138 = scalar_lea.vmem %s0, %s137
        %s139 = smul.u32 8, %s10
      $region24: #{intra_gcn_forward.5} parent=19 // pred_fallthru
        _
    $region20: #{intra_gcn_forward.5} parent=5 // pred_fallthru
      _
    %p140 = scmp.le.s32.totalorder 1, %s10
    %p141 = scmp.lt.s32.totalorder %s10, 3
    %p142 = pnand %p140, %p141
    %p143 = pneg %p142
    // Predicated region
    $region25: #{intra_gcn_forward.5} parent=5 // pred_check
      _
    $region26: #{intra_gcn_forward.5} parent=5 // pred_check_branch
      %145 = sbr.rel (%p142) target = $region28
    $region27: #{intra_gcn_forward.5} parent=5 // pred_region
      %s146 = ssub.s32 %s10, 1
      %s147 = smul.u32 8, %s15
      %p148 = scmp.lt.s32.totalorder %s147, 15
      %s149 = scalar_select %p148, %s147, 15
      %s150 = smul.addr %s149, 8
      %s151 = scalar_lea.vmem %s0, %s150
      %p152 = pneg %p36
      %p153 = pneg %p33
      %p154 = pneg %p57
      %p155 = pneg %p54
      %p156 = pneg %p83
      %p157 = pneg %p80
      %s158 = smul.u32 8, %s15
      %p159 = scmp.lt.s32.totalorder %s158, 15
      %s160 = scalar_select %p159, %s158, 15
      %s161 = smul.addr %s160, 4
      %s162 = scalar_lea.vmem %s2, %s161
      %p163 = pneg %p109
      %p164 = pneg %p106
      %s165 = smul.u32 8, %s15
      %p166 = scmp.lt.s32.totalorder %s165, 15
      %s167 = scalar_select %p166, %s165, 15
      %s168 = smul.addr %s167, 2
      %s169 = smul.addr %s168, 8
      %s170 = scalar_lea.vmem %s3, %s169
      %s171 = smul.u32 8, %s15
      %p172 = scmp.lt.s32.totalorder %s171, 15
      %s173 = scalar_select %p172, %s171, 15
      %s174 = smul.addr %s173, 8
      %s175 = scalar_lea.vmem %s0, %s174
      %s176 = smul.u32 8, %s15
      %s177 = smul.u32 8, %s15
      %p178 = scmp.lt.s32.totalorder %s177, 15
      %s179 = scalar_select %p178, %s177, 15
      %s180 = smul.addr %s179, 4
      %s181 = scalar_lea.vmem %s2, %s180
      %s182 = smul.u32 8, %s15
      %s183 = smul.u32 8, %s15
      %p184 = scmp.lt.s32.totalorder %s183, 15
      %s185 = scalar_select %p184, %s183, 15
      %s186 = smul.addr %s185, 2
      %s187 = smul.addr %s186, 8
      %s188 = scalar_lea.vmem %s3, %s187
      %s189 = smul.u32 8, %s15
      %v190 = vld [vmem:[%s175] sm:$0xff]
      %v191 = vld [vmem:[%s175 + $0x8] sm:$0xff]
      %v192 = vld [vmem:[%s175 + $0x10] sm:$0xff]
      %v193 = vld [vmem:[%s175 + $0x18] sm:$0xff]
      %v194 = vld [vmem:[%s175 + $0x20] sm:$0xff]
      %v195 = vld [vmem:[%s175 + $0x28] sm:$0xff]
      %v196 = vld [vmem:[%s175 + $0x30] sm:$0xff]
      %v197 = vld [vmem:[%s175 + $0x38] sm:$0xff]
      %v198 = vld [vmem:[%s1] sm:$0x1]
      %v199 = vperm.slane %v198, 0
      %v200 = vmul.f32 %v190, %v199
      %v201 = vmul.f32 %v191, %v199
      %v202 = vmul.f32 %v192, %v199
      %v203 = vmul.f32 %v193, %v199
      %v204 = vmul.f32 %v194, %v199
      %v205 = vmul.f32 %v195, %v199
      %v206 = vmul.f32 %v196, %v199
      %v207 = vmul.f32 %v197, %v199
      %v208 = vld [vmem:[%s1 + $0x8] sm:$0x1]
      %v209 = vperm.slane %v208, 0
      %v210 = vadd.f32 %v200, %v209
      %v211 = vadd.f32 %v201, %v209
      %v212 = vadd.f32 %v202, %v209
      %v213 = vadd.f32 %v203, %v209
      %v214 = vadd.f32 %v204, %v209
      %v215 = vadd.f32 %v205, %v209
      %v216 = vadd.f32 %v206, %v209
      %v217 = vadd.f32 %v207, %v209
      %v218 = vld [vmem:[%s1 + $0x10] sm:$0xff]
      %v219 = vld [vmem:[%s1 + $0x18] sm:$0xff]
      %v220 = vld [vmem:[%s1 + $0x20] sm:$0xff]
      %v221 = vld [vmem:[%s1 + $0x28] sm:$0xff]
      %v222 = vld [vmem:[%s1 + $0x30] sm:$0xff]
      %v223 = vld [vmem:[%s1 + $0x38] sm:$0xff]
      %v224 = vld [vmem:[%s1 + $0x40] sm:$0xff]
      %v225 = vld [vmem:[%s1 + $0x48] sm:$0xff]
      %v226 = vld [vmem:[%s1 + $0x50] sm:$0xff]
      %v227 = vld [vmem:[%s1 + $0x58] sm:$0xff]
      %v228 = vld [vmem:[%s1 + $0x60] sm:$0xff]
      %v229 = vld [vmem:[%s1 + $0x68] sm:$0xff]
      %v230 = vld [vmem:[%s1 + $0x70] sm:$0xff]
      %v231 = vld [vmem:[%s1 + $0x78] sm:$0xff]
      %v232 = vld [vmem:[%s1 + $0x80] sm:$0xff]
      %v233 = vld [vmem:[%s1 + $0x88] sm:$0xff]
      %v234 = vld [vmem:[%s1 + $0x190] sm:$0x1]
      %v235 = vperm.slane %v234, 0
      %236 = vmatpush.msra.mxu0 %v233
      %237 = vmatpush.msra.mxu0 %v232
      %238 = vmatpush.msra.mxu0 %v231
      %239 = vmatpush.msra.mxu0 %v230
      %240 = vmatpush.msra.mxu0 %v229
      %241 = vmatpush.msra.mxu0 %v228
      %242 = vmatpush.msra.mxu0 %v227
      %243 = vmatpush.msra.mxu0 %v226
      %244 = vmatpush.msra.mxu0 %v225
      %245 = vmatpush.msra.mxu0 %v224
      %246 = vmatpush.msra.mxu0 %v223
      %247 = vmatpush.msra.mxu0 %v222
      %248 = vmatpush.msra.mxu0 %v221
      %249 = vmatpush.msra.mxu0 %v220
      %250 = vmatpush.msra.mxu0 %v219
      %251 = vmatpush.msra.mxu0 %v218
      %252 = vmatmul.f32.gmra.mxu0 %v210
      %v253 = vpop.f32.mrf.mxu0
      %v254 = vadd.f32 %v235, %v253
      %255 = vmatmul.f32.gmra.mxu0 %v211
      %v256 = vpop.f32.mrf.mxu0
      %v257 = vadd.f32 %v235, %v256
      %258 = vmatmul.f32.gmra.mxu0 %v212
      %v259 = vpop.f32.mrf.mxu0
      %v260 = vadd.f32 %v235, %v259
      %261 = vmatmul.f32.gmra.mxu0 %v213
      %v262 = vpop.f32.mrf.mxu0
      %v263 = vadd.f32 %v235, %v262
      %264 = vmatmul.f32.gmra.mxu0 %v214
      %v265 = vpop.f32.mrf.mxu0
      %v266 = vadd.f32 %v235, %v265
      %267 = vmatmul.f32.gmra.mxu0 %v215
      %v268 = vpop.f32.mrf.mxu0
      %v269 = vadd.f32 %v235, %v268
      %270 = vmatmul.f32.gmra.mxu0 %v216
      %v271 = vpop.f32.mrf.mxu0
      %v272 = vadd.f32 %v235, %v271
      %273 = vmatmul.f32.gmra.mxu0 %v217
      %v274 = vpop.f32.mrf.mxu0
      %v275 = vadd.f32 %v235, %v274
      %276 = vdwg.mxu0
      %v277 = vpack.c.bf16 %v254, %v254
      %v278 = vpack.c.bf16 %v257, %v257
      %v279 = vpack.c.bf16 %v260, %v260
      %v280 = vpack.c.bf16 %v263, %v263
      %v281 = vpack.c.bf16 %v266, %v266
      %v282 = vpack.c.bf16 %v269, %v269
      %v283 = vpack.c.bf16 %v272, %v272
      %v284 = vpack.c.bf16 %v275, %v275
      %285 = vst [vmem:[%s181] sm:$0xf] %v277
      %286 = vst [vmem:[%s181 + $0x4] sm:$0xf] %v278
      %287 = vst [vmem:[%s181 + $0x8] sm:$0xf] %v279
      %288 = vst [vmem:[%s181 + $0xc] sm:$0xf] %v280
      %289 = vst [vmem:[%s181 + $0x10] sm:$0xf] %v281
      %290 = vst [vmem:[%s181 + $0x14] sm:$0xf] %v282
      %291 = vst [vmem:[%s181 + $0x18] sm:$0xf] %v283
      %292 = vst [vmem:[%s181 + $0x1c] sm:$0xf] %v284
      %v293 = vld [vmem:[%s1 + $0x90] sm:$0xff]
      %v294 = vld [vmem:[%s1 + $0x98] sm:$0xff]
      %v295 = vld [vmem:[%s1 + $0xa0] sm:$0xff]
      %v296 = vld [vmem:[%s1 + $0xa8] sm:$0xff]
      %v297 = vld [vmem:[%s1 + $0xb0] sm:$0xff]
      %v298 = vld [vmem:[%s1 + $0xb8] sm:$0xff]
      %v299 = vld [vmem:[%s1 + $0xc0] sm:$0xff]
      %v300 = vld [vmem:[%s1 + $0xc8] sm:$0xff]
      %v301 = vld [vmem:[%s1 + $0xd0] sm:$0xff]
      %v302 = vld [vmem:[%s1 + $0xd8] sm:$0xff]
      %v303 = vld [vmem:[%s1 + $0xe0] sm:$0xff]
      %v304 = vld [vmem:[%s1 + $0xe8] sm:$0xff]
      %v305 = vld [vmem:[%s1 + $0xf0] sm:$0xff]
      %v306 = vld [vmem:[%s1 + $0xf8] sm:$0xff]
      %v307 = vld [vmem:[%s1 + $0x100] sm:$0xff]
      %v308 = vld [vmem:[%s1 + $0x108] sm:$0xff]
      %309 = vmatpush.msra.mxu0 %v308
      %310 = vmatpush.msra.mxu0 %v307
      %311 = vmatpush.msra.mxu0 %v306
      %312 = vmatpush.msra.mxu0 %v305
      %313 = vmatpush.msra.mxu0 %v304
      %314 = vmatpush.msra.mxu0 %v303
      %315 = vmatpush.msra.mxu0 %v302
      %316 = vmatpush.msra.mxu0 %v301
      %317 = vmatpush.msra.mxu0 %v300
      %318 = vmatpush.msra.mxu0 %v299
      %319 = vmatpush.msra.mxu0 %v298
      %320 = vmatpush.msra.mxu0 %v297
      %321 = vmatpush.msra.mxu0 %v296
      %322 = vmatpush.msra.mxu0 %v295
      %323 = vmatpush.msra.mxu0 %v294
      %324 = vmatpush.msra.mxu0 %v293
      %325 = vmatmul.f32.gmra.mxu0 %v210
      %v326 = vpop.f32.mrf.mxu0
      %v327 = vadd.f32 0.0, %v326
      %328 = vmatmul.f32.gmra.mxu0 %v211
      %v329 = vpop.f32.mrf.mxu0
      %v330 = vadd.f32 0.0, %v329
      %331 = vmatmul.f32.gmra.mxu0 %v212
      %v332 = vpop.f32.mrf.mxu0
      %v333 = vadd.f32 0.0, %v332
      %334 = vmatmul.f32.gmra.mxu0 %v213
      %v335 = vpop.f32.mrf.mxu0
      %v336 = vadd.f32 0.0, %v335
      %337 = vmatmul.f32.gmra.mxu0 %v214
      %v338 = vpop.f32.mrf.mxu0
      %v339 = vadd.f32 0.0, %v338
      %340 = vmatmul.f32.gmra.mxu0 %v215
      %v341 = vpop.f32.mrf.mxu0
      %v342 = vadd.f32 0.0, %v341
      %343 = vmatmul.f32.gmra.mxu0 %v216
      %v344 = vpop.f32.mrf.mxu0
      %v345 = vadd.f32 0.0, %v344
      %346 = vmatmul.f32.gmra.mxu0 %v217
      %v347 = vpop.f32.mrf.mxu0
      %v348 = vadd.f32 0.0, %v347
      %349 = vdwg.mxu0
      %350 = vst [vmem:[%s188] sm:$0xff] %v327
      %351 = vst [vmem:[%s188 + $0x10] sm:$0xff] %v330
      %352 = vst [vmem:[%s188 + $0x20] sm:$0xff] %v333
      %353 = vst [vmem:[%s188 + $0x30] sm:$0xff] %v336
      %354 = vst [vmem:[%s188 + $0x40] sm:$0xff] %v339
      %355 = vst [vmem:[%s188 + $0x50] sm:$0xff] %v342
      %356 = vst [vmem:[%s188 + $0x60] sm:$0xff] %v345
      %357 = vst [vmem:[%s188 + $0x70] sm:$0xff] %v348
      %v358 = vld [vmem:[%s1 + $0x110] sm:$0xff]
      %v359 = vld [vmem:[%s1 + $0x118] sm:$0xff]
      %v360 = vld [vmem:[%s1 + $0x120] sm:$0xff]
      %v361 = vld [vmem:[%s1 + $0x128] sm:$0xff]
      %v362 = vld [vmem:[%s1 + $0x130] sm:$0xff]
      %v363 = vld [vmem:[%s1 + $0x138] sm:$0xff]
      %v364 = vld [vmem:[%s1 + $0x140] sm:$0xff]
      %v365 = vld [vmem:[%s1 + $0x148] sm:$0xff]
      %v366 = vld [vmem:[%s1 + $0x150] sm:$0xff]
      %v367 = vld [vmem:[%s1 + $0x158] sm:$0xff]
      %v368 = vld [vmem:[%s1 + $0x160] sm:$0xff]
      %v369 = vld [vmem:[%s1 + $0x168] sm:$0xff]
      %v370 = vld [vmem:[%s1 + $0x170] sm:$0xff]
      %v371 = vld [vmem:[%s1 + $0x178] sm:$0xff]
      %v372 = vld [vmem:[%s1 + $0x180] sm:$0xff]
      %v373 = vld [vmem:[%s1 + $0x188] sm:$0xff]
      %v374 = vld [vmem:[%s1 + $0x198] sm:$0x1]
      %v375 = vperm.slane %v374, 0
      %376 = vmatpush.msra.mxu0 %v373
      %377 = vmatpush.msra.mxu0 %v372
      %378 = vmatpush.msra.mxu0 %v371
      %379 = vmatpush.msra.mxu0 %v370
      %380 = vmatpush.msra.mxu0 %v369
      %381 = vmatpush.msra.mxu0 %v368
      %382 = vmatpush.msra.mxu0 %v367
      %383 = vmatpush.msra.mxu0 %v366
      %384 = vmatpush.msra.mxu0 %v365
      %385 = vmatpush.msra.mxu0 %v364
      %386 = vmatpush.msra.mxu0 %v363
      %387 = vmatpush.msra.mxu0 %v362
      %388 = vmatpush.msra.mxu0 %v361
      %389 = vmatpush.msra.mxu0 %v360
      %390 = vmatpush.msra.mxu0 %v359
      %391 = vmatpush.msra.mxu0 %v358
      %392 = vmatmul.f32.gmra.mxu0 %v210
      %v393 = vpop.f32.mrf.mxu0
      %v394 = vadd.f32 %v375, %v393
      %395 = vmatmul.f32.gmra.mxu0 %v211
      %v396 = vpop.f32.mrf.mxu0
      %v397 = vadd.f32 %v375, %v396
      %398 = vmatmul.f32.gmra.mxu0 %v212
      %v399 = vpop.f32.mrf.mxu0
      %v400 = vadd.f32 %v375, %v399
      %401 = vmatmul.f32.gmra.mxu0 %v213
      %v402 = vpop.f32.mrf.mxu0
      %v403 = vadd.f32 %v375, %v402
      %404 = vmatmul.f32.gmra.mxu0 %v214
      %v405 = vpop.f32.mrf.mxu0
      %v406 = vadd.f32 %v375, %v405
      %407 = vmatmul.f32.gmra.mxu0 %v215
      %v408 = vpop.f32.mrf.mxu0
      %v409 = vadd.f32 %v375, %v408
      %410 = vmatmul.f32.gmra.mxu0 %v216
      %v411 = vpop.f32.mrf.mxu0
      %v412 = vadd.f32 %v375, %v411
      %413 = vmatmul.f32.gmra.mxu0 %v217
      %v414 = vpop.f32.mrf.mxu0
      %v415 = vadd.f32 %v375, %v414
      %416 = vdwg.mxu0
      %417 = vst [vmem:[%s188 + $0x8] sm:$0xff] %v394
      %418 = vst [vmem:[%s188 + $0x18] sm:$0xff] %v397
      %419 = vst [vmem:[%s188 + $0x28] sm:$0xff] %v400
      %420 = vst [vmem:[%s188 + $0x38] sm:$0xff] %v403
      %421 = vst [vmem:[%s188 + $0x48] sm:$0xff] %v406
      %422 = vst [vmem:[%s188 + $0x58] sm:$0xff] %v409
      %423 = vst [vmem:[%s188 + $0x68] sm:$0xff] %v412
      %424 = vst [vmem:[%s188 + $0x78] sm:$0xff] %v415
      %s425 = smul.u32 8, %s15
      %p426 = scmp.lt.s32.totalorder %s425, 15
      %s427 = scalar_select %p426, %s425, 15
      %s428 = smul.addr %s427, 4
      %s429 = scalar_lea.vmem %s2, %s428
      %s430 = smul.u32 8, %s15
      %p431 = scmp.lt.s32.totalorder %s430, 15
      %s432 = scalar_select %p431, %s430, 15
      %s433 = smul.addr %s432, 2
      %s434 = smul.addr %s433, 8
      %s435 = scalar_lea.vmem %s3, %s434
      // Predicated region
      $region29: #{intra_gcn_forward.5} parent=27 // pred_check
        %p436 = pneg %p80
      $region30: #{intra_gcn_forward.5} parent=27 // pred_check_branch
        %438 = sbr.rel (%p436) target = $region32
      $region31: #{intra_gcn_forward.5} parent=27 // pred_region
        %s439 = smul.u32 8, %s15
      $region32: #{intra_gcn_forward.5} parent=27 // pred_fallthru
        _
      // Predicated region
      $region33: #{intra_gcn_forward.5} parent=27 // pred_check
        %p440 = pneg %p106
      $region34: #{intra_gcn_forward.5} parent=27 // pred_check_branch
        %442 = sbr.rel (%p440) target = $region36
      $region35: #{intra_gcn_forward.5} parent=27 // pred_region
        %s443 = smul.u32 8, %s15
      $region36: #{intra_gcn_forward.5} parent=27 // pred_fallthru
        _
    $region28: #{intra_gcn_forward.5} parent=5 // pred_fallthru
      _
    %p444 = scmp.le.s32.totalorder 2, %s10
    // Predicated region
    $region37: #{intra_gcn_forward.5} parent=5 // pred_check
      %p445 = pneg %p444
    $region38: #{intra_gcn_forward.5} parent=5 // pred_check_branch
      %447 = sbr.rel (%p445) target = $region40
    $region39: #{intra_gcn_forward.5} parent=5 // pred_region
      %s448 = ssub.s32 %s10, 2
      // Predicated region
      $region41: #{intra_gcn_forward.5} parent=39 // pred_check
        %p449 = pneg %p86
      $region42: #{intra_gcn_forward.5} parent=39 // pred_check_branch
        %451 = sbr.rel (%p449) target = $region44
      $region43: #{intra_gcn_forward.5} parent=39 // pred_region
        %s452 = smul.u32 8, %s16
        %p453 = scmp.lt.s32.totalorder %s452, 15
        %s454 = scalar_select %p453, %s452, 15
        %s455 = smul.addr %s454, 4
        %s456 = scalar_lea.vmem %s2, %s455
      $region44: #{intra_gcn_forward.5} parent=39 // pred_fallthru
        _
      // Predicated region
      $region45: #{intra_gcn_forward.5} parent=39 // pred_check
        %p457 = pneg %p112
      $region46: #{intra_gcn_forward.5} parent=39 // pred_check_branch
        %459 = sbr.rel (%p457) target = $region48
      $region47: #{intra_gcn_forward.5} parent=39 // pred_region
        %s460 = smul.u32 8, %s16
        %p461 = scmp.lt.s32.totalorder %s460, 15
        %s462 = scalar_select %p461, %s460, 15
        %s463 = smul.addr %s462, 2
        %s464 = smul.addr %s463, 8
        %s465 = scalar_lea.vmem %s3, %s464
      $region48: #{intra_gcn_forward.5} parent=39 // pred_fallthru
        _
    $region40: #{intra_gcn_forward.5} parent=5 // pred_fallthru
      _
  $region6: #{intra_gcn_forward.5} parent=0 // loop_footer
    %s14 = sadd.s32 1, %s10
  $region7: #{intra_gcn_forward.5} parent=0 // loop_footer_branch
    %9 = sbr.rel target = $region3
  $region8: #{intra_gcn_forward.5} parent=0 // loop_exit
    _

// kernel: intra_gcn_forward.6
$region0: #{intra_gcn_forward.6}
  #allocation0 [shape = 'u32[]', space=smem, size = 0x4, offset = 0x4, fixed_abs, tag = 'smem constant byte address 0x4 - core index']
  #allocation1 [shape = 'u32[72,128]{1,0:T(1,128)}', space=vmem, size = 0x9000, scoped, tag = 'internal scratch']
  #allocation2 [shape = 'f32[64,128]{1,0:T(8,128)}', space=vmem, size = 0x8000, scoped, tag = 'scratch operand']
  %s0 = inlined_call_operand.vmem [shape: bf16[128,128], index: 0, kind: input, shape index: {}]
  %s1 = inlined_call_operand.vmem [shape: bf16[128,128], index: 1, kind: input, shape index: {}]
  %s2 = inlined_call_operand.vmem [shape: f32[128,256], index: 2, kind: input, shape index: {}]
  %s3 = inlined_call_operand.vmem [shape: f32[128,128], index: 3, kind: input, shape index: {}]
  %s4 = inlined_call_operand.vmem [shape: f32[264,128], index: 4, kind: input, shape index: {}]
  %s5 = inlined_call_operand.vmem [shape: bf16[128,128], index: 5, kind: output, shape index: {0}]
  %s6 = inlined_call_operand.vmem [shape: f32[128,128], index: 6, kind: output, shape index: {1}]
  %7 = xla_tuple %s5, %s6
  %s8 = sld [smem:[#allocation0]]
  $region69: #{intra_gcn_forward.6} parent=0
    _
  %s10 = ssub.s32 1, %s8
  %s11 = scalar_select 0, %s10, %s8
  loop: start=0, step=1, limit=4
  $region2: #{intra_gcn_forward.6} parent=0 // loop_pre_header
    _
  $region3: #{intra_gcn_forward.6} parent=0 // loop_header
    %s13 = sphi 0, %s17
    %p14 = scmp.ge.s32.totalorder %s13, 4
    %s20 = sphi 0, %s32
    %s21 = sphi 0, %s28
    %s22 = sphi 0, %s20
    %s23 = sphi 0, %s21
    %s24 = sphi 0, %s22
    %s25 = sphi 0, %s23
    %s37 = sphi 0, %s39
    %s40 = sphi 0, %s37
    %s41 = sphi 0, %s40
    %s57 = sphi 0, %s41
    %s63 = sphi 0, %s65
    %s66 = sphi 0, %s63
    %s67 = sphi 0, %s66
    %s83 = sphi 0, %s67
    %s89 = sphi 0, %s91
    %s92 = sphi 0, %s89
    %s93 = sphi 0, %s92
    %s109 = sphi 0, %s93
    %s115 = sphi 0, %s117
    %s118 = sphi 0, %s115
    %s119 = sphi 0, %s118
    %s135 = sphi 0, %s119
    %s139 = sphi 0, %s139
    %s141 = sphi 0, %s139
    %s142 = sphi 0, %s141
    %s156 = sphi 0, %s142
    %s162 = sphi 0, %s164
    %s165 = sphi 0, %s162
    %s166 = sphi 0, %s165
    %s182 = sphi 0, %s166
    %s188 = sphi 0, %s190
    %s191 = sphi 0, %s188
    %s192 = sphi 0, %s191
    %s208 = sphi 0, %s192
  $region4: #{intra_gcn_forward.6} parent=0 // loop_header_branch
    %16 = sbr.rel (%p14) target = $region8
  $region5: #{intra_gcn_forward.6} parent=0 // loop_body
    %s18 = ssub.s32 %s13, 1
    %s19 = ssub.s32 %s13, 2
    %s26 = sadd.s32 1, %s21
    %p27 = scmp.ge.s32.totalorder %s26, 1
    %s28 = scalar_select %p27, 0, %s26
    %s29 = sadd.s32 1, %s20
    %s30 = scalar_select %p27, %s29, %s20
    %p31 = scmp.ge.s32.totalorder %s30, 2
    %s32 = scalar_select %p31, 0, %s30
    %s33 = ssub.s32 %s20, %s32
    %s34 = ssub.s32 %s21, %s28
    %s35 = sor.u32 %s33, %s34
    %p36 = scmp.eq.s32.totalorder %s35, 0
    %s38 = sadd.s32 %s37, 1
    %s39 = scalar_select %p36, %s37, %s38
    %p42 = pneg %p36
    %p43 = scmp.eq.s32.totalorder %s13, 1
    %p44 = por %p42, %p43
    %p45 = scmp.ne.s32.totalorder %s37, %s40
    %p46 = scmp.eq.s32.totalorder %s13, 0
    %p47 = por %p45, %p46
    %p48 = scmp.ne.s32.totalorder %s37, %s40
    %p49 = scmp.eq.s32.totalorder %s18, 1
    %p50 = por %p48, %p49
    %p51 = scmp.ne.s32.totalorder %s40, %s41
    %p52 = scmp.eq.s32.totalorder %s18, 0
    %p53 = por %p51, %p52
    %p54 = scmp.ne.s32.totalorder %s40, %s41
    %p55 = scmp.eq.s32.totalorder %s19, 1
    %p56 = por %p54, %p55
    %p58 = scmp.ne.s32.totalorder %s41, %s57
    %p59 = scmp.eq.s32.totalorder %s19, 0
    %p60 = por %p58, %p59
    %s61 = ssub.s32 %s21, %s28
    %p62 = scmp.eq.s32.totalorder %s61, 0
    %s64 = sadd.s32 %s63, 1
    %s65 = scalar_select %p62, %s63, %s64
    %p68 = pneg %p62
    %p69 = scmp.eq.s32.totalorder %s13, 1
    %p70 = por %p68, %p69
    %p71 = scmp.ne.s32.totalorder %s63, %s66
    %p72 = scmp.eq.s32.totalorder %s13, 0
    %p73 = por %p71, %p72
    %p74 = scmp.ne.s32.totalorder %s63, %s66
    %p75 = scmp.eq.s32.totalorder %s18, 1
    %p76 = por %p74, %p75
    %p77 = scmp.ne.s32.totalorder %s66, %s67
    %p78 = scmp.eq.s32.totalorder %s18, 0
    %p79 = por %p77, %p78
    %p80 = scmp.ne.s32.totalorder %s66, %s67
    %p81 = scmp.eq.s32.totalorder %s19, 1
    %p82 = por %p80, %p81
    %p84 = scmp.ne.s32.totalorder %s67, %s83
    %p85 = scmp.eq.s32.totalorder %s19, 0
    %p86 = por %p84, %p85
    %s87 = ssub.s32 %s20, %s32
    %p88 = scmp.eq.s32.totalorder %s87, 0
    %s90 = sadd.s32 %s89, 1
    %s91 = scalar_select %p88, %s89, %s90
    %p94 = pneg %p88
    %p95 = scmp.eq.s32.totalorder %s13, 1
    %p96 = por %p94, %p95
    %p97 = scmp.ne.s32.totalorder %s89, %s92
    %p98 = scmp.eq.s32.totalorder %s13, 0
    %p99 = por %p97, %p98
    %p100 = scmp.ne.s32.totalorder %s89, %s92
    %p101 = scmp.eq.s32.totalorder %s18, 1
    %p102 = por %p100, %p101
    %p103 = scmp.ne.s32.totalorder %s92, %s93
    %p104 = scmp.eq.s32.totalorder %s18, 0
    %p105 = por %p103, %p104
    %p106 = scmp.ne.s32.totalorder %s92, %s93
    %p107 = scmp.eq.s32.totalorder %s19, 1
    %p108 = por %p106, %p107
    %p110 = scmp.ne.s32.totalorder %s93, %s109
    %p111 = scmp.eq.s32.totalorder %s19, 0
    %p112 = por %p110, %p111
    %s113 = ssub.s32 %s20, %s32
    %p114 = scmp.eq.s32.totalorder %s113, 0
    %s116 = sadd.s32 %s115, 1
    %s117 = scalar_select %p114, %s115, %s116
    %p120 = pneg %p114
    %p121 = scmp.eq.s32.totalorder %s13, 1
    %p122 = por %p120, %p121
    %p123 = scmp.ne.s32.totalorder %s115, %s118
    %p124 = scmp.eq.s32.totalorder %s13, 0
    %p125 = por %p123, %p124
    %p126 = scmp.ne.s32.totalorder %s115, %s118
    %p127 = scmp.eq.s32.totalorder %s18, 1
    %p128 = por %p126, %p127
    %p129 = scmp.ne.s32.totalorder %s118, %s119
    %p130 = scmp.eq.s32.totalorder %s18, 0
    %p131 = por %p129, %p130
    %p132 = scmp.ne.s32.totalorder %s118, %s119
    %p133 = scmp.eq.s32.totalorder %s19, 1
    %p134 = por %p132, %p133
    %p136 = scmp.ne.s32.totalorder %s119, %s135
    %p137 = scmp.eq.s32.totalorder %s19, 0
    %p138 = por %p136, %p137
    %s140 = sadd.s32 %s139, 1
    %p143 = scmp.eq.s32.totalorder %s13, 1
    %p144 = scmp.ne.s32.totalorder %s139, %s141
    %p145 = scmp.eq.s32.totalorder %s13, 0
    %p146 = por %p144, %p145
    %p147 = scmp.ne.s32.totalorder %s139, %s141
    %p148 = scmp.eq.s32.totalorder %s18, 1
    %p149 = por %p147, %p148
    %p150 = scmp.ne.s32.totalorder %s141, %s142
    %p151 = scmp.eq.s32.totalorder %s18, 0
    %p152 = por %p150, %p151
    %p153 = scmp.ne.s32.totalorder %s141, %s142
    %p154 = scmp.eq.s32.totalorder %s19, 1
    %p155 = por %p153, %p154
    %p157 = scmp.ne.s32.totalorder %s142, %s156
    %p158 = scmp.eq.s32.totalorder %s19, 0
    %p159 = por %p157, %p158
    %s160 = ssub.s32 %s20, %s32
    %p161 = scmp.eq.s32.totalorder %s160, 0
    %s163 = sadd.s32 %s162, 1
    %s164 = scalar_select %p161, %s162, %s163
    %p167 = pneg %p161
    %p168 = scmp.eq.s32.totalorder %s13, 1
    %p169 = por %p167, %p168
    %p170 = scmp.ne.s32.totalorder %s162, %s165
    %p171 = scmp.eq.s32.totalorder %s13, 0
    %p172 = por %p170, %p171
    %p173 = scmp.ne.s32.totalorder %s162, %s165
    %p174 = scmp.eq.s32.totalorder %s18, 1
    %p175 = por %p173, %p174
    %p176 = scmp.ne.s32.totalorder %s165, %s166
    %p177 = scmp.eq.s32.totalorder %s18, 0
    %p178 = por %p176, %p177
    %p179 = scmp.ne.s32.totalorder %s165, %s166
    %p180 = scmp.eq.s32.totalorder %s19, 1
    %p181 = por %p179, %p180
    %p183 = scmp.ne.s32.totalorder %s166, %s182
    %p184 = scmp.eq.s32.totalorder %s19, 0
    %p185 = por %p183, %p184
    %s186 = ssub.s32 %s20, %s32
    %p187 = scmp.eq.s32.totalorder %s186, 0
    %s189 = sadd.s32 %s188, 1
    %s190 = scalar_select %p187, %s188, %s189
    %p193 = pneg %p187
    %p194 = scmp.eq.s32.totalorder %s13, 1
    %p195 = por %p193, %p194
    %p196 = scmp.ne.s32.totalorder %s188, %s191
    %p197 = scmp.eq.s32.totalorder %s13, 0
    %p198 = por %p196, %p197
    %p199 = scmp.ne.s32.totalorder %s188, %s191
    %p200 = scmp.eq.s32.totalorder %s18, 1
    %p201 = por %p199, %p200
    %p202 = scmp.ne.s32.totalorder %s191, %s192
    %p203 = scmp.eq.s32.totalorder %s18, 0
    %p204 = por %p202, %p203
    %p205 = scmp.ne.s32.totalorder %s191, %s192
    %p206 = scmp.eq.s32.totalorder %s19, 1
    %p207 = por %p205, %p206
    %p209 = scmp.ne.s32.totalorder %s192, %s208
    %p210 = scmp.eq.s32.totalorder %s19, 0
    %p211 = por %p209, %p210
    %p212 = scmp.le.s32.totalorder 1, %s13
    %p213 = scmp.lt.s32.totalorder %s13, 3
    %p214 = pnand %p212, %p213
    %p215 = pneg %p214
    // Predicated region
    $region9: #{intra_gcn_forward.6} parent=5 // pred_check
      _
    $region10: #{intra_gcn_forward.6} parent=5 // pred_check_branch
      %217 = sbr.rel (%p214) target = $region12
    $region11: #{intra_gcn_forward.6} parent=5 // pred_region
      %s218 = ssub.s32 %s13, 1
      // Predicated region
      $region13: #{intra_gcn_forward.6} parent=11 // pred_check
        %p219 = pneg %p79
      $region14: #{intra_gcn_forward.6} parent=11 // pred_check_branch
        %221 = sbr.rel (%p219) target = $region16
      $region15: #{intra_gcn_forward.6} parent=11 // pred_region
        %s222 = smul.u32 16, %s23
        %p223 = scmp.lt.s32.totalorder %s222, 15
        %s224 = scalar_select %p223, %s222, 15
        %s225 = smul.addr %s224, 4
        %s226 = scalar_lea.vmem %s1, %s225
        %s227 = smul.u32 16, %s23
      $region16: #{intra_gcn_forward.6} parent=11 // pred_fallthru
        _
      // Predicated region
      $region17: #{intra_gcn_forward.6} parent=11 // pred_check
        %p228 = pneg %p152
      $region18: #{intra_gcn_forward.6} parent=11 // pred_check_branch
        %230 = sbr.rel (%p228) target = $region20
      $region19: #{intra_gcn_forward.6} parent=11 // pred_region
        _
      $region20: #{intra_gcn_forward.6} parent=11 // pred_fallthru
        _
    $region12: #{intra_gcn_forward.6} parent=5 // pred_fallthru
      _
    %p231 = scmp.lt.s32.totalorder %s13, 2
    // Predicated region
    $region21: #{intra_gcn_forward.6} parent=5 // pred_check
      %p232 = pneg %p231
    $region22: #{intra_gcn_forward.6} parent=5 // pred_check_branch
      %234 = sbr.rel (%p232) target = $region24
    $region23: #{intra_gcn_forward.6} parent=5 // pred_region
      // Predicated region
      $region25: #{intra_gcn_forward.6} parent=23 // pred_check
        %p235 = pneg %p47
      $region26: #{intra_gcn_forward.6} parent=23 // pred_check_branch
        %237 = sbr.rel (%p235) target = $region28
      $region27: #{intra_gcn_forward.6} parent=23 // pred_region
        %s238 = smul.u32 8, %s20
        %p239 = scmp.lt.s32.totalorder %s238, 15
        %s240 = scalar_select %p239, %s238, 15
        %p241 = scmp.lt.s32.totalorder %s21, 0
        %s242 = scalar_select %p241, %s21, 0
        %s243 = sadd.s32 %s242, %s240
        %s244 = smul.addr %s243, 4
        %s245 = scalar_lea.vmem %s0, %s244
        %s246 = smul.u32 8, %s20
      $region28: #{intra_gcn_forward.6} parent=23 // pred_fallthru
        _
      // Predicated region
      $region29: #{intra_gcn_forward.6} parent=23 // pred_check
        %p247 = pneg %p99
      $region30: #{intra_gcn_forward.6} parent=23 // pred_check_branch
        %249 = sbr.rel (%p247) target = $region32
      $region31: #{intra_gcn_forward.6} parent=23 // pred_region
        %s250 = smul.u32 8, %s20
        %p251 = scmp.lt.s32.totalorder %s250, 15
        %s252 = scalar_select %p251, %s250, 15
        %s253 = smul.addr %s252, 2
        %s254 = smul.addr %s253, 8
        %s255 = scalar_lea.vmem %s2, %s254
        %s256 = smul.u32 8, %s20
      $region32: #{intra_gcn_forward.6} parent=23 // pred_fallthru
        _
      // Predicated region
      $region33: #{intra_gcn_forward.6} parent=23 // pred_check
        %p257 = pneg %p125
      $region34: #{intra_gcn_forward.6} parent=23 // pred_check_branch
        %259 = sbr.rel (%p257) target = $region36
      $region35: #{intra_gcn_forward.6} parent=23 // pred_region
        %s260 = smul.u32 8, %s20
        %p261 = scmp.lt.s32.totalorder %s260, 15
        %s262 = scalar_select %p261, %s260, 15
        %s263 = smul.addr %s262, 8
        %s264 = scalar_lea.vmem %s3, %s263
        %s265 = smul.u32 8, %s20
      $region36: #{intra_gcn_forward.6} parent=23 // pred_fallthru
        _
    $region24: #{intra_gcn_forward.6} parent=5 // pred_fallthru
      _
    %p266 = scmp.le.s32.totalorder 1, %s13
    %p267 = scmp.lt.s32.totalorder %s13, 3
    %p268 = pnand %p266, %p267
    %p269 = pneg %p268
    // Predicated region
    $region37: #{intra_gcn_forward.6} parent=5 // pred_check
      _
    $region38: #{intra_gcn_forward.6} parent=5 // pred_check_branch
      %271 = sbr.rel (%p268) target = $region40
    $region39: #{intra_gcn_forward.6} parent=5 // pred_region
      %s272 = ssub.s32 %s13, 1
      %s273 = smul.u32 8, %s22
      %p274 = scmp.lt.s32.totalorder %s273, 15
      %s275 = scalar_select %p274, %s273, 15
      %p276 = scmp.lt.s32.totalorder %s23, 0
      %s277 = scalar_select %p276, %s23, 0
      %s278 = sadd.s32 %s277, %s275
      %s279 = smul.addr %s278, 4
      %s280 = scalar_lea.vmem %s0, %s279
      %p281 = pneg %p53
      %p282 = pneg %p50
      %s283 = smul.u32 16, %s23
      %p284 = scmp.lt.s32.totalorder %s283, 15
      %s285 = scalar_select %p284, %s283, 15
      %s286 = smul.addr %s285, 4
      %s287 = scalar_lea.vmem %s1, %s286
      %p288 = pneg %p79
      %p289 = pneg %p76
      %s290 = smul.u32 8, %s22
      %p291 = scmp.lt.s32.totalorder %s290, 15
      %s292 = scalar_select %p291, %s290, 15
      %s293 = smul.addr %s292, 2
      %s294 = smul.addr %s293, 8
      %s295 = scalar_lea.vmem %s2, %s294
      %p296 = pneg %p105
      %p297 = pneg %p102
      %s298 = smul.u32 8, %s22
      %p299 = scmp.lt.s32.totalorder %s298, 15
      %s300 = scalar_select %p299, %s298, 15
      %s301 = smul.addr %s300, 8
      %s302 = scalar_lea.vmem %s3, %s301
      %p303 = pneg %p131
      %p304 = pneg %p128
      %p305 = pneg %p152
      %p306 = pneg %p149
      %p307 = pneg %p178
      %p308 = pneg %p175
      %s309 = smul.u32 8, %s22
      %p310 = scmp.lt.s32.totalorder %s309, 15
      %s311 = scalar_select %p310, %s309, 15
      %s312 = smul.addr %s311, 4
      %s313 = scalar_lea.vmem %s5, %s312
      %p314 = pneg %p204
      %p315 = pneg %p201
      %s316 = smul.u32 8, %s22
      %p317 = scmp.lt.s32.totalorder %s316, 15
      %s318 = scalar_select %p317, %s316, 15
      %s319 = smul.addr %s318, 8
      %s320 = scalar_lea.vmem %s6, %s319
      %s321 = smul.u32 8, %s22
      %p322 = scmp.lt.s32.totalorder %s321, 15
      %s323 = scalar_select %p322, %s321, 15
      %p324 = scmp.lt.s32.totalorder %s23, 0
      %s325 = scalar_select %p324, %s23, 0
      %s326 = sadd.s32 %s325, %s323
      %s327 = smul.addr %s326, 4
      %s328 = scalar_lea.vmem %s0, %s327
      %s329 = smul.u32 8, %s22
      %s330 = smul.u32 16, %s23
      %p331 = scmp.lt.s32.totalorder %s330, 15
      %s332 = scalar_select %p331, %s330, 15
      %s333 = smul.addr %s332, 4
      %s334 = scalar_lea.vmem %s1, %s333
      %s335 = smul.u32 16, %s23
      %s336 = smul.u32 8, %s22
      %p337 = scmp.lt.s32.totalorder %s336, 15
      %s338 = scalar_select %p337, %s336, 15
      %s339 = smul.addr %s338, 2
      %s340 = smul.addr %s339, 8
      %s341 = scalar_lea.vmem %s2, %s340
      %s342 = smul.u32 8, %s22
      %s343 = smul.u32 8, %s22
      %p344 = scmp.lt.s32.totalorder %s343, 15
      %s345 = scalar_select %p344, %s343, 15
      %s346 = smul.addr %s345, 8
      %s347 = scalar_lea.vmem %s3, %s346
      %s348 = smul.u32 8, %s22
      %s349 = smul.u32 8, %s22
      %p350 = scmp.lt.s32.totalorder %s349, 15
      %s351 = scalar_select %p350, %s349, 15
      %s352 = smul.addr %s351, 4
      %s353 = scalar_lea.vmem %s5, %s352
      %s354 = smul.u32 8, %s22
      %s355 = smul.u32 8, %s22
      %p356 = scmp.lt.s32.totalorder %s355, 15
      %s357 = scalar_select %p356, %s355, 15
      %s358 = smul.addr %s357, 8
      %s359 = scalar_lea.vmem %s6, %s358
      %s360 = smul.u32 8, %s22
      %p361 = scmp.eq.s32.totalorder %s23, 0
      // Predicated region
      $region41: #{intra_gcn_forward.6} parent=39 // pred_check
        %p362 = pneg %p361
      $region42: #{intra_gcn_forward.6} parent=39 // pred_check_branch
        %364 = sbr.rel (%p362) target = $region44
      $region43: #{intra_gcn_forward.6} parent=39 // pred_region
        %365 = vst [vmem:[#allocation2] sm:$0xff] 0.0
        %366 = vst [vmem:[#allocation2 + $0x8] sm:$0xff] 0.0
        %367 = vst [vmem:[#allocation2 + $0x10] sm:$0xff] 0.0
        %368 = vst [vmem:[#allocation2 + $0x18] sm:$0xff] 0.0
        %369 = vst [vmem:[#allocation2 + $0x20] sm:$0xff] 0.0
        %370 = vst [vmem:[#allocation2 + $0x28] sm:$0xff] 0.0
        %371 = vst [vmem:[#allocation2 + $0x30] sm:$0xff] 0.0
        %372 = vst [vmem:[#allocation2 + $0x38] sm:$0xff] 0.0
      $region44: #{intra_gcn_forward.6} parent=39 // pred_fallthru
        _
      %v373 = vld [vmem:[#allocation2] sm:$0xff]
      %v374 = vld [vmem:[#allocation2 + $0x8] sm:$0xff]
      %v375 = vld [vmem:[#allocation2 + $0x10] sm:$0xff]
      %v376 = vld [vmem:[#allocation2 + $0x18] sm:$0xff]
      %v377 = vld [vmem:[#allocation2 + $0x20] sm:$0xff]
      %v378 = vld [vmem:[#allocation2 + $0x28] sm:$0xff]
      %v379 = vld [vmem:[#allocation2 + $0x30] sm:$0xff]
      %v380 = vld [vmem:[#allocation2 + $0x38] sm:$0xff]
      %v381 = vld [vmem:[%s328] sm:$0xf]
      %v382 = vld [vmem:[%s328 + $0x4] sm:$0xf]
      %v383 = vld [vmem:[%s328 + $0x8] sm:$0xf]
      %v384 = vld [vmem:[%s328 + $0xc] sm:$0xf]
      %v385 = vld [vmem:[%s328 + $0x10] sm:$0xf]
      %v386 = vld [vmem:[%s328 + $0x14] sm:$0xf]
      %v387 = vld [vmem:[%s328 + $0x18] sm:$0xf]
      %v388 = vld [vmem:[%s328 + $0x1c] sm:$0xf]
      %v389 = vld [vmem:[%s334] sm:$0xf]
      %v390 = vld [vmem:[%s334 + $0x4] sm:$0xf]
      %v391 = vld [vmem:[%s334 + $0x8] sm:$0xf]
      %v392 = vld [vmem:[%s334 + $0xc] sm:$0xf]
      %v393 = vld [vmem:[%s334 + $0x10] sm:$0xf]
      %v394 = vld [vmem:[%s334 + $0x14] sm:$0xf]
      %v395 = vld [vmem:[%s334 + $0x18] sm:$0xf]
      %v396 = vld [vmem:[%s334 + $0x1c] sm:$0xf]
      %v397 = vld [vmem:[%s334 + $0x20] sm:$0xf]
      %v398 = vld [vmem:[%s334 + $0x24] sm:$0xf]
      %v399 = vld [vmem:[%s334 + $0x28] sm:$0xf]
      %v400 = vld [vmem:[%s334 + $0x2c] sm:$0xf]
      %v401 = vld [vmem:[%s334 + $0x30] sm:$0xf]
      %v402 = vld [vmem:[%s334 + $0x34] sm:$0xf]
      %v403 = vld [vmem:[%s334 + $0x38] sm:$0xf]
      %v404 = vld [vmem:[%s334 + $0x3c] sm:$0xf]
      %v413 = vunpack.c.l.b16 %v381
      %v414 = vunpack.c.l.b16 %v382
      %v415 = vunpack.c.l.b16 %v383
      %v416 = vunpack.c.l.b16 %v384
      %v417 = vunpack.c.l.b16 %v385
      %v418 = vunpack.c.l.b16 %v386
      %v419 = vunpack.c.l.b16 %v387
      %v420 = vunpack.c.l.b16 %v388
      %v421 = vpack.c.b16 %v414, %v413
      %v422 = vpack.c.b16 %v416, %v415
      %v423 = vpack.c.b16 %v418, %v417
      %v424 = vpack.c.b16 %v420, %v419
      %v445 = vunpack.c.l.b16 %v389
      %v446 = vunpack.c.l.b16 %v390
      %v447 = vunpack.c.l.b16 %v391
      %v448 = vunpack.c.l.b16 %v392
      %v449 = vunpack.c.l.b16 %v393
      %v450 = vunpack.c.l.b16 %v394
      %v451 = vunpack.c.l.b16 %v395
      %v452 = vunpack.c.l.b16 %v396
      %v453 = vunpack.c.l.b16 %v397
      %v454 = vunpack.c.l.b16 %v398
      %v455 = vunpack.c.l.b16 %v399
      %v456 = vunpack.c.l.b16 %v400
      %v457 = vunpack.c.l.b16 %v401
      %v458 = vunpack.c.l.b16 %v402
      %v459 = vunpack.c.l.b16 %v403
      %v460 = vunpack.c.l.b16 %v404
      %v461 = vpack.c.b16 %v446, %v445
      %v462 = vpack.c.b16 %v448, %v447
      %v463 = vpack.c.b16 %v450, %v449
      %v464 = vpack.c.b16 %v452, %v451
      %v465 = vpack.c.b16 %v454, %v453
      %v466 = vpack.c.b16 %v456, %v455
      %v467 = vpack.c.b16 %v458, %v457
      %v468 = vpack.c.b16 %v460, %v459
      %477 = vmatpush.bf16.msra.mxu0 %v468
      %478 = vmatpush.bf16.msra.mxu0 %v467
      %479 = vmatpush.bf16.msra.mxu0 %v466
      %480 = vmatpush.bf16.msra.mxu0 %v465
      %481 = vmatpush.bf16.msra.mxu0 %v464
      %482 = vmatpush.bf16.msra.mxu0 %v463
      %483 = vmatpush.bf16.msra.mxu0 %v462
      %484 = vmatpush.bf16.msra.mxu0 %v461
      %485 = vmatmul.bf16.gmra.mxu0 %v421
      %v486 = vpop.f32.mrf.mxu0
      %v487 = vadd.f32 0.0, %v486
      %v488 = vpop.f32.mrf.mxu0
      %v489 = vadd.f32 0.0, %v488
      %490 = vmatmul.bf16.gmra.mxu0 %v422
      %v491 = vpop.f32.mrf.mxu0
      %v492 = vadd.f32 0.0, %v491
      %v493 = vpop.f32.mrf.mxu0
      %v494 = vadd.f32 0.0, %v493
      %495 = vmatmul.bf16.gmra.mxu0 %v423
      %v496 = vpop.f32.mrf.mxu0
      %v497 = vadd.f32 0.0, %v496
      %v498 = vpop.f32.mrf.mxu0
      %v499 = vadd.f32 0.0, %v498
      %500 = vmatmul.bf16.gmra.mxu0 %v424
      %v501 = vpop.f32.mrf.mxu0
      %v502 = vadd.f32 0.0, %v501
      %v503 = vpop.f32.mrf.mxu0
      %v504 = vadd.f32 0.0, %v503
      %505 = vdwg.mxu0
      %v506 = vadd.f32 %v373, %v487
      %v507 = vadd.f32 %v374, %v489
      %v508 = vadd.f32 %v375, %v492
      %v509 = vadd.f32 %v376, %v494
      %v510 = vadd.f32 %v377, %v497
      %v511 = vadd.f32 %v378, %v499
      %v512 = vadd.f32 %v379, %v502
      %v513 = vadd.f32 %v380, %v504
      %514 = vst [vmem:[#allocation2] sm:$0xff] %v506
      %515 = vst [vmem:[#allocation2 + $0x8] sm:$0xff] %v507
      %516 = vst [vmem:[#allocation2 + $0x10] sm:$0xff] %v508
      %517 = vst [vmem:[#allocation2 + $0x18] sm:$0xff] %v509
      %518 = vst [vmem:[#allocation2 + $0x20] sm:$0xff] %v510
      %519 = vst [vmem:[#allocation2 + $0x28] sm:$0xff] %v511
      %520 = vst [vmem:[#allocation2 + $0x30] sm:$0xff] %v512
      %521 = vst [vmem:[#allocation2 + $0x38] sm:$0xff] %v513
      // Predicated region
      $region45: #{intra_gcn_forward.6} parent=39 // pred_check
        %p522 = pneg %p361
      $region46: #{intra_gcn_forward.6} parent=39 // pred_check_branch
        %524 = sbr.rel (%p522) target = $region48
      $region47: #{intra_gcn_forward.6} parent=39 // pred_region
        %v525 = vld [vmem:[%s347] sm:$0xff]
        %v526 = vld [vmem:[%s347 + $0x8] sm:$0xff]
        %v527 = vld [vmem:[%s347 + $0x10] sm:$0xff]
        %v528 = vld [vmem:[%s347 + $0x18] sm:$0xff]
        %v529 = vld [vmem:[%s347 + $0x20] sm:$0xff]
        %v530 = vld [vmem:[%s347 + $0x28] sm:$0xff]
        %v531 = vld [vmem:[%s347 + $0x30] sm:$0xff]
        %v532 = vld [vmem:[%s347 + $0x38] sm:$0xff]
        %v533 = vld [vmem:[#allocation2] sm:$0xff]
        %v534 = vld [vmem:[#allocation2 + $0x8] sm:$0xff]
        %v535 = vld [vmem:[#allocation2 + $0x10] sm:$0xff]
        %v536 = vld [vmem:[#allocation2 + $0x18] sm:$0xff]
        %v537 = vld [vmem:[#allocation2 + $0x20] sm:$0xff]
        %v538 = vld [vmem:[#allocation2 + $0x28] sm:$0xff]
        %v539 = vld [vmem:[#allocation2 + $0x30] sm:$0xff]
        %v540 = vld [vmem:[#allocation2 + $0x38] sm:$0xff]
        %v541 = vld [vmem:[%s341] sm:$0xff]
        %v542 = vld [vmem:[%s341 + $0x10] sm:$0xff]
        %v543 = vld [vmem:[%s341 + $0x20] sm:$0xff]
        %v544 = vld [vmem:[%s341 + $0x30] sm:$0xff]
        %v545 = vld [vmem:[%s341 + $0x40] sm:$0xff]
        %v546 = vld [vmem:[%s341 + $0x50] sm:$0xff]
        %v547 = vld [vmem:[%s341 + $0x60] sm:$0xff]
        %v548 = vld [vmem:[%s341 + $0x70] sm:$0xff]
        %550 = vset.pattern.permute.xlu0 0
        %551 = vperm.xlu0 %550, %v525
        %v552 = vpop.permute.xlu0 %551
        %555 = vset.pattern.permute.xlu0 0
        %556 = vperm.xlu0 %555, %v526
        %v557 = vpop.permute.xlu0 %556
        %560 = vset.pattern.permute.xlu0 0
        %561 = vperm.xlu0 %560, %v527
        %v562 = vpop.permute.xlu0 %561
        %565 = vset.pattern.permute.xlu0 0
        %566 = vperm.xlu0 %565, %v528
        %v567 = vpop.permute.xlu0 %566
        %570 = vset.pattern.permute.xlu0 0
        %571 = vperm.xlu0 %570, %v529
        %v572 = vpop.permute.xlu0 %571
        %575 = vset.pattern.permute.xlu0 0
        %576 = vperm.xlu0 %575, %v530
        %v577 = vpop.permute.xlu0 %576
        %580 = vset.pattern.permute.xlu0 0
        %581 = vperm.xlu0 %580, %v531
        %v582 = vpop.permute.xlu0 %581
        %585 = vset.pattern.permute.xlu0 0
        %586 = vperm.xlu0 %585, %v532
        %v587 = vpop.permute.xlu0 %586
        %v589 = vmul.f32 %v552, %v541
        %v590 = vmul.f32 %v557, %v542
        %v591 = vmul.f32 %v562, %v543
        %v592 = vmul.f32 %v567, %v544
        %v593 = vmul.f32 %v572, %v545
        %v594 = vmul.f32 %v577, %v546
        %v595 = vmul.f32 %v582, %v547
        %v596 = vmul.f32 %v587, %v548
        %v597 = vsub.f32 %v533, %v589
        %v598 = vsub.f32 %v534, %v590
        %v599 = vsub.f32 %v535, %v591
        %v600 = vsub.f32 %v536, %v592
        %v601 = vsub.f32 %v537, %v593
        %v602 = vsub.f32 %v538, %v594
        %v603 = vsub.f32 %v539, %v595
        %v604 = vsub.f32 %v540, %v596
        %v605 = vld [vmem:[%s341 + $0x8] sm:$0xff]
        %v606 = vld [vmem:[%s341 + $0x18] sm:$0xff]
        %v607 = vld [vmem:[%s341 + $0x28] sm:$0xff]
        %v608 = vld [vmem:[%s341 + $0x38] sm:$0xff]
        %v609 = vld [vmem:[%s341 + $0x48] sm:$0xff]
        %v610 = vld [vmem:[%s341 + $0x58] sm:$0xff]
        %v611 = vld [vmem:[%s341 + $0x68] sm:$0xff]
        %v612 = vld [vmem:[%s341 + $0x78] sm:$0xff]
        %v613 = vadd.f32 %v597, %v605
        %v614 = vadd.f32 %v598, %v606
        %v615 = vadd.f32 %v599, %v607
        %v616 = vadd.f32 %v600, %v608
        %v617 = vadd.f32 %v601, %v609
        %v618 = vadd.f32 %v602, %v610
        %v619 = vadd.f32 %v603, %v611
        %v620 = vadd.f32 %v604, %v612
        %v621 = vmax.f32 %v613, 0.0
        %v622 = vmax.f32 %v614, 0.0
        %v623 = vmax.f32 %v615, 0.0
        %v624 = vmax.f32 %v616, 0.0
        %v625 = vmax.f32 %v617, 0.0
        %v626 = vmax.f32 %v618, 0.0
        %v627 = vmax.f32 %v619, 0.0
        %v628 = vmax.f32 %v620, 0.0
        %v629 = vld [vmem:[%s4] sm:$0xff]
        %v630 = vld [vmem:[%s4 + $0x8] sm:$0xff]
        %v631 = vld [vmem:[%s4 + $0x10] sm:$0xff]
        %v632 = vld [vmem:[%s4 + $0x18] sm:$0xff]
        %v633 = vld [vmem:[%s4 + $0x20] sm:$0xff]
        %v634 = vld [vmem:[%s4 + $0x28] sm:$0xff]
        %v635 = vld [vmem:[%s4 + $0x30] sm:$0xff]
        %v636 = vld [vmem:[%s4 + $0x38] sm:$0xff]
        %v637 = vld [vmem:[%s4 + $0x40] sm:$0xff]
        %v638 = vld [vmem:[%s4 + $0x48] sm:$0xff]
        %v639 = vld [vmem:[%s4 + $0x50] sm:$0xff]
        %v640 = vld [vmem:[%s4 + $0x58] sm:$0xff]
        %v641 = vld [vmem:[%s4 + $0x60] sm:$0xff]
        %v642 = vld [vmem:[%s4 + $0x68] sm:$0xff]
        %v643 = vld [vmem:[%s4 + $0x70] sm:$0xff]
        %v644 = vld [vmem:[%s4 + $0x78] sm:$0xff]
        %645 = vmatpush.msra.mxu0 %v644
        %646 = vmatpush.msra.mxu0 %v643
        %647 = vmatpush.msra.mxu0 %v642
        %648 = vmatpush.msra.mxu0 %v641
        %649 = vmatpush.msra.mxu0 %v640
        %650 = vmatpush.msra.mxu0 %v639
        %651 = vmatpush.msra.mxu0 %v638
        %652 = vmatpush.msra.mxu0 %v637
        %653 = vmatpush.msra.mxu0 %v636
        %654 = vmatpush.msra.mxu0 %v635
        %655 = vmatpush.msra.mxu0 %v634
        %656 = vmatpush.msra.mxu0 %v633
        %657 = vmatpush.msra.mxu0 %v632
        %658 = vmatpush.msra.mxu0 %v631
        %659 = vmatpush.msra.mxu0 %v630
        %660 = vmatpush.msra.mxu0 %v629
        %661 = vmatmul.f32.gmra.mxu0 %v621
        %v662 = vpop.f32.mrf.mxu0
        %v663 = vadd.f32 0.0, %v662
        %664 = vmatmul.f32.gmra.mxu0 %v622
        %v665 = vpop.f32.mrf.mxu0
        %v666 = vadd.f32 0.0, %v665
        %667 = vmatmul.f32.gmra.mxu0 %v623
        %v668 = vpop.f32.mrf.mxu0
        %v669 = vadd.f32 0.0, %v668
        %670 = vmatmul.f32.gmra.mxu0 %v624
        %v671 = vpop.f32.mrf.mxu0
        %v672 = vadd.f32 0.0, %v671
        %673 = vmatmul.f32.gmra.mxu0 %v625
        %v674 = vpop.f32.mrf.mxu0
        %v675 = vadd.f32 0.0, %v674
        %676 = vmatmul.f32.gmra.mxu0 %v626
        %v677 = vpop.f32.mrf.mxu0
        %v678 = vadd.f32 0.0, %v677
        %679 = vmatmul.f32.gmra.mxu0 %v627
        %v680 = vpop.f32.mrf.mxu0
        %v681 = vadd.f32 0.0, %v680
        %682 = vmatmul.f32.gmra.mxu0 %v628
        %v683 = vpop.f32.mrf.mxu0
        %v684 = vadd.f32 0.0, %v683
        %685 = vdwg.mxu0
        %v686 = vpack.c.bf16 %v663, %v663
        %v687 = vpack.c.bf16 %v666, %v666
        %v688 = vpack.c.bf16 %v669, %v669
        %v689 = vpack.c.bf16 %v672, %v672
        %v690 = vpack.c.bf16 %v675, %v675
        %v691 = vpack.c.bf16 %v678, %v678
        %v692 = vpack.c.bf16 %v681, %v681
        %v693 = vpack.c.bf16 %v684, %v684
        %694 = vst [vmem:[%s353] sm:$0xf] %v686
        %695 = vst [vmem:[%s353 + $0x4] sm:$0xf] %v687
        %696 = vst [vmem:[%s353 + $0x8] sm:$0xf] %v688
        %697 = vst [vmem:[%s353 + $0xc] sm:$0xf] %v689
        %698 = vst [vmem:[%s353 + $0x10] sm:$0xf] %v690
        %699 = vst [vmem:[%s353 + $0x14] sm:$0xf] %v691
        %700 = vst [vmem:[%s353 + $0x18] sm:$0xf] %v692
        %701 = vst [vmem:[%s353 + $0x1c] sm:$0xf] %v693
        %v702 = vld [vmem:[%s4 + $0x80] sm:$0xff]
        %v703 = vld [vmem:[%s4 + $0x88] sm:$0xff]
        %v704 = vld [vmem:[%s4 + $0x90] sm:$0xff]
        %v705 = vld [vmem:[%s4 + $0x98] sm:$0xff]
        %v706 = vld [vmem:[%s4 + $0xa0] sm:$0xff]
        %v707 = vld [vmem:[%s4 + $0xa8] sm:$0xff]
        %v708 = vld [vmem:[%s4 + $0xb0] sm:$0xff]
        %v709 = vld [vmem:[%s4 + $0xb8] sm:$0xff]
        %v710 = vld [vmem:[%s4 + $0xc0] sm:$0xff]
        %v711 = vld [vmem:[%s4 + $0xc8] sm:$0xff]
        %v712 = vld [vmem:[%s4 + $0xd0] sm:$0xff]
        %v713 = vld [vmem:[%s4 + $0xd8] sm:$0xff]
        %v714 = vld [vmem:[%s4 + $0xe0] sm:$0xff]
        %v715 = vld [vmem:[%s4 + $0xe8] sm:$0xff]
        %v716 = vld [vmem:[%s4 + $0xf0] sm:$0xff]
        %v717 = vld [vmem:[%s4 + $0xf8] sm:$0xff]
        %v718 = vld [vmem:[%s4 + $0x100] sm:$0x1]
        %v719 = vperm.slane %v718, 0
        %720 = vmatpush.msra.mxu0 %v717
        %721 = vmatpush.msra.mxu0 %v716
        %722 = vmatpush.msra.mxu0 %v715
        %723 = vmatpush.msra.mxu0 %v714
        %724 = vmatpush.msra.mxu0 %v713
        %725 = vmatpush.msra.mxu0 %v712
        %726 = vmatpush.msra.mxu0 %v711
        %727 = vmatpush.msra.mxu0 %v710
        %728 = vmatpush.msra.mxu0 %v709
        %729 = vmatpush.msra.mxu0 %v708
        %730 = vmatpush.msra.mxu0 %v707
        %731 = vmatpush.msra.mxu0 %v706
        %732 = vmatpush.msra.mxu0 %v705
        %733 = vmatpush.msra.mxu0 %v704
        %734 = vmatpush.msra.mxu0 %v703
        %735 = vmatpush.msra.mxu0 %v702
        %736 = vmatmul.f32.gmra.mxu0 %v621
        %v737 = vpop.f32.mrf.mxu0
        %v738 = vadd.f32 %v719, %v737
        %739 = vmatmul.f32.gmra.mxu0 %v622
        %v740 = vpop.f32.mrf.mxu0
        %v741 = vadd.f32 %v719, %v740
        %742 = vmatmul.f32.gmra.mxu0 %v623
        %v743 = vpop.f32.mrf.mxu0
        %v744 = vadd.f32 %v719, %v743
        %745 = vmatmul.f32.gmra.mxu0 %v624
        %v746 = vpop.f32.mrf.mxu0
        %v747 = vadd.f32 %v719, %v746
        %748 = vmatmul.f32.gmra.mxu0 %v625
        %v749 = vpop.f32.mrf.mxu0
        %v750 = vadd.f32 %v719, %v749
        %751 = vmatmul.f32.gmra.mxu0 %v626
        %v752 = vpop.f32.mrf.mxu0
        %v753 = vadd.f32 %v719, %v752
        %754 = vmatmul.f32.gmra.mxu0 %v627
        %v755 = vpop.f32.mrf.mxu0
        %v756 = vadd.f32 %v719, %v755
        %757 = vmatmul.f32.gmra.mxu0 %v628
        %v758 = vpop.f32.mrf.mxu0
        %v759 = vadd.f32 %v719, %v758
        %760 = vdwg.mxu0
        %761 = vst [vmem:[%s359] sm:$0xff] %v738
        %762 = vst [vmem:[%s359 + $0x8] sm:$0xff] %v741
        %763 = vst [vmem:[%s359 + $0x10] sm:$0xff] %v744
        %764 = vst [vmem:[%s359 + $0x18] sm:$0xff] %v747
        %765 = vst [vmem:[%s359 + $0x20] sm:$0xff] %v750
        %766 = vst [vmem:[%s359 + $0x28] sm:$0xff] %v753
        %767 = vst [vmem:[%s359 + $0x30] sm:$0xff] %v756
        %768 = vst [vmem:[%s359 + $0x38] sm:$0xff] %v759
      $region48: #{intra_gcn_forward.6} parent=39 // pred_fallthru
        _
      %s769 = smul.u32 8, %s22
      %p770 = scmp.lt.s32.totalorder %s769, 15
      %s771 = scalar_select %p770, %s769, 15
      %s772 = smul.addr %s771, 4
      %s773 = scalar_lea.vmem %s5, %s772
      %s774 = smul.u32 8, %s22
      %p775 = scmp.lt.s32.totalorder %s774, 15
      %s776 = scalar_select %p775, %s774, 15
      %s777 = smul.addr %s776, 8
      %s778 = scalar_lea.vmem %s6, %s777
      // Predicated region
      $region49: #{intra_gcn_forward.6} parent=39 // pred_check
        %p779 = pneg %p175
      $region50: #{intra_gcn_forward.6} parent=39 // pred_check_branch
        %781 = sbr.rel (%p779) target = $region52
      $region51: #{intra_gcn_forward.6} parent=39 // pred_region
        %s782 = smul.u32 8, %s22
      $region52: #{intra_gcn_forward.6} parent=39 // pred_fallthru
        _
      // Predicated region
      $region53: #{intra_gcn_forward.6} parent=39 // pred_check
        %p783 = pneg %p201
      $region54: #{intra_gcn_forward.6} parent=39 // pred_check_branch
        %785 = sbr.rel (%p783) target = $region56
      $region55: #{intra_gcn_forward.6} parent=39 // pred_region
        %s786 = smul.u32 8, %s22
      $region56: #{intra_gcn_forward.6} parent=39 // pred_fallthru
        _
    $region40: #{intra_gcn_forward.6} parent=5 // pred_fallthru
      _
    %p787 = scmp.le.s32.totalorder 2, %s13
    // Predicated region
    $region57: #{intra_gcn_forward.6} parent=5 // pred_check
      %p788 = pneg %p787
    $region58: #{intra_gcn_forward.6} parent=5 // pred_check_branch
      %790 = sbr.rel (%p788) target = $region60
    $region59: #{intra_gcn_forward.6} parent=5 // pred_region
      %s791 = ssub.s32 %s13, 2
      // Predicated region
      $region61: #{intra_gcn_forward.6} parent=59 // pred_check
        %p792 = pneg %p181
      $region62: #{intra_gcn_forward.6} parent=59 // pred_check_branch
        %794 = sbr.rel (%p792) target = $region64
      $region63: #{intra_gcn_forward.6} parent=59 // pred_region
        %s795 = smul.u32 8, %s24
        %p796 = scmp.lt.s32.totalorder %s795, 15
        %s797 = scalar_select %p796, %s795, 15
        %s798 = smul.addr %s797, 4
        %s799 = scalar_lea.vmem %s5, %s798
      $region64: #{intra_gcn_forward.6} parent=59 // pred_fallthru
        _
      // Predicated region
      $region65: #{intra_gcn_forward.6} parent=59 // pred_check
        %p800 = pneg %p207
      $region66: #{intra_gcn_forward.6} parent=59 // pred_check_branch
        %802 = sbr.rel (%p800) target = $region68
      $region67: #{intra_gcn_forward.6} parent=59 // pred_region
        %s803 = smul.u32 8, %s24
        %p804 = scmp.lt.s32.totalorder %s803, 15
        %s805 = scalar_select %p804, %s803, 15
        %s806 = smul.addr %s805, 8
        %s807 = scalar_lea.vmem %s6, %s806
      $region68: #{intra_gcn_forward.6} parent=59 // pred_fallthru
        _
    $region60: #{intra_gcn_forward.6} parent=5 // pred_fallthru
      _
  $region6: #{intra_gcn_forward.6} parent=0 // loop_footer
    %s17 = sadd.s32 1, %s13
  $region7: #{intra_gcn_forward.6} parent=0 // loop_footer_branch
    %12 = sbr.rel target = $region3
  $region8: #{intra_gcn_forward.6} parent=0 // loop_exit
    _

// kernel: intra_gcn_forward.7
$region0: #{intra_gcn_forward.7}
  #allocation0 [shape = 'u32[]', space=smem, size = 0x4, offset = 0x4, fixed_abs, tag = 'smem constant byte address 0x4 - core index']
  #allocation1 [shape = 'u32[72,128]{1,0:T(1,128)}', space=vmem, size = 0x9000, scoped, tag = 'internal scratch']
  #allocation2 [shape = 'f32[64,128]{1,0:T(8,128)}', space=vmem, size = 0x8000, scoped, tag = 'scratch operand']
  %s0 = inlined_call_operand.vmem [shape: bf16[128,128], index: 0, kind: input, shape index: {}]
  %s1 = inlined_call_operand.vmem [shape: bf16[128,128], index: 1, kind: input, shape index: {}]
  %s2 = inlined_call_operand.vmem [shape: f32[128,128], index: 2, kind: input, shape index: {}]
  %s3 = inlined_call_operand.vmem [shape: f32[128,128], index: 3, kind: input, shape index: {}]
  %s4 = inlined_call_operand.vmem [shape: f32[128,128], index: 4, kind: input, shape index: {}]
  %s5 = inlined_call_operand.vmem [shape: bf16[128,128], index: 5, kind: output, shape index: {}]
  %s6 = sld [smem:[#allocation0]]
  $region61: #{intra_gcn_forward.7} parent=0
    _
  %s8 = ssub.s32 1, %s6
  %s9 = scalar_select 0, %s8, %s6
  loop: start=0, step=1, limit=4
  $region2: #{intra_gcn_forward.7} parent=0 // loop_pre_header
    _
  $region3: #{intra_gcn_forward.7} parent=0 // loop_header
    %s11 = sphi 0, %s15
    %p12 = scmp.ge.s32.totalorder %s11, 4
    %s18 = sphi 0, %s30
    %s19 = sphi 0, %s26
    %s20 = sphi 0, %s18
    %s21 = sphi 0, %s19
    %s22 = sphi 0, %s20
    %s23 = sphi 0, %s21
    %s35 = sphi 0, %s37
    %s38 = sphi 0, %s35
    %s39 = sphi 0, %s38
    %s55 = sphi 0, %s39
    %s61 = sphi 0, %s63
    %s64 = sphi 0, %s61
    %s65 = sphi 0, %s64
    %s81 = sphi 0, %s65
    %s87 = sphi 0, %s89
    %s90 = sphi 0, %s87
    %s91 = sphi 0, %s90
    %s107 = sphi 0, %s91
    %s113 = sphi 0, %s115
    %s116 = sphi 0, %s113
    %s117 = sphi 0, %s116
    %s133 = sphi 0, %s117
    %s137 = sphi 0, %s137
    %s139 = sphi 0, %s137
    %s140 = sphi 0, %s139
    %s154 = sphi 0, %s140
    %s160 = sphi 0, %s162
    %s163 = sphi 0, %s160
    %s164 = sphi 0, %s163
    %s180 = sphi 0, %s164
  $region4: #{intra_gcn_forward.7} parent=0 // loop_header_branch
    %14 = sbr.rel (%p12) target = $region8
  $region5: #{intra_gcn_forward.7} parent=0 // loop_body
    %s16 = ssub.s32 %s11, 1
    %s17 = ssub.s32 %s11, 2
    %s24 = sadd.s32 1, %s19
    %p25 = scmp.ge.s32.totalorder %s24, 1
    %s26 = scalar_select %p25, 0, %s24
    %s27 = sadd.s32 1, %s18
    %s28 = scalar_select %p25, %s27, %s18
    %p29 = scmp.ge.s32.totalorder %s28, 2
    %s30 = scalar_select %p29, 0, %s28
    %s31 = ssub.s32 %s18, %s30
    %s32 = ssub.s32 %s19, %s26
    %s33 = sor.u32 %s31, %s32
    %p34 = scmp.eq.s32.totalorder %s33, 0
    %s36 = sadd.s32 %s35, 1
    %s37 = scalar_select %p34, %s35, %s36
    %p40 = pneg %p34
    %p41 = scmp.eq.s32.totalorder %s11, 1
    %p42 = por %p40, %p41
    %p43 = scmp.ne.s32.totalorder %s35, %s38
    %p44 = scmp.eq.s32.totalorder %s11, 0
    %p45 = por %p43, %p44
    %p46 = scmp.ne.s32.totalorder %s35, %s38
    %p47 = scmp.eq.s32.totalorder %s16, 1
    %p48 = por %p46, %p47
    %p49 = scmp.ne.s32.totalorder %s38, %s39
    %p50 = scmp.eq.s32.totalorder %s16, 0
    %p51 = por %p49, %p50
    %p52 = scmp.ne.s32.totalorder %s38, %s39
    %p53 = scmp.eq.s32.totalorder %s17, 1
    %p54 = por %p52, %p53
    %p56 = scmp.ne.s32.totalorder %s39, %s55
    %p57 = scmp.eq.s32.totalorder %s17, 0
    %p58 = por %p56, %p57
    %s59 = ssub.s32 %s19, %s26
    %p60 = scmp.eq.s32.totalorder %s59, 0
    %s62 = sadd.s32 %s61, 1
    %s63 = scalar_select %p60, %s61, %s62
    %p66 = pneg %p60
    %p67 = scmp.eq.s32.totalorder %s11, 1
    %p68 = por %p66, %p67
    %p69 = scmp.ne.s32.totalorder %s61, %s64
    %p70 = scmp.eq.s32.totalorder %s11, 0
    %p71 = por %p69, %p70
    %p72 = scmp.ne.s32.totalorder %s61, %s64
    %p73 = scmp.eq.s32.totalorder %s16, 1
    %p74 = por %p72, %p73
    %p75 = scmp.ne.s32.totalorder %s64, %s65
    %p76 = scmp.eq.s32.totalorder %s16, 0
    %p77 = por %p75, %p76
    %p78 = scmp.ne.s32.totalorder %s64, %s65
    %p79 = scmp.eq.s32.totalorder %s17, 1
    %p80 = por %p78, %p79
    %p82 = scmp.ne.s32.totalorder %s65, %s81
    %p83 = scmp.eq.s32.totalorder %s17, 0
    %p84 = por %p82, %p83
    %s85 = ssub.s32 %s18, %s30
    %p86 = scmp.eq.s32.totalorder %s85, 0
    %s88 = sadd.s32 %s87, 1
    %s89 = scalar_select %p86, %s87, %s88
    %p92 = pneg %p86
    %p93 = scmp.eq.s32.totalorder %s11, 1
    %p94 = por %p92, %p93
    %p95 = scmp.ne.s32.totalorder %s87, %s90
    %p96 = scmp.eq.s32.totalorder %s11, 0
    %p97 = por %p95, %p96
    %p98 = scmp.ne.s32.totalorder %s87, %s90
    %p99 = scmp.eq.s32.totalorder %s16, 1
    %p100 = por %p98, %p99
    %p101 = scmp.ne.s32.totalorder %s90, %s91
    %p102 = scmp.eq.s32.totalorder %s16, 0
    %p103 = por %p101, %p102
    %p104 = scmp.ne.s32.totalorder %s90, %s91
    %p105 = scmp.eq.s32.totalorder %s17, 1
    %p106 = por %p104, %p105
    %p108 = scmp.ne.s32.totalorder %s91, %s107
    %p109 = scmp.eq.s32.totalorder %s17, 0
    %p110 = por %p108, %p109
    %s111 = ssub.s32 %s18, %s30
    %p112 = scmp.eq.s32.totalorder %s111, 0
    %s114 = sadd.s32 %s113, 1
    %s115 = scalar_select %p112, %s113, %s114
    %p118 = pneg %p112
    %p119 = scmp.eq.s32.totalorder %s11, 1
    %p120 = por %p118, %p119
    %p121 = scmp.ne.s32.totalorder %s113, %s116
    %p122 = scmp.eq.s32.totalorder %s11, 0
    %p123 = por %p121, %p122
    %p124 = scmp.ne.s32.totalorder %s113, %s116
    %p125 = scmp.eq.s32.totalorder %s16, 1
    %p126 = por %p124, %p125
    %p127 = scmp.ne.s32.totalorder %s116, %s117
    %p128 = scmp.eq.s32.totalorder %s16, 0
    %p129 = por %p127, %p128
    %p130 = scmp.ne.s32.totalorder %s116, %s117
    %p131 = scmp.eq.s32.totalorder %s17, 1
    %p132 = por %p130, %p131
    %p134 = scmp.ne.s32.totalorder %s117, %s133
    %p135 = scmp.eq.s32.totalorder %s17, 0
    %p136 = por %p134, %p135
    %s138 = sadd.s32 %s137, 1
    %p141 = scmp.eq.s32.totalorder %s11, 1
    %p142 = scmp.ne.s32.totalorder %s137, %s139
    %p143 = scmp.eq.s32.totalorder %s11, 0
    %p144 = por %p142, %p143
    %p145 = scmp.ne.s32.totalorder %s137, %s139
    %p146 = scmp.eq.s32.totalorder %s16, 1
    %p147 = por %p145, %p146
    %p148 = scmp.ne.s32.totalorder %s139, %s140
    %p149 = scmp.eq.s32.totalorder %s16, 0
    %p150 = por %p148, %p149
    %p151 = scmp.ne.s32.totalorder %s139, %s140
    %p152 = scmp.eq.s32.totalorder %s17, 1
    %p153 = por %p151, %p152
    %p155 = scmp.ne.s32.totalorder %s140, %s154
    %p156 = scmp.eq.s32.totalorder %s17, 0
    %p157 = por %p155, %p156
    %s158 = ssub.s32 %s18, %s30
    %p159 = scmp.eq.s32.totalorder %s158, 0
    %s161 = sadd.s32 %s160, 1
    %s162 = scalar_select %p159, %s160, %s161
    %p165 = pneg %p159
    %p166 = scmp.eq.s32.totalorder %s11, 1
    %p167 = por %p165, %p166
    %p168 = scmp.ne.s32.totalorder %s160, %s163
    %p169 = scmp.eq.s32.totalorder %s11, 0
    %p170 = por %p168, %p169
    %p171 = scmp.ne.s32.totalorder %s160, %s163
    %p172 = scmp.eq.s32.totalorder %s16, 1
    %p173 = por %p171, %p172
    %p174 = scmp.ne.s32.totalorder %s163, %s164
    %p175 = scmp.eq.s32.totalorder %s16, 0
    %p176 = por %p174, %p175
    %p177 = scmp.ne.s32.totalorder %s163, %s164
    %p178 = scmp.eq.s32.totalorder %s17, 1
    %p179 = por %p177, %p178
    %p181 = scmp.ne.s32.totalorder %s164, %s180
    %p182 = scmp.eq.s32.totalorder %s17, 0
    %p183 = por %p181, %p182
    %p184 = scmp.le.s32.totalorder 1, %s11
    %p185 = scmp.lt.s32.totalorder %s11, 3
    %p186 = pnand %p184, %p185
    %p187 = pneg %p186
    // Predicated region
    $region9: #{intra_gcn_forward.7} parent=5 // pred_check
      _
    $region10: #{intra_gcn_forward.7} parent=5 // pred_check_branch
      %189 = sbr.rel (%p186) target = $region12
    $region11: #{intra_gcn_forward.7} parent=5 // pred_region
      %s190 = ssub.s32 %s11, 1
      // Predicated region
      $region13: #{intra_gcn_forward.7} parent=11 // pred_check
        %p191 = pneg %p77
      $region14: #{intra_gcn_forward.7} parent=11 // pred_check_branch
        %193 = sbr.rel (%p191) target = $region16
      $region15: #{intra_gcn_forward.7} parent=11 // pred_region
        %s194 = smul.u32 16, %s21
        %p195 = scmp.lt.s32.totalorder %s194, 15
        %s196 = scalar_select %p195, %s194, 15
        %s197 = smul.addr %s196, 4
        %s198 = scalar_lea.vmem %s1, %s197
        %s199 = smul.u32 16, %s21
      $region16: #{intra_gcn_forward.7} parent=11 // pred_fallthru
        _
      // Predicated region
      $region17: #{intra_gcn_forward.7} parent=11 // pred_check
        %p200 = pneg %p150
      $region18: #{intra_gcn_forward.7} parent=11 // pred_check_branch
        %202 = sbr.rel (%p200) target = $region20
      $region19: #{intra_gcn_forward.7} parent=11 // pred_region
        _
      $region20: #{intra_gcn_forward.7} parent=11 // pred_fallthru
        _
    $region12: #{intra_gcn_forward.7} parent=5 // pred_fallthru
      _
    %p203 = scmp.lt.s32.totalorder %s11, 2
    // Predicated region
    $region21: #{intra_gcn_forward.7} parent=5 // pred_check
      %p204 = pneg %p203
    $region22: #{intra_gcn_forward.7} parent=5 // pred_check_branch
      %206 = sbr.rel (%p204) target = $region24
    $region23: #{intra_gcn_forward.7} parent=5 // pred_region
      // Predicated region
      $region25: #{intra_gcn_forward.7} parent=23 // pred_check
        %p207 = pneg %p45
      $region26: #{intra_gcn_forward.7} parent=23 // pred_check_branch
        %209 = sbr.rel (%p207) target = $region28
      $region27: #{intra_gcn_forward.7} parent=23 // pred_region
        %s210 = smul.u32 8, %s18
        %p211 = scmp.lt.s32.totalorder %s210, 15
        %s212 = scalar_select %p211, %s210, 15
        %p213 = scmp.lt.s32.totalorder %s19, 0
        %s214 = scalar_select %p213, %s19, 0
        %s215 = sadd.s32 %s214, %s212
        %s216 = smul.addr %s215, 4
        %s217 = scalar_lea.vmem %s0, %s216
        %s218 = smul.u32 8, %s18
      $region28: #{intra_gcn_forward.7} parent=23 // pred_fallthru
        _
      // Predicated region
      $region29: #{intra_gcn_forward.7} parent=23 // pred_check
        %p219 = pneg %p97
      $region30: #{intra_gcn_forward.7} parent=23 // pred_check_branch
        %221 = sbr.rel (%p219) target = $region32
      $region31: #{intra_gcn_forward.7} parent=23 // pred_region
        %s222 = smul.u32 8, %s18
        %p223 = scmp.lt.s32.totalorder %s222, 15
        %s224 = scalar_select %p223, %s222, 15
        %s225 = smul.addr %s224, 8
        %s226 = scalar_lea.vmem %s2, %s225
        %s227 = smul.u32 8, %s18
      $region32: #{intra_gcn_forward.7} parent=23 // pred_fallthru
        _
      // Predicated region
      $region33: #{intra_gcn_forward.7} parent=23 // pred_check
        %p228 = pneg %p123
      $region34: #{intra_gcn_forward.7} parent=23 // pred_check_branch
        %230 = sbr.rel (%p228) target = $region36
      $region35: #{intra_gcn_forward.7} parent=23 // pred_region
        %s231 = smul.u32 8, %s18
        %p232 = scmp.lt.s32.totalorder %s231, 15
        %s233 = scalar_select %p232, %s231, 15
        %s234 = smul.addr %s233, 8
        %s235 = scalar_lea.vmem %s3, %s234
        %s236 = smul.u32 8, %s18
      $region36: #{intra_gcn_forward.7} parent=23 // pred_fallthru
        _
    $region24: #{intra_gcn_forward.7} parent=5 // pred_fallthru
      _
    %p237 = scmp.le.s32.totalorder 1, %s11
    %p238 = scmp.lt.s32.totalorder %s11, 3
    %p239 = pnand %p237, %p238
    %p240 = pneg %p239
    // Predicated region
    $region37: #{intra_gcn_forward.7} parent=5 // pred_check
      _
    $region38: #{intra_gcn_forward.7} parent=5 // pred_check_branch
      %242 = sbr.rel (%p239) target = $region40
    $region39: #{intra_gcn_forward.7} parent=5 // pred_region
      %s243 = ssub.s32 %s11, 1
      %s244 = smul.u32 8, %s20
      %p245 = scmp.lt.s32.totalorder %s244, 15
      %s246 = scalar_select %p245, %s244, 15
      %p247 = scmp.lt.s32.totalorder %s21, 0
      %s248 = scalar_select %p247, %s21, 0
      %s249 = sadd.s32 %s248, %s246
      %s250 = smul.addr %s249, 4
      %s251 = scalar_lea.vmem %s0, %s250
      %p252 = pneg %p51
      %p253 = pneg %p48
      %s254 = smul.u32 16, %s21
      %p255 = scmp.lt.s32.totalorder %s254, 15
      %s256 = scalar_select %p255, %s254, 15
      %s257 = smul.addr %s256, 4
      %s258 = scalar_lea.vmem %s1, %s257
      %p259 = pneg %p77
      %p260 = pneg %p74
      %s261 = smul.u32 8, %s20
      %p262 = scmp.lt.s32.totalorder %s261, 15
      %s263 = scalar_select %p262, %s261, 15
      %s264 = smul.addr %s263, 8
      %s265 = scalar_lea.vmem %s2, %s264
      %p266 = pneg %p103
      %p267 = pneg %p100
      %s268 = smul.u32 8, %s20
      %p269 = scmp.lt.s32.totalorder %s268, 15
      %s270 = scalar_select %p269, %s268, 15
      %s271 = smul.addr %s270, 8
      %s272 = scalar_lea.vmem %s3, %s271
      %p273 = pneg %p129
      %p274 = pneg %p126
      %p275 = pneg %p150
      %p276 = pneg %p147
      %p277 = pneg %p176
      %p278 = pneg %p173
      %s279 = smul.u32 8, %s20
      %p280 = scmp.lt.s32.totalorder %s279, 15
      %s281 = scalar_select %p280, %s279, 15
      %s282 = smul.addr %s281, 4
      %s283 = scalar_lea.vmem %s5, %s282
      %s284 = smul.u32 8, %s20
      %p285 = scmp.lt.s32.totalorder %s284, 15
      %s286 = scalar_select %p285, %s284, 15
      %p287 = scmp.lt.s32.totalorder %s21, 0
      %s288 = scalar_select %p287, %s21, 0
      %s289 = sadd.s32 %s288, %s286
      %s290 = smul.addr %s289, 4
      %s291 = scalar_lea.vmem %s0, %s290
      %s292 = smul.u32 8, %s20
      %s293 = smul.u32 16, %s21
      %p294 = scmp.lt.s32.totalorder %s293, 15
      %s295 = scalar_select %p294, %s293, 15
      %s296 = smul.addr %s295, 4
      %s297 = scalar_lea.vmem %s1, %s296
      %s298 = smul.u32 16, %s21
      %s299 = smul.u32 8, %s20
      %p300 = scmp.lt.s32.totalorder %s299, 15
      %s301 = scalar_select %p300, %s299, 15
      %s302 = smul.addr %s301, 8
      %s303 = scalar_lea.vmem %s2, %s302
      %s304 = smul.u32 8, %s20
      %s305 = smul.u32 8, %s20
      %p306 = scmp.lt.s32.totalorder %s305, 15
      %s307 = scalar_select %p306, %s305, 15
      %s308 = smul.addr %s307, 8
      %s309 = scalar_lea.vmem %s3, %s308
      %s310 = smul.u32 8, %s20
      %s311 = smul.u32 8, %s20
      %p312 = scmp.lt.s32.totalorder %s311, 15
      %s313 = scalar_select %p312, %s311, 15
      %s314 = smul.addr %s313, 4
      %s315 = scalar_lea.vmem %s5, %s314
      %s316 = smul.u32 8, %s20
      %p317 = scmp.eq.s32.totalorder %s21, 0
      // Predicated region
      $region41: #{intra_gcn_forward.7} parent=39 // pred_check
        %p318 = pneg %p317
      $region42: #{intra_gcn_forward.7} parent=39 // pred_check_branch
        %320 = sbr.rel (%p318) target = $region44
      $region43: #{intra_gcn_forward.7} parent=39 // pred_region
        %321 = vst [vmem:[#allocation2] sm:$0xff] 0.0
        %322 = vst [vmem:[#allocation2 + $0x8] sm:$0xff] 0.0
        %323 = vst [vmem:[#allocation2 + $0x10] sm:$0xff] 0.0
        %324 = vst [vmem:[#allocation2 + $0x18] sm:$0xff] 0.0
        %325 = vst [vmem:[#allocation2 + $0x20] sm:$0xff] 0.0
        %326 = vst [vmem:[#allocation2 + $0x28] sm:$0xff] 0.0
        %327 = vst [vmem:[#allocation2 + $0x30] sm:$0xff] 0.0
        %328 = vst [vmem:[#allocation2 + $0x38] sm:$0xff] 0.0
      $region44: #{intra_gcn_forward.7} parent=39 // pred_fallthru
        _
      %v329 = vld [vmem:[#allocation2] sm:$0xff]
      %v330 = vld [vmem:[#allocation2 + $0x8] sm:$0xff]
      %v331 = vld [vmem:[#allocation2 + $0x10] sm:$0xff]
      %v332 = vld [vmem:[#allocation2 + $0x18] sm:$0xff]
      %v333 = vld [vmem:[#allocation2 + $0x20] sm:$0xff]
      %v334 = vld [vmem:[#allocation2 + $0x28] sm:$0xff]
      %v335 = vld [vmem:[#allocation2 + $0x30] sm:$0xff]
      %v336 = vld [vmem:[#allocation2 + $0x38] sm:$0xff]
      %v337 = vld [vmem:[%s291] sm:$0xf]
      %v338 = vld [vmem:[%s291 + $0x4] sm:$0xf]
      %v339 = vld [vmem:[%s291 + $0x8] sm:$0xf]
      %v340 = vld [vmem:[%s291 + $0xc] sm:$0xf]
      %v341 = vld [vmem:[%s291 + $0x10] sm:$0xf]
      %v342 = vld [vmem:[%s291 + $0x14] sm:$0xf]
      %v343 = vld [vmem:[%s291 + $0x18] sm:$0xf]
      %v344 = vld [vmem:[%s291 + $0x1c] sm:$0xf]
      %v345 = vld [vmem:[%s297] sm:$0xf]
      %v346 = vld [vmem:[%s297 + $0x4] sm:$0xf]
      %v347 = vld [vmem:[%s297 + $0x8] sm:$0xf]
      %v348 = vld [vmem:[%s297 + $0xc] sm:$0xf]
      %v349 = vld [vmem:[%s297 + $0x10] sm:$0xf]
      %v350 = vld [vmem:[%s297 + $0x14] sm:$0xf]
      %v351 = vld [vmem:[%s297 + $0x18] sm:$0xf]
      %v352 = vld [vmem:[%s297 + $0x1c] sm:$0xf]
      %v353 = vld [vmem:[%s297 + $0x20] sm:$0xf]
      %v354 = vld [vmem:[%s297 + $0x24] sm:$0xf]
      %v355 = vld [vmem:[%s297 + $0x28] sm:$0xf]
      %v356 = vld [vmem:[%s297 + $0x2c] sm:$0xf]
      %v357 = vld [vmem:[%s297 + $0x30] sm:$0xf]
      %v358 = vld [vmem:[%s297 + $0x34] sm:$0xf]
      %v359 = vld [vmem:[%s297 + $0x38] sm:$0xf]
      %v360 = vld [vmem:[%s297 + $0x3c] sm:$0xf]
      %v369 = vunpack.c.l.b16 %v337
      %v370 = vunpack.c.l.b16 %v338
      %v371 = vunpack.c.l.b16 %v339
      %v372 = vunpack.c.l.b16 %v340
      %v373 = vunpack.c.l.b16 %v341
      %v374 = vunpack.c.l.b16 %v342
      %v375 = vunpack.c.l.b16 %v343
      %v376 = vunpack.c.l.b16 %v344
      %v377 = vpack.c.b16 %v370, %v369
      %v378 = vpack.c.b16 %v372, %v371
      %v379 = vpack.c.b16 %v374, %v373
      %v380 = vpack.c.b16 %v376, %v375
      %v401 = vunpack.c.l.b16 %v345
      %v402 = vunpack.c.l.b16 %v346
      %v403 = vunpack.c.l.b16 %v347
      %v404 = vunpack.c.l.b16 %v348
      %v405 = vunpack.c.l.b16 %v349
      %v406 = vunpack.c.l.b16 %v350
      %v407 = vunpack.c.l.b16 %v351
      %v408 = vunpack.c.l.b16 %v352
      %v409 = vunpack.c.l.b16 %v353
      %v410 = vunpack.c.l.b16 %v354
      %v411 = vunpack.c.l.b16 %v355
      %v412 = vunpack.c.l.b16 %v356
      %v413 = vunpack.c.l.b16 %v357
      %v414 = vunpack.c.l.b16 %v358
      %v415 = vunpack.c.l.b16 %v359
      %v416 = vunpack.c.l.b16 %v360
      %v417 = vpack.c.b16 %v402, %v401
      %v418 = vpack.c.b16 %v404, %v403
      %v419 = vpack.c.b16 %v406, %v405
      %v420 = vpack.c.b16 %v408, %v407
      %v421 = vpack.c.b16 %v410, %v409
      %v422 = vpack.c.b16 %v412, %v411
      %v423 = vpack.c.b16 %v414, %v413
      %v424 = vpack.c.b16 %v416, %v415
      %433 = vmatpush.bf16.msra.mxu0 %v424
      %434 = vmatpush.bf16.msra.mxu0 %v423
      %435 = vmatpush.bf16.msra.mxu0 %v422
      %436 = vmatpush.bf16.msra.mxu0 %v421
      %437 = vmatpush.bf16.msra.mxu0 %v420
      %438 = vmatpush.bf16.msra.mxu0 %v419
      %439 = vmatpush.bf16.msra.mxu0 %v418
      %440 = vmatpush.bf16.msra.mxu0 %v417
      %441 = vmatmul.bf16.gmra.mxu0 %v377
      %v442 = vpop.f32.mrf.mxu0
      %v443 = vadd.f32 0.0, %v442
      %v444 = vpop.f32.mrf.mxu0
      %v445 = vadd.f32 0.0, %v444
      %446 = vmatmul.bf16.gmra.mxu0 %v378
      %v447 = vpop.f32.mrf.mxu0
      %v448 = vadd.f32 0.0, %v447
      %v449 = vpop.f32.mrf.mxu0
      %v450 = vadd.f32 0.0, %v449
      %451 = vmatmul.bf16.gmra.mxu0 %v379
      %v452 = vpop.f32.mrf.mxu0
      %v453 = vadd.f32 0.0, %v452
      %v454 = vpop.f32.mrf.mxu0
      %v455 = vadd.f32 0.0, %v454
      %456 = vmatmul.bf16.gmra.mxu0 %v380
      %v457 = vpop.f32.mrf.mxu0
      %v458 = vadd.f32 0.0, %v457
      %v459 = vpop.f32.mrf.mxu0
      %v460 = vadd.f32 0.0, %v459
      %461 = vdwg.mxu0
      %v462 = vadd.f32 %v329, %v443
      %v463 = vadd.f32 %v330, %v445
      %v464 = vadd.f32 %v331, %v448
      %v465 = vadd.f32 %v332, %v450
      %v466 = vadd.f32 %v333, %v453
      %v467 = vadd.f32 %v334, %v455
      %v468 = vadd.f32 %v335, %v458
      %v469 = vadd.f32 %v336, %v460
      %470 = vst [vmem:[#allocation2] sm:$0xff] %v462
      %471 = vst [vmem:[#allocation2 + $0x8] sm:$0xff] %v463
      %472 = vst [vmem:[#allocation2 + $0x10] sm:$0xff] %v464
      %473 = vst [vmem:[#allocation2 + $0x18] sm:$0xff] %v465
      %474 = vst [vmem:[#allocation2 + $0x20] sm:$0xff] %v466
      %475 = vst [vmem:[#allocation2 + $0x28] sm:$0xff] %v467
      %476 = vst [vmem:[#allocation2 + $0x30] sm:$0xff] %v468
      %477 = vst [vmem:[#allocation2 + $0x38] sm:$0xff] %v469
      // Predicated region
      $region45: #{intra_gcn_forward.7} parent=39 // pred_check
        %p478 = pneg %p317
      $region46: #{intra_gcn_forward.7} parent=39 // pred_check_branch
        %480 = sbr.rel (%p478) target = $region48
      $region47: #{intra_gcn_forward.7} parent=39 // pred_region
        %v481 = vld [vmem:[#allocation2] sm:$0xff]
        %v482 = vld [vmem:[#allocation2 + $0x8] sm:$0xff]
        %v483 = vld [vmem:[#allocation2 + $0x10] sm:$0xff]
        %v484 = vld [vmem:[#allocation2 + $0x18] sm:$0xff]
        %v485 = vld [vmem:[#allocation2 + $0x20] sm:$0xff]
        %v486 = vld [vmem:[#allocation2 + $0x28] sm:$0xff]
        %v487 = vld [vmem:[#allocation2 + $0x30] sm:$0xff]
        %v488 = vld [vmem:[#allocation2 + $0x38] sm:$0xff]
        %v489 = vld [vmem:[%s309] sm:$0xff]
        %v490 = vld [vmem:[%s309 + $0x8] sm:$0xff]
        %v491 = vld [vmem:[%s309 + $0x10] sm:$0xff]
        %v492 = vld [vmem:[%s309 + $0x18] sm:$0xff]
        %v493 = vld [vmem:[%s309 + $0x20] sm:$0xff]
        %v494 = vld [vmem:[%s309 + $0x28] sm:$0xff]
        %v495 = vld [vmem:[%s309 + $0x30] sm:$0xff]
        %v496 = vld [vmem:[%s309 + $0x38] sm:$0xff]
        %498 = vset.pattern.permute.xlu0 1
        %499 = vperm.xlu0 %498, %v489
        %v500 = vpop.permute.xlu0 %499
        %503 = vset.pattern.permute.xlu0 1
        %504 = vperm.xlu0 %503, %v490
        %v505 = vpop.permute.xlu0 %504
        %508 = vset.pattern.permute.xlu0 1
        %509 = vperm.xlu0 %508, %v491
        %v510 = vpop.permute.xlu0 %509
        %513 = vset.pattern.permute.xlu0 1
        %514 = vperm.xlu0 %513, %v492
        %v515 = vpop.permute.xlu0 %514
        %518 = vset.pattern.permute.xlu0 1
        %519 = vperm.xlu0 %518, %v493
        %v520 = vpop.permute.xlu0 %519
        %523 = vset.pattern.permute.xlu0 1
        %524 = vperm.xlu0 %523, %v494
        %v525 = vpop.permute.xlu0 %524
        %528 = vset.pattern.permute.xlu0 1
        %529 = vperm.xlu0 %528, %v495
        %v530 = vpop.permute.xlu0 %529
        %533 = vset.pattern.permute.xlu0 1
        %534 = vperm.xlu0 %533, %v496
        %v535 = vpop.permute.xlu0 %534
        %v537 = vmul.f32 %v481, %v500
        %v538 = vmul.f32 %v482, %v505
        %v539 = vmul.f32 %v483, %v510
        %v540 = vmul.f32 %v484, %v515
        %v541 = vmul.f32 %v485, %v520
        %v542 = vmul.f32 %v486, %v525
        %v543 = vmul.f32 %v487, %v530
        %v544 = vmul.f32 %v488, %v535
        %v545 = vld [vmem:[%s303] sm:$0xff]
        %v546 = vld [vmem:[%s303 + $0x8] sm:$0xff]
        %v547 = vld [vmem:[%s303 + $0x10] sm:$0xff]
        %v548 = vld [vmem:[%s303 + $0x18] sm:$0xff]
        %v549 = vld [vmem:[%s303 + $0x20] sm:$0xff]
        %v550 = vld [vmem:[%s303 + $0x28] sm:$0xff]
        %v551 = vld [vmem:[%s303 + $0x30] sm:$0xff]
        %v552 = vld [vmem:[%s303 + $0x38] sm:$0xff]
        %v553 = vadd.f32 %v537, %v545
        %v554 = vadd.f32 %v538, %v546
        %v555 = vadd.f32 %v539, %v547
        %v556 = vadd.f32 %v540, %v548
        %v557 = vadd.f32 %v541, %v549
        %v558 = vadd.f32 %v542, %v550
        %v559 = vadd.f32 %v543, %v551
        %v560 = vadd.f32 %v544, %v552
        %v561 = vmax.f32 %v553, 0.0
        %v562 = vmax.f32 %v554, 0.0
        %v563 = vmax.f32 %v555, 0.0
        %v564 = vmax.f32 %v556, 0.0
        %v565 = vmax.f32 %v557, 0.0
        %v566 = vmax.f32 %v558, 0.0
        %v567 = vmax.f32 %v559, 0.0
        %v568 = vmax.f32 %v560, 0.0
        %v569 = vld [vmem:[%s4] sm:$0xff]
        %v570 = vld [vmem:[%s4 + $0x8] sm:$0xff]
        %v571 = vld [vmem:[%s4 + $0x10] sm:$0xff]
        %v572 = vld [vmem:[%s4 + $0x18] sm:$0xff]
        %v573 = vld [vmem:[%s4 + $0x20] sm:$0xff]
        %v574 = vld [vmem:[%s4 + $0x28] sm:$0xff]
        %v575 = vld [vmem:[%s4 + $0x30] sm:$0xff]
        %v576 = vld [vmem:[%s4 + $0x38] sm:$0xff]
        %v577 = vld [vmem:[%s4 + $0x40] sm:$0xff]
        %v578 = vld [vmem:[%s4 + $0x48] sm:$0xff]
        %v579 = vld [vmem:[%s4 + $0x50] sm:$0xff]
        %v580 = vld [vmem:[%s4 + $0x58] sm:$0xff]
        %v581 = vld [vmem:[%s4 + $0x60] sm:$0xff]
        %v582 = vld [vmem:[%s4 + $0x68] sm:$0xff]
        %v583 = vld [vmem:[%s4 + $0x70] sm:$0xff]
        %v584 = vld [vmem:[%s4 + $0x78] sm:$0xff]
        %585 = vmatpush.msra.mxu0 %v584
        %586 = vmatpush.msra.mxu0 %v583
        %587 = vmatpush.msra.mxu0 %v582
        %588 = vmatpush.msra.mxu0 %v581
        %589 = vmatpush.msra.mxu0 %v580
        %590 = vmatpush.msra.mxu0 %v579
        %591 = vmatpush.msra.mxu0 %v578
        %592 = vmatpush.msra.mxu0 %v577
        %593 = vmatpush.msra.mxu0 %v576
        %594 = vmatpush.msra.mxu0 %v575
        %595 = vmatpush.msra.mxu0 %v574
        %596 = vmatpush.msra.mxu0 %v573
        %597 = vmatpush.msra.mxu0 %v572
        %598 = vmatpush.msra.mxu0 %v571
        %599 = vmatpush.msra.mxu0 %v570
        %600 = vmatpush.msra.mxu0 %v569
        %601 = vmatmul.f32.gmra.mxu0 %v561
        %v602 = vpop.f32.mrf.mxu0
        %v603 = vadd.f32 0.0, %v602
        %604 = vmatmul.f32.gmra.mxu0 %v562
        %v605 = vpop.f32.mrf.mxu0
        %v606 = vadd.f32 0.0, %v605
        %607 = vmatmul.f32.gmra.mxu0 %v563
        %v608 = vpop.f32.mrf.mxu0
        %v609 = vadd.f32 0.0, %v608
        %610 = vmatmul.f32.gmra.mxu0 %v564
        %v611 = vpop.f32.mrf.mxu0
        %v612 = vadd.f32 0.0, %v611
        %613 = vmatmul.f32.gmra.mxu0 %v565
        %v614 = vpop.f32.mrf.mxu0
        %v615 = vadd.f32 0.0, %v614
        %616 = vmatmul.f32.gmra.mxu0 %v566
        %v617 = vpop.f32.mrf.mxu0
        %v618 = vadd.f32 0.0, %v617
        %619 = vmatmul.f32.gmra.mxu0 %v567
        %v620 = vpop.f32.mrf.mxu0
        %v621 = vadd.f32 0.0, %v620
        %622 = vmatmul.f32.gmra.mxu0 %v568
        %v623 = vpop.f32.mrf.mxu0
        %v624 = vadd.f32 0.0, %v623
        %625 = vdwg.mxu0
        %v626 = vpack.c.bf16 %v603, %v603
        %v627 = vpack.c.bf16 %v606, %v606
        %v628 = vpack.c.bf16 %v609, %v609
        %v629 = vpack.c.bf16 %v612, %v612
        %v630 = vpack.c.bf16 %v615, %v615
        %v631 = vpack.c.bf16 %v618, %v618
        %v632 = vpack.c.bf16 %v621, %v621
        %v633 = vpack.c.bf16 %v624, %v624
        %634 = vst [vmem:[%s315] sm:$0xf] %v626
        %635 = vst [vmem:[%s315 + $0x4] sm:$0xf] %v627
        %636 = vst [vmem:[%s315 + $0x8] sm:$0xf] %v628
        %637 = vst [vmem:[%s315 + $0xc] sm:$0xf] %v629
        %638 = vst [vmem:[%s315 + $0x10] sm:$0xf] %v630
        %639 = vst [vmem:[%s315 + $0x14] sm:$0xf] %v631
        %640 = vst [vmem:[%s315 + $0x18] sm:$0xf] %v632
        %641 = vst [vmem:[%s315 + $0x1c] sm:$0xf] %v633
      $region48: #{intra_gcn_forward.7} parent=39 // pred_fallthru
        _
      %s642 = smul.u32 8, %s20
      %p643 = scmp.lt.s32.totalorder %s642, 15
      %s644 = scalar_select %p643, %s642, 15
      %s645 = smul.addr %s644, 4
      %s646 = scalar_lea.vmem %s5, %s645
      // Predicated region
      $region49: #{intra_gcn_forward.7} parent=39 // pred_check
        %p647 = pneg %p173
      $region50: #{intra_gcn_forward.7} parent=39 // pred_check_branch
        %649 = sbr.rel (%p647) target = $region52
      $region51: #{intra_gcn_forward.7} parent=39 // pred_region
        %s650 = smul.u32 8, %s20
      $region52: #{intra_gcn_forward.7} parent=39 // pred_fallthru
        _
    $region40: #{intra_gcn_forward.7} parent=5 // pred_fallthru
      _
    %p651 = scmp.le.s32.totalorder 2, %s11
    // Predicated region
    $region53: #{intra_gcn_forward.7} parent=5 // pred_check
      %p652 = pneg %p651
    $region54: #{intra_gcn_forward.7} parent=5 // pred_check_branch
      %654 = sbr.rel (%p652) target = $region56
    $region55: #{intra_gcn_forward.7} parent=5 // pred_region
      %s655 = ssub.s32 %s11, 2
      // Predicated region
      $region57: #{intra_gcn_forward.7} parent=55 // pred_check
        %p656 = pneg %p179
      $region58: #{intra_gcn_forward.7} parent=55 // pred_check_branch
        %658 = sbr.rel (%p656) target = $region60
      $region59: #{intra_gcn_forward.7} parent=55 // pred_region
        %s659 = smul.u32 8, %s22
        %p660 = scmp.lt.s32.totalorder %s659, 15
        %s661 = scalar_select %p660, %s659, 15
        %s662 = smul.addr %s661, 4
        %s663 = scalar_lea.vmem %s5, %s662
      $region60: #{intra_gcn_forward.7} parent=55 // pred_fallthru
        _
    $region56: #{intra_gcn_forward.7} parent=5 // pred_fallthru
      _
  $region6: #{intra_gcn_forward.7} parent=0 // loop_footer
    %s15 = sadd.s32 1, %s11
  $region7: #{intra_gcn_forward.7} parent=0 // loop_footer_branch
    %10 = sbr.rel target = $region3
  $region8: #{intra_gcn_forward.7} parent=0 // loop_exit
    _

// kernel: intra_gcn_forward.9
$region0: #{intra_gcn_forward.9}
  #allocation0 [shape = 'u32[]', space=smem, size = 0x4, offset = 0x4, fixed_abs, tag = 'smem constant byte address 0x4 - core index']
  #allocation1 [shape = 'u32[72,128]{1,0:T(1,128)}', space=vmem, size = 0x9000, scoped, tag = 'internal scratch']
  #allocation2 [shape = 'f32[64,128]{1,0:T(8,128)}', space=vmem, size = 0x8000, scoped, tag = 'scratch operand']
  %s0 = inlined_call_operand.vmem [shape: bf16[128,128], index: 0, kind: input, shape index: {}]
  %s1 = inlined_call_operand.vmem [shape: bf16[128,128], index: 1, kind: input, shape index: {}]
  %s2 = inlined_call_operand.vmem [shape: f32[128,128], index: 2, kind: input, shape index: {}]
  %s3 = inlined_call_operand.vmem [shape: f32[128,128], index: 3, kind: input, shape index: {}]
  %s4 = inlined_call_operand.vmem [shape: f32[128,128], index: 4, kind: output, shape index: {}]
  %s5 = sld [smem:[#allocation0]]
  $region57: #{intra_gcn_forward.9} parent=0
    _
  %s7 = ssub.s32 1, %s5
  %s8 = scalar_select 0, %s7, %s5
  loop: start=0, step=1, limit=4
  $region2: #{intra_gcn_forward.9} parent=0 // loop_pre_header
    _
  $region3: #{intra_gcn_forward.9} parent=0 // loop_header
    %s10 = sphi 0, %s14
    %p11 = scmp.ge.s32.totalorder %s10, 4
    %s17 = sphi 0, %s29
    %s18 = sphi 0, %s25
    %s19 = sphi 0, %s17
    %s20 = sphi 0, %s18
    %s21 = sphi 0, %s19
    %s22 = sphi 0, %s20
    %s34 = sphi 0, %s36
    %s37 = sphi 0, %s34
    %s38 = sphi 0, %s37
    %s54 = sphi 0, %s38
    %s60 = sphi 0, %s62
    %s63 = sphi 0, %s60
    %s64 = sphi 0, %s63
    %s80 = sphi 0, %s64
    %s86 = sphi 0, %s88
    %s89 = sphi 0, %s86
    %s90 = sphi 0, %s89
    %s106 = sphi 0, %s90
    %s112 = sphi 0, %s114
    %s115 = sphi 0, %s112
    %s116 = sphi 0, %s115
    %s132 = sphi 0, %s116
    %s138 = sphi 0, %s140
    %s141 = sphi 0, %s138
    %s142 = sphi 0, %s141
    %s158 = sphi 0, %s142
  $region4: #{intra_gcn_forward.9} parent=0 // loop_header_branch
    %13 = sbr.rel (%p11) target = $region8
  $region5: #{intra_gcn_forward.9} parent=0 // loop_body
    %s15 = ssub.s32 %s10, 1
    %s16 = ssub.s32 %s10, 2
    %s23 = sadd.s32 1, %s18
    %p24 = scmp.ge.s32.totalorder %s23, 1
    %s25 = scalar_select %p24, 0, %s23
    %s26 = sadd.s32 1, %s17
    %s27 = scalar_select %p24, %s26, %s17
    %p28 = scmp.ge.s32.totalorder %s27, 2
    %s29 = scalar_select %p28, 0, %s27
    %s30 = ssub.s32 %s17, %s29
    %s31 = ssub.s32 %s18, %s25
    %s32 = sor.u32 %s30, %s31
    %p33 = scmp.eq.s32.totalorder %s32, 0
    %s35 = sadd.s32 %s34, 1
    %s36 = scalar_select %p33, %s34, %s35
    %p39 = pneg %p33
    %p40 = scmp.eq.s32.totalorder %s10, 1
    %p41 = por %p39, %p40
    %p42 = scmp.ne.s32.totalorder %s34, %s37
    %p43 = scmp.eq.s32.totalorder %s10, 0
    %p44 = por %p42, %p43
    %p45 = scmp.ne.s32.totalorder %s34, %s37
    %p46 = scmp.eq.s32.totalorder %s15, 1
    %p47 = por %p45, %p46
    %p48 = scmp.ne.s32.totalorder %s37, %s38
    %p49 = scmp.eq.s32.totalorder %s15, 0
    %p50 = por %p48, %p49
    %p51 = scmp.ne.s32.totalorder %s37, %s38
    %p52 = scmp.eq.s32.totalorder %s16, 1
    %p53 = por %p51, %p52
    %p55 = scmp.ne.s32.totalorder %s38, %s54
    %p56 = scmp.eq.s32.totalorder %s16, 0
    %p57 = por %p55, %p56
    %s58 = ssub.s32 %s18, %s25
    %p59 = scmp.eq.s32.totalorder %s58, 0
    %s61 = sadd.s32 %s60, 1
    %s62 = scalar_select %p59, %s60, %s61
    %p65 = pneg %p59
    %p66 = scmp.eq.s32.totalorder %s10, 1
    %p67 = por %p65, %p66
    %p68 = scmp.ne.s32.totalorder %s60, %s63
    %p69 = scmp.eq.s32.totalorder %s10, 0
    %p70 = por %p68, %p69
    %p71 = scmp.ne.s32.totalorder %s60, %s63
    %p72 = scmp.eq.s32.totalorder %s15, 1
    %p73 = por %p71, %p72
    %p74 = scmp.ne.s32.totalorder %s63, %s64
    %p75 = scmp.eq.s32.totalorder %s15, 0
    %p76 = por %p74, %p75
    %p77 = scmp.ne.s32.totalorder %s63, %s64
    %p78 = scmp.eq.s32.totalorder %s16, 1
    %p79 = por %p77, %p78
    %p81 = scmp.ne.s32.totalorder %s64, %s80
    %p82 = scmp.eq.s32.totalorder %s16, 0
    %p83 = por %p81, %p82
    %s84 = ssub.s32 %s17, %s29
    %p85 = scmp.eq.s32.totalorder %s84, 0
    %s87 = sadd.s32 %s86, 1
    %s88 = scalar_select %p85, %s86, %s87
    %p91 = pneg %p85
    %p92 = scmp.eq.s32.totalorder %s10, 1
    %p93 = por %p91, %p92
    %p94 = scmp.ne.s32.totalorder %s86, %s89
    %p95 = scmp.eq.s32.totalorder %s10, 0
    %p96 = por %p94, %p95
    %p97 = scmp.ne.s32.totalorder %s86, %s89
    %p98 = scmp.eq.s32.totalorder %s15, 1
    %p99 = por %p97, %p98
    %p100 = scmp.ne.s32.totalorder %s89, %s90
    %p101 = scmp.eq.s32.totalorder %s15, 0
    %p102 = por %p100, %p101
    %p103 = scmp.ne.s32.totalorder %s89, %s90
    %p104 = scmp.eq.s32.totalorder %s16, 1
    %p105 = por %p103, %p104
    %p107 = scmp.ne.s32.totalorder %s90, %s106
    %p108 = scmp.eq.s32.totalorder %s16, 0
    %p109 = por %p107, %p108
    %s110 = ssub.s32 %s17, %s29
    %p111 = scmp.eq.s32.totalorder %s110, 0
    %s113 = sadd.s32 %s112, 1
    %s114 = scalar_select %p111, %s112, %s113
    %p117 = pneg %p111
    %p118 = scmp.eq.s32.totalorder %s10, 1
    %p119 = por %p117, %p118
    %p120 = scmp.ne.s32.totalorder %s112, %s115
    %p121 = scmp.eq.s32.totalorder %s10, 0
    %p122 = por %p120, %p121
    %p123 = scmp.ne.s32.totalorder %s112, %s115
    %p124 = scmp.eq.s32.totalorder %s15, 1
    %p125 = por %p123, %p124
    %p126 = scmp.ne.s32.totalorder %s115, %s116
    %p127 = scmp.eq.s32.totalorder %s15, 0
    %p128 = por %p126, %p127
    %p129 = scmp.ne.s32.totalorder %s115, %s116
    %p130 = scmp.eq.s32.totalorder %s16, 1
    %p131 = por %p129, %p130
    %p133 = scmp.ne.s32.totalorder %s116, %s132
    %p134 = scmp.eq.s32.totalorder %s16, 0
    %p135 = por %p133, %p134
    %s136 = ssub.s32 %s17, %s29
    %p137 = scmp.eq.s32.totalorder %s136, 0
    %s139 = sadd.s32 %s138, 1
    %s140 = scalar_select %p137, %s138, %s139
    %p143 = pneg %p137
    %p144 = scmp.eq.s32.totalorder %s10, 1
    %p145 = por %p143, %p144
    %p146 = scmp.ne.s32.totalorder %s138, %s141
    %p147 = scmp.eq.s32.totalorder %s10, 0
    %p148 = por %p146, %p147
    %p149 = scmp.ne.s32.totalorder %s138, %s141
    %p150 = scmp.eq.s32.totalorder %s15, 1
    %p151 = por %p149, %p150
    %p152 = scmp.ne.s32.totalorder %s141, %s142
    %p153 = scmp.eq.s32.totalorder %s15, 0
    %p154 = por %p152, %p153
    %p155 = scmp.ne.s32.totalorder %s141, %s142
    %p156 = scmp.eq.s32.totalorder %s16, 1
    %p157 = por %p155, %p156
    %p159 = scmp.ne.s32.totalorder %s142, %s158
    %p160 = scmp.eq.s32.totalorder %s16, 0
    %p161 = por %p159, %p160
    %p162 = scmp.le.s32.totalorder 1, %s10
    %p163 = scmp.lt.s32.totalorder %s10, 3
    %p164 = pnand %p162, %p163
    %p165 = pneg %p164
    // Predicated region
    $region9: #{intra_gcn_forward.9} parent=5 // pred_check
      _
    $region10: #{intra_gcn_forward.9} parent=5 // pred_check_branch
      %167 = sbr.rel (%p164) target = $region12
    $region11: #{intra_gcn_forward.9} parent=5 // pred_region
      %s168 = ssub.s32 %s10, 1
      // Predicated region
      $region13: #{intra_gcn_forward.9} parent=11 // pred_check
        %p169 = pneg %p76
      $region14: #{intra_gcn_forward.9} parent=11 // pred_check_branch
        %171 = sbr.rel (%p169) target = $region16
      $region15: #{intra_gcn_forward.9} parent=11 // pred_region
        %s172 = smul.u32 16, %s20
        %p173 = scmp.lt.s32.totalorder %s172, 15
        %s174 = scalar_select %p173, %s172, 15
        %s175 = smul.addr %s174, 4
        %s176 = scalar_lea.vmem %s1, %s175
        %s177 = smul.u32 16, %s20
      $region16: #{intra_gcn_forward.9} parent=11 // pred_fallthru
        _
    $region12: #{intra_gcn_forward.9} parent=5 // pred_fallthru
      _
    %p178 = scmp.lt.s32.totalorder %s10, 2
    // Predicated region
    $region17: #{intra_gcn_forward.9} parent=5 // pred_check
      %p179 = pneg %p178
    $region18: #{intra_gcn_forward.9} parent=5 // pred_check_branch
      %181 = sbr.rel (%p179) target = $region20
    $region19: #{intra_gcn_forward.9} parent=5 // pred_region
      // Predicated region
      $region21: #{intra_gcn_forward.9} parent=19 // pred_check
        %p182 = pneg %p44
      $region22: #{intra_gcn_forward.9} parent=19 // pred_check_branch
        %184 = sbr.rel (%p182) target = $region24
      $region23: #{intra_gcn_forward.9} parent=19 // pred_region
        %s185 = smul.u32 8, %s17
        %p186 = scmp.lt.s32.totalorder %s185, 15
        %s187 = scalar_select %p186, %s185, 15
        %p188 = scmp.lt.s32.totalorder %s18, 0
        %s189 = scalar_select %p188, %s18, 0
        %s190 = sadd.s32 %s189, %s187
        %s191 = smul.addr %s190, 4
        %s192 = scalar_lea.vmem %s0, %s191
        %s193 = smul.u32 8, %s17
      $region24: #{intra_gcn_forward.9} parent=19 // pred_fallthru
        _
      // Predicated region
      $region25: #{intra_gcn_forward.9} parent=19 // pred_check
        %p194 = pneg %p96
      $region26: #{intra_gcn_forward.9} parent=19 // pred_check_branch
        %196 = sbr.rel (%p194) target = $region28
      $region27: #{intra_gcn_forward.9} parent=19 // pred_region
        %s197 = smul.u32 8, %s17
        %p198 = scmp.lt.s32.totalorder %s197, 15
        %s199 = scalar_select %p198, %s197, 15
        %s200 = smul.addr %s199, 8
        %s201 = scalar_lea.vmem %s2, %s200
        %s202 = smul.u32 8, %s17
      $region28: #{intra_gcn_forward.9} parent=19 // pred_fallthru
        _
      // Predicated region
      $region29: #{intra_gcn_forward.9} parent=19 // pred_check
        %p203 = pneg %p122
      $region30: #{intra_gcn_forward.9} parent=19 // pred_check_branch
        %205 = sbr.rel (%p203) target = $region32
      $region31: #{intra_gcn_forward.9} parent=19 // pred_region
        %s206 = smul.u32 8, %s17
        %p207 = scmp.lt.s32.totalorder %s206, 15
        %s208 = scalar_select %p207, %s206, 15
        %s209 = smul.addr %s208, 8
        %s210 = scalar_lea.vmem %s3, %s209
        %s211 = smul.u32 8, %s17
      $region32: #{intra_gcn_forward.9} parent=19 // pred_fallthru
        _
    $region20: #{intra_gcn_forward.9} parent=5 // pred_fallthru
      _
    %p212 = scmp.le.s32.totalorder 1, %s10
    %p213 = scmp.lt.s32.totalorder %s10, 3
    %p214 = pnand %p212, %p213
    %p215 = pneg %p214
    // Predicated region
    $region33: #{intra_gcn_forward.9} parent=5 // pred_check
      _
    $region34: #{intra_gcn_forward.9} parent=5 // pred_check_branch
      %217 = sbr.rel (%p214) target = $region36
    $region35: #{intra_gcn_forward.9} parent=5 // pred_region
      %s218 = ssub.s32 %s10, 1
      %s219 = smul.u32 8, %s19
      %p220 = scmp.lt.s32.totalorder %s219, 15
      %s221 = scalar_select %p220, %s219, 15
      %p222 = scmp.lt.s32.totalorder %s20, 0
      %s223 = scalar_select %p222, %s20, 0
      %s224 = sadd.s32 %s223, %s221
      %s225 = smul.addr %s224, 4
      %s226 = scalar_lea.vmem %s0, %s225
      %p227 = pneg %p50
      %p228 = pneg %p47
      %s229 = smul.u32 16, %s20
      %p230 = scmp.lt.s32.totalorder %s229, 15
      %s231 = scalar_select %p230, %s229, 15
      %s232 = smul.addr %s231, 4
      %s233 = scalar_lea.vmem %s1, %s232
      %p234 = pneg %p76
      %p235 = pneg %p73
      %s236 = smul.u32 8, %s19
      %p237 = scmp.lt.s32.totalorder %s236, 15
      %s238 = scalar_select %p237, %s236, 15
      %s239 = smul.addr %s238, 8
      %s240 = scalar_lea.vmem %s2, %s239
      %p241 = pneg %p102
      %p242 = pneg %p99
      %s243 = smul.u32 8, %s19
      %p244 = scmp.lt.s32.totalorder %s243, 15
      %s245 = scalar_select %p244, %s243, 15
      %s246 = smul.addr %s245, 8
      %s247 = scalar_lea.vmem %s3, %s246
      %p248 = pneg %p128
      %p249 = pneg %p125
      %p250 = pneg %p154
      %p251 = pneg %p151
      %s252 = smul.u32 8, %s19
      %p253 = scmp.lt.s32.totalorder %s252, 15
      %s254 = scalar_select %p253, %s252, 15
      %s255 = smul.addr %s254, 8
      %s256 = scalar_lea.vmem %s4, %s255
      %s257 = smul.u32 8, %s19
      %p258 = scmp.lt.s32.totalorder %s257, 15
      %s259 = scalar_select %p258, %s257, 15
      %p260 = scmp.lt.s32.totalorder %s20, 0
      %s261 = scalar_select %p260, %s20, 0
      %s262 = sadd.s32 %s261, %s259
      %s263 = smul.addr %s262, 4
      %s264 = scalar_lea.vmem %s0, %s263
      %s265 = smul.u32 8, %s19
      %s266 = smul.u32 16, %s20
      %p267 = scmp.lt.s32.totalorder %s266, 15
      %s268 = scalar_select %p267, %s266, 15
      %s269 = smul.addr %s268, 4
      %s270 = scalar_lea.vmem %s1, %s269
      %s271 = smul.u32 16, %s20
      %s272 = smul.u32 8, %s19
      %p273 = scmp.lt.s32.totalorder %s272, 15
      %s274 = scalar_select %p273, %s272, 15
      %s275 = smul.addr %s274, 8
      %s276 = scalar_lea.vmem %s2, %s275
      %s277 = smul.u32 8, %s19
      %s278 = smul.u32 8, %s19
      %p279 = scmp.lt.s32.totalorder %s278, 15
      %s280 = scalar_select %p279, %s278, 15
      %s281 = smul.addr %s280, 8
      %s282 = scalar_lea.vmem %s3, %s281
      %s283 = smul.u32 8, %s19
      %s284 = smul.u32 8, %s19
      %p285 = scmp.lt.s32.totalorder %s284, 15
      %s286 = scalar_select %p285, %s284, 15
      %s287 = smul.addr %s286, 8
      %s288 = scalar_lea.vmem %s4, %s287
      %s289 = smul.u32 8, %s19
      %p290 = scmp.eq.s32.totalorder %s20, 0
      // Predicated region
      $region37: #{intra_gcn_forward.9} parent=35 // pred_check
        %p291 = pneg %p290
      $region38: #{intra_gcn_forward.9} parent=35 // pred_check_branch
        %293 = sbr.rel (%p291) target = $region40
      $region39: #{intra_gcn_forward.9} parent=35 // pred_region
        %294 = vst [vmem:[#allocation2] sm:$0xff] 0.0
        %295 = vst [vmem:[#allocation2 + $0x8] sm:$0xff] 0.0
        %296 = vst [vmem:[#allocation2 + $0x10] sm:$0xff] 0.0
        %297 = vst [vmem:[#allocation2 + $0x18] sm:$0xff] 0.0
        %298 = vst [vmem:[#allocation2 + $0x20] sm:$0xff] 0.0
        %299 = vst [vmem:[#allocation2 + $0x28] sm:$0xff] 0.0
        %300 = vst [vmem:[#allocation2 + $0x30] sm:$0xff] 0.0
        %301 = vst [vmem:[#allocation2 + $0x38] sm:$0xff] 0.0
      $region40: #{intra_gcn_forward.9} parent=35 // pred_fallthru
        _
      %v302 = vld [vmem:[#allocation2] sm:$0xff]
      %v303 = vld [vmem:[#allocation2 + $0x8] sm:$0xff]
      %v304 = vld [vmem:[#allocation2 + $0x10] sm:$0xff]
      %v305 = vld [vmem:[#allocation2 + $0x18] sm:$0xff]
      %v306 = vld [vmem:[#allocation2 + $0x20] sm:$0xff]
      %v307 = vld [vmem:[#allocation2 + $0x28] sm:$0xff]
      %v308 = vld [vmem:[#allocation2 + $0x30] sm:$0xff]
      %v309 = vld [vmem:[#allocation2 + $0x38] sm:$0xff]
      %v310 = vld [vmem:[%s264] sm:$0xf]
      %v311 = vld [vmem:[%s264 + $0x4] sm:$0xf]
      %v312 = vld [vmem:[%s264 + $0x8] sm:$0xf]
      %v313 = vld [vmem:[%s264 + $0xc] sm:$0xf]
      %v314 = vld [vmem:[%s264 + $0x10] sm:$0xf]
      %v315 = vld [vmem:[%s264 + $0x14] sm:$0xf]
      %v316 = vld [vmem:[%s264 + $0x18] sm:$0xf]
      %v317 = vld [vmem:[%s264 + $0x1c] sm:$0xf]
      %v318 = vld [vmem:[%s270] sm:$0xf]
      %v319 = vld [vmem:[%s270 + $0x4] sm:$0xf]
      %v320 = vld [vmem:[%s270 + $0x8] sm:$0xf]
      %v321 = vld [vmem:[%s270 + $0xc] sm:$0xf]
      %v322 = vld [vmem:[%s270 + $0x10] sm:$0xf]
      %v323 = vld [vmem:[%s270 + $0x14] sm:$0xf]
      %v324 = vld [vmem:[%s270 + $0x18] sm:$0xf]
      %v325 = vld [vmem:[%s270 + $0x1c] sm:$0xf]
      %v326 = vld [vmem:[%s270 + $0x20] sm:$0xf]
      %v327 = vld [vmem:[%s270 + $0x24] sm:$0xf]
      %v328 = vld [vmem:[%s270 + $0x28] sm:$0xf]
      %v329 = vld [vmem:[%s270 + $0x2c] sm:$0xf]
      %v330 = vld [vmem:[%s270 + $0x30] sm:$0xf]
      %v331 = vld [vmem:[%s270 + $0x34] sm:$0xf]
      %v332 = vld [vmem:[%s270 + $0x38] sm:$0xf]
      %v333 = vld [vmem:[%s270 + $0x3c] sm:$0xf]
      %v342 = vunpack.c.l.b16 %v310
      %v343 = vunpack.c.l.b16 %v311
      %v344 = vunpack.c.l.b16 %v312
      %v345 = vunpack.c.l.b16 %v313
      %v346 = vunpack.c.l.b16 %v314
      %v347 = vunpack.c.l.b16 %v315
      %v348 = vunpack.c.l.b16 %v316
      %v349 = vunpack.c.l.b16 %v317
      %v350 = vpack.c.b16 %v343, %v342
      %v351 = vpack.c.b16 %v345, %v344
      %v352 = vpack.c.b16 %v347, %v346
      %v353 = vpack.c.b16 %v349, %v348
      %v374 = vunpack.c.l.b16 %v318
      %v375 = vunpack.c.l.b16 %v319
      %v376 = vunpack.c.l.b16 %v320
      %v377 = vunpack.c.l.b16 %v321
      %v378 = vunpack.c.l.b16 %v322
      %v379 = vunpack.c.l.b16 %v323
      %v380 = vunpack.c.l.b16 %v324
      %v381 = vunpack.c.l.b16 %v325
      %v382 = vunpack.c.l.b16 %v326
      %v383 = vunpack.c.l.b16 %v327
      %v384 = vunpack.c.l.b16 %v328
      %v385 = vunpack.c.l.b16 %v329
      %v386 = vunpack.c.l.b16 %v330
      %v387 = vunpack.c.l.b16 %v331
      %v388 = vunpack.c.l.b16 %v332
      %v389 = vunpack.c.l.b16 %v333
      %v390 = vpack.c.b16 %v375, %v374
      %v391 = vpack.c.b16 %v377, %v376
      %v392 = vpack.c.b16 %v379, %v378
      %v393 = vpack.c.b16 %v381, %v380
      %v394 = vpack.c.b16 %v383, %v382
      %v395 = vpack.c.b16 %v385, %v384
      %v396 = vpack.c.b16 %v387, %v386
      %v397 = vpack.c.b16 %v389, %v388
      %406 = vmatpush.bf16.msra.mxu0 %v397
      %407 = vmatpush.bf16.msra.mxu0 %v396
      %408 = vmatpush.bf16.msra.mxu0 %v395
      %409 = vmatpush.bf16.msra.mxu0 %v394
      %410 = vmatpush.bf16.msra.mxu0 %v393
      %411 = vmatpush.bf16.msra.mxu0 %v392
      %412 = vmatpush.bf16.msra.mxu0 %v391
      %413 = vmatpush.bf16.msra.mxu0 %v390
      %414 = vmatmul.bf16.gmra.mxu0 %v350
      %v415 = vpop.f32.mrf.mxu0
      %v416 = vadd.f32 0.0, %v415
      %v417 = vpop.f32.mrf.mxu0
      %v418 = vadd.f32 0.0, %v417
      %419 = vmatmul.bf16.gmra.mxu0 %v351
      %v420 = vpop.f32.mrf.mxu0
      %v421 = vadd.f32 0.0, %v420
      %v422 = vpop.f32.mrf.mxu0
      %v423 = vadd.f32 0.0, %v422
      %424 = vmatmul.bf16.gmra.mxu0 %v352
      %v425 = vpop.f32.mrf.mxu0
      %v426 = vadd.f32 0.0, %v425
      %v427 = vpop.f32.mrf.mxu0
      %v428 = vadd.f32 0.0, %v427
      %429 = vmatmul.bf16.gmra.mxu0 %v353
      %v430 = vpop.f32.mrf.mxu0
      %v431 = vadd.f32 0.0, %v430
      %v432 = vpop.f32.mrf.mxu0
      %v433 = vadd.f32 0.0, %v432
      %434 = vdwg.mxu0
      %v435 = vadd.f32 %v302, %v416
      %v436 = vadd.f32 %v303, %v418
      %v437 = vadd.f32 %v304, %v421
      %v438 = vadd.f32 %v305, %v423
      %v439 = vadd.f32 %v306, %v426
      %v440 = vadd.f32 %v307, %v428
      %v441 = vadd.f32 %v308, %v431
      %v442 = vadd.f32 %v309, %v433
      %443 = vst [vmem:[#allocation2] sm:$0xff] %v435
      %444 = vst [vmem:[#allocation2 + $0x8] sm:$0xff] %v436
      %445 = vst [vmem:[#allocation2 + $0x10] sm:$0xff] %v437
      %446 = vst [vmem:[#allocation2 + $0x18] sm:$0xff] %v438
      %447 = vst [vmem:[#allocation2 + $0x20] sm:$0xff] %v439
      %448 = vst [vmem:[#allocation2 + $0x28] sm:$0xff] %v440
      %449 = vst [vmem:[#allocation2 + $0x30] sm:$0xff] %v441
      %450 = vst [vmem:[#allocation2 + $0x38] sm:$0xff] %v442
      // Predicated region
      $region41: #{intra_gcn_forward.9} parent=35 // pred_check
        %p451 = pneg %p290
      $region42: #{intra_gcn_forward.9} parent=35 // pred_check_branch
        %453 = sbr.rel (%p451) target = $region44
      $region43: #{intra_gcn_forward.9} parent=35 // pred_region
        %v454 = vld [vmem:[#allocation2] sm:$0xff]
        %v455 = vld [vmem:[#allocation2 + $0x8] sm:$0xff]
        %v456 = vld [vmem:[#allocation2 + $0x10] sm:$0xff]
        %v457 = vld [vmem:[#allocation2 + $0x18] sm:$0xff]
        %v458 = vld [vmem:[#allocation2 + $0x20] sm:$0xff]
        %v459 = vld [vmem:[#allocation2 + $0x28] sm:$0xff]
        %v460 = vld [vmem:[#allocation2 + $0x30] sm:$0xff]
        %v461 = vld [vmem:[#allocation2 + $0x38] sm:$0xff]
        %v462 = vld [vmem:[%s282] sm:$0xff]
        %v463 = vld [vmem:[%s282 + $0x8] sm:$0xff]
        %v464 = vld [vmem:[%s282 + $0x10] sm:$0xff]
        %v465 = vld [vmem:[%s282 + $0x18] sm:$0xff]
        %v466 = vld [vmem:[%s282 + $0x20] sm:$0xff]
        %v467 = vld [vmem:[%s282 + $0x28] sm:$0xff]
        %v468 = vld [vmem:[%s282 + $0x30] sm:$0xff]
        %v469 = vld [vmem:[%s282 + $0x38] sm:$0xff]
        %471 = vset.pattern.permute.xlu0 1
        %472 = vperm.xlu0 %471, %v462
        %v473 = vpop.permute.xlu0 %472
        %476 = vset.pattern.permute.xlu0 1
        %477 = vperm.xlu0 %476, %v463
        %v478 = vpop.permute.xlu0 %477
        %481 = vset.pattern.permute.xlu0 1
        %482 = vperm.xlu0 %481, %v464
        %v483 = vpop.permute.xlu0 %482
        %486 = vset.pattern.permute.xlu0 1
        %487 = vperm.xlu0 %486, %v465
        %v488 = vpop.permute.xlu0 %487
        %491 = vset.pattern.permute.xlu0 1
        %492 = vperm.xlu0 %491, %v466
        %v493 = vpop.permute.xlu0 %492
        %496 = vset.pattern.permute.xlu0 1
        %497 = vperm.xlu0 %496, %v467
        %v498 = vpop.permute.xlu0 %497
        %501 = vset.pattern.permute.xlu0 1
        %502 = vperm.xlu0 %501, %v468
        %v503 = vpop.permute.xlu0 %502
        %506 = vset.pattern.permute.xlu0 1
        %507 = vperm.xlu0 %506, %v469
        %v508 = vpop.permute.xlu0 %507
        %v510 = vmul.f32 %v454, %v473
        %v511 = vmul.f32 %v455, %v478
        %v512 = vmul.f32 %v456, %v483
        %v513 = vmul.f32 %v457, %v488
        %v514 = vmul.f32 %v458, %v493
        %v515 = vmul.f32 %v459, %v498
        %v516 = vmul.f32 %v460, %v503
        %v517 = vmul.f32 %v461, %v508
        %v518 = vld [vmem:[%s276] sm:$0xff]
        %v519 = vld [vmem:[%s276 + $0x8] sm:$0xff]
        %v520 = vld [vmem:[%s276 + $0x10] sm:$0xff]
        %v521 = vld [vmem:[%s276 + $0x18] sm:$0xff]
        %v522 = vld [vmem:[%s276 + $0x20] sm:$0xff]
        %v523 = vld [vmem:[%s276 + $0x28] sm:$0xff]
        %v524 = vld [vmem:[%s276 + $0x30] sm:$0xff]
        %v525 = vld [vmem:[%s276 + $0x38] sm:$0xff]
        %v526 = vadd.f32 %v510, %v518
        %v527 = vadd.f32 %v511, %v519
        %v528 = vadd.f32 %v512, %v520
        %v529 = vadd.f32 %v513, %v521
        %v530 = vadd.f32 %v514, %v522
        %v531 = vadd.f32 %v515, %v523
        %v532 = vadd.f32 %v516, %v524
        %v533 = vadd.f32 %v517, %v525
        %534 = vst [vmem:[%s288] sm:$0xff] %v526
        %535 = vst [vmem:[%s288 + $0x8] sm:$0xff] %v527
        %536 = vst [vmem:[%s288 + $0x10] sm:$0xff] %v528
        %537 = vst [vmem:[%s288 + $0x18] sm:$0xff] %v529
        %538 = vst [vmem:[%s288 + $0x20] sm:$0xff] %v530
        %539 = vst [vmem:[%s288 + $0x28] sm:$0xff] %v531
        %540 = vst [vmem:[%s288 + $0x30] sm:$0xff] %v532
        %541 = vst [vmem:[%s288 + $0x38] sm:$0xff] %v533
      $region44: #{intra_gcn_forward.9} parent=35 // pred_fallthru
        _
      %s542 = smul.u32 8, %s19
      %p543 = scmp.lt.s32.totalorder %s542, 15
      %s544 = scalar_select %p543, %s542, 15
      %s545 = smul.addr %s544, 8
      %s546 = scalar_lea.vmem %s4, %s545
      // Predicated region
      $region45: #{intra_gcn_forward.9} parent=35 // pred_check
        %p547 = pneg %p151
      $region46: #{intra_gcn_forward.9} parent=35 // pred_check_branch
        %549 = sbr.rel (%p547) target = $region48
      $region47: #{intra_gcn_forward.9} parent=35 // pred_region
        %s550 = smul.u32 8, %s19
      $region48: #{intra_gcn_forward.9} parent=35 // pred_fallthru
        _
    $region36: #{intra_gcn_forward.9} parent=5 // pred_fallthru
      _
    %p551 = scmp.le.s32.totalorder 2, %s10
    // Predicated region
    $region49: #{intra_gcn_forward.9} parent=5 // pred_check
      %p552 = pneg %p551
    $region50: #{intra_gcn_forward.9} parent=5 // pred_check_branch
      %554 = sbr.rel (%p552) target = $region52
    $region51: #{intra_gcn_forward.9} parent=5 // pred_region
      %s555 = ssub.s32 %s10, 2
      // Predicated region
      $region53: #{intra_gcn_forward.9} parent=51 // pred_check
        %p556 = pneg %p157
      $region54: #{intra_gcn_forward.9} parent=51 // pred_check_branch
        %558 = sbr.rel (%p556) target = $region56
      $region55: #{intra_gcn_forward.9} parent=51 // pred_region
        %s559 = smul.u32 8, %s21
        %p560 = scmp.lt.s32.totalorder %s559, 15
        %s561 = scalar_select %p560, %s559, 15
        %s562 = smul.addr %s561, 8
        %s563 = scalar_lea.vmem %s4, %s562
      $region56: #{intra_gcn_forward.9} parent=51 // pred_fallthru
        _
    $region52: #{intra_gcn_forward.9} parent=5 // pred_fallthru
      _
  $region6: #{intra_gcn_forward.9} parent=0 // loop_footer
    %s14 = sadd.s32 1, %s10
  $region7: #{intra_gcn_forward.9} parent=0 // loop_footer_branch
    %9 = sbr.rel target = $region3
  $region8: #{intra_gcn_forward.9} parent=0 // loop_exit
    _

// kernel: intra_gcn_forward.8
$region0: #{intra_gcn_forward.8}
  #allocation0 [shape = 'u32[]', space=smem, size = 0x4, offset = 0x4, fixed_abs, tag = 'smem constant byte address 0x4 - core index']
  #allocation1 [shape = 'u32[72,128]{1,0:T(1,128)}', space=vmem, size = 0x9000, scoped, tag = 'internal scratch']
  #allocation2 [shape = 'f32[64,1]{1,0:T(8,128)}', space=vmem, size = 0x8000, scoped, tag = 'scratch operand']
  #allocation3 [shape = 'f32[64,1]{1,0:T(8,128)}', space=vmem, size = 0x8000, scoped, tag = 'scratch operand']
  #allocation4 [shape = 'f32[64,128]{1,0:T(8,128)}', space=vmem, size = 0x8000, scoped, tag = 'scratch operand']
  %s0 = inlined_call_operand.vmem [shape: bf16[128,128], index: 0, kind: input, shape index: {}]
  %s1 = inlined_call_operand.vmem [shape: bf16[128,128], index: 1, kind: input, shape index: {}, may-alias: {1,2}]
  %s2 = inlined_call_operand.vmem [shape: bf16[128,128], index: 2, kind: input, shape index: {}, may-alias: {1,2}]
  %s3 = inlined_call_operand.vmem [shape: f32[280,128], index: 3, kind: input, shape index: {}]
  %s4 = inlined_call_operand.vmem [shape: bf16[128,128], index: 4, kind: output, shape index: {0}]
  %s5 = inlined_call_operand.vmem [shape: f32[128,128], index: 5, kind: output, shape index: {1}]
  %6 = xla_tuple %s4, %s5
  %s7 = sld [smem:[#allocation0]]
  $region65: #{intra_gcn_forward.8} parent=0
    _
  %s9 = ssub.s32 1, %s7
  %s10 = scalar_select 0, %s9, %s7
  loop: start=0, step=1, limit=4
  $region2: #{intra_gcn_forward.8} parent=0 // loop_pre_header
    _
  $region3: #{intra_gcn_forward.8} parent=0 // loop_header
    %s12 = sphi 0, %s16
    %p13 = scmp.ge.s32.totalorder %s12, 4
    %s19 = sphi 0, %s31
    %s20 = sphi 0, %s27
    %s21 = sphi 0, %s19
    %s22 = sphi 0, %s20
    %s23 = sphi 0, %s21
    %s24 = sphi 0, %s22
    %s36 = sphi 0, %s38
    %s39 = sphi 0, %s36
    %s40 = sphi 0, %s39
    %s56 = sphi 0, %s40
    %s62 = sphi 0, %s64
    %s65 = sphi 0, %s62
    %s66 = sphi 0, %s65
    %s82 = sphi 0, %s66
    %s88 = sphi 0, %s90
    %s91 = sphi 0, %s88
    %s92 = sphi 0, %s91
    %s108 = sphi 0, %s92
    %s112 = sphi 0, %s112
    %s114 = sphi 0, %s112
    %s115 = sphi 0, %s114
    %s129 = sphi 0, %s115
    %s135 = sphi 0, %s137
    %s138 = sphi 0, %s135
    %s139 = sphi 0, %s138
    %s155 = sphi 0, %s139
    %s161 = sphi 0, %s163
    %s164 = sphi 0, %s161
    %s165 = sphi 0, %s164
    %s181 = sphi 0, %s165
  $region4: #{intra_gcn_forward.8} parent=0 // loop_header_branch
    %15 = sbr.rel (%p13) target = $region8
  $region5: #{intra_gcn_forward.8} parent=0 // loop_body
    %s17 = ssub.s32 %s12, 1
    %s18 = ssub.s32 %s12, 2
    %s25 = sadd.s32 1, %s20
    %p26 = scmp.ge.s32.totalorder %s25, 1
    %s27 = scalar_select %p26, 0, %s25
    %s28 = sadd.s32 1, %s19
    %s29 = scalar_select %p26, %s28, %s19
    %p30 = scmp.ge.s32.totalorder %s29, 2
    %s31 = scalar_select %p30, 0, %s29
    %s32 = ssub.s32 %s19, %s31
    %s33 = ssub.s32 %s20, %s27
    %s34 = sor.u32 %s32, %s33
    %p35 = scmp.eq.s32.totalorder %s34, 0
    %s37 = sadd.s32 %s36, 1
    %s38 = scalar_select %p35, %s36, %s37
    %p41 = pneg %p35
    %p42 = scmp.eq.s32.totalorder %s12, 1
    %p43 = por %p41, %p42
    %p44 = scmp.ne.s32.totalorder %s36, %s39
    %p45 = scmp.eq.s32.totalorder %s12, 0
    %p46 = por %p44, %p45
    %p47 = scmp.ne.s32.totalorder %s36, %s39
    %p48 = scmp.eq.s32.totalorder %s17, 1
    %p49 = por %p47, %p48
    %p50 = scmp.ne.s32.totalorder %s39, %s40
    %p51 = scmp.eq.s32.totalorder %s17, 0
    %p52 = por %p50, %p51
    %p53 = scmp.ne.s32.totalorder %s39, %s40
    %p54 = scmp.eq.s32.totalorder %s18, 1
    %p55 = por %p53, %p54
    %p57 = scmp.ne.s32.totalorder %s40, %s56
    %p58 = scmp.eq.s32.totalorder %s18, 0
    %p59 = por %p57, %p58
    %s60 = ssub.s32 %s20, %s27
    %p61 = scmp.eq.s32.totalorder %s60, 0
    %s63 = sadd.s32 %s62, 1
    %s64 = scalar_select %p61, %s62, %s63
    %p67 = pneg %p61
    %p68 = scmp.eq.s32.totalorder %s12, 1
    %p69 = por %p67, %p68
    %p70 = scmp.ne.s32.totalorder %s62, %s65
    %p71 = scmp.eq.s32.totalorder %s12, 0
    %p72 = por %p70, %p71
    %p73 = scmp.ne.s32.totalorder %s62, %s65
    %p74 = scmp.eq.s32.totalorder %s17, 1
    %p75 = por %p73, %p74
    %p76 = scmp.ne.s32.totalorder %s65, %s66
    %p77 = scmp.eq.s32.totalorder %s17, 0
    %p78 = por %p76, %p77
    %p79 = scmp.ne.s32.totalorder %s65, %s66
    %p80 = scmp.eq.s32.totalorder %s18, 1
    %p81 = por %p79, %p80
    %p83 = scmp.ne.s32.totalorder %s66, %s82
    %p84 = scmp.eq.s32.totalorder %s18, 0
    %p85 = por %p83, %p84
    %s86 = ssub.s32 %s19, %s31
    %p87 = scmp.eq.s32.totalorder %s86, 0
    %s89 = sadd.s32 %s88, 1
    %s90 = scalar_select %p87, %s88, %s89
    %p93 = pneg %p87
    %p94 = scmp.eq.s32.totalorder %s12, 1
    %p95 = por %p93, %p94
    %p96 = scmp.ne.s32.totalorder %s88, %s91
    %p97 = scmp.eq.s32.totalorder %s12, 0
    %p98 = por %p96, %p97
    %p99 = scmp.ne.s32.totalorder %s88, %s91
    %p100 = scmp.eq.s32.totalorder %s17, 1
    %p101 = por %p99, %p100
    %p102 = scmp.ne.s32.totalorder %s91, %s92
    %p103 = scmp.eq.s32.totalorder %s17, 0
    %p104 = por %p102, %p103
    %p105 = scmp.ne.s32.totalorder %s91, %s92
    %p106 = scmp.eq.s32.totalorder %s18, 1
    %p107 = por %p105, %p106
    %p109 = scmp.ne.s32.totalorder %s92, %s108
    %p110 = scmp.eq.s32.totalorder %s18, 0
    %p111 = por %p109, %p110
    %s113 = sadd.s32 %s112, 1
    %p116 = scmp.eq.s32.totalorder %s12, 1
    %p117 = scmp.ne.s32.totalorder %s112, %s114
    %p118 = scmp.eq.s32.totalorder %s12, 0
    %p119 = por %p117, %p118
    %p120 = scmp.ne.s32.totalorder %s112, %s114
    %p121 = scmp.eq.s32.totalorder %s17, 1
    %p122 = por %p120, %p121
    %p123 = scmp.ne.s32.totalorder %s114, %s115
    %p124 = scmp.eq.s32.totalorder %s17, 0
    %p125 = por %p123, %p124
    %p126 = scmp.ne.s32.totalorder %s114, %s115
    %p127 = scmp.eq.s32.totalorder %s18, 1
    %p128 = por %p126, %p127
    %p130 = scmp.ne.s32.totalorder %s115, %s129
    %p131 = scmp.eq.s32.totalorder %s18, 0
    %p132 = por %p130, %p131
    %s133 = ssub.s32 %s19, %s31
    %p134 = scmp.eq.s32.totalorder %s133, 0
    %s136 = sadd.s32 %s135, 1
    %s137 = scalar_select %p134, %s135, %s136
    %p140 = pneg %p134
    %p141 = scmp.eq.s32.totalorder %s12, 1
    %p142 = por %p140, %p141
    %p143 = scmp.ne.s32.totalorder %s135, %s138
    %p144 = scmp.eq.s32.totalorder %s12, 0
    %p145 = por %p143, %p144
    %p146 = scmp.ne.s32.totalorder %s135, %s138
    %p147 = scmp.eq.s32.totalorder %s17, 1
    %p148 = por %p146, %p147
    %p149 = scmp.ne.s32.totalorder %s138, %s139
    %p150 = scmp.eq.s32.totalorder %s17, 0
    %p151 = por %p149, %p150
    %p152 = scmp.ne.s32.totalorder %s138, %s139
    %p153 = scmp.eq.s32.totalorder %s18, 1
    %p154 = por %p152, %p153
    %p156 = scmp.ne.s32.totalorder %s139, %s155
    %p157 = scmp.eq.s32.totalorder %s18, 0
    %p158 = por %p156, %p157
    %s159 = ssub.s32 %s19, %s31
    %p160 = scmp.eq.s32.totalorder %s159, 0
    %s162 = sadd.s32 %s161, 1
    %s163 = scalar_select %p160, %s161, %s162
    %p166 = pneg %p160
    %p167 = scmp.eq.s32.totalorder %s12, 1
    %p168 = por %p166, %p167
    %p169 = scmp.ne.s32.totalorder %s161, %s164
    %p170 = scmp.eq.s32.totalorder %s12, 0
    %p171 = por %p169, %p170
    %p172 = scmp.ne.s32.totalorder %s161, %s164
    %p173 = scmp.eq.s32.totalorder %s17, 1
    %p174 = por %p172, %p173
    %p175 = scmp.ne.s32.totalorder %s164, %s165
    %p176 = scmp.eq.s32.totalorder %s17, 0
    %p177 = por %p175, %p176
    %p178 = scmp.ne.s32.totalorder %s164, %s165
    %p179 = scmp.eq.s32.totalorder %s18, 1
    %p180 = por %p178, %p179
    %p182 = scmp.ne.s32.totalorder %s165, %s181
    %p183 = scmp.eq.s32.totalorder %s18, 0
    %p184 = por %p182, %p183
    %p185 = scmp.le.s32.totalorder 1, %s12
    %p186 = scmp.lt.s32.totalorder %s12, 3
    %p187 = pnand %p185, %p186
    %p188 = pneg %p187
    // Predicated region
    $region9: #{intra_gcn_forward.8} parent=5 // pred_check
      _
    $region10: #{intra_gcn_forward.8} parent=5 // pred_check_branch
      %190 = sbr.rel (%p187) target = $region12
    $region11: #{intra_gcn_forward.8} parent=5 // pred_region
      %s191 = ssub.s32 %s12, 1
      // Predicated region
      $region13: #{intra_gcn_forward.8} parent=11 // pred_check
        %p192 = pneg %p78
      $region14: #{intra_gcn_forward.8} parent=11 // pred_check_branch
        %194 = sbr.rel (%p192) target = $region16
      $region15: #{intra_gcn_forward.8} parent=11 // pred_region
        %s195 = smul.u32 16, %s22
        %p196 = scmp.lt.s32.totalorder %s195, 15
        %s197 = scalar_select %p196, %s195, 15
        %s198 = smul.addr %s197, 4
        %s199 = scalar_lea.vmem %s1, %s198
        %s200 = smul.u32 16, %s22
      $region16: #{intra_gcn_forward.8} parent=11 // pred_fallthru
        _
      // Predicated region
      $region17: #{intra_gcn_forward.8} parent=11 // pred_check
        %p201 = pneg %p125
      $region18: #{intra_gcn_forward.8} parent=11 // pred_check_branch
        %203 = sbr.rel (%p201) target = $region20
      $region19: #{intra_gcn_forward.8} parent=11 // pred_region
        _
      $region20: #{intra_gcn_forward.8} parent=11 // pred_fallthru
        _
    $region12: #{intra_gcn_forward.8} parent=5 // pred_fallthru
      _
    %p204 = scmp.lt.s32.totalorder %s12, 2
    // Predicated region
    $region21: #{intra_gcn_forward.8} parent=5 // pred_check
      %p205 = pneg %p204
    $region22: #{intra_gcn_forward.8} parent=5 // pred_check_branch
      %207 = sbr.rel (%p205) target = $region24
    $region23: #{intra_gcn_forward.8} parent=5 // pred_region
      // Predicated region
      $region25: #{intra_gcn_forward.8} parent=23 // pred_check
        %p208 = pneg %p46
      $region26: #{intra_gcn_forward.8} parent=23 // pred_check_branch
        %210 = sbr.rel (%p208) target = $region28
      $region27: #{intra_gcn_forward.8} parent=23 // pred_region
        %s211 = smul.u32 8, %s19
        %p212 = scmp.lt.s32.totalorder %s211, 15
        %s213 = scalar_select %p212, %s211, 15
        %p214 = scmp.lt.s32.totalorder %s20, 0
        %s215 = scalar_select %p214, %s20, 0
        %s216 = sadd.s32 %s215, %s213
        %s217 = smul.addr %s216, 4
        %s218 = scalar_lea.vmem %s0, %s217
        %s219 = smul.u32 8, %s19
      $region28: #{intra_gcn_forward.8} parent=23 // pred_fallthru
        _
      // Predicated region
      $region29: #{intra_gcn_forward.8} parent=23 // pred_check
        %p220 = pneg %p98
      $region30: #{intra_gcn_forward.8} parent=23 // pred_check_branch
        %222 = sbr.rel (%p220) target = $region32
      $region31: #{intra_gcn_forward.8} parent=23 // pred_region
        %s223 = smul.u32 8, %s19
        %p224 = scmp.lt.s32.totalorder %s223, 15
        %s225 = scalar_select %p224, %s223, 15
        %s226 = smul.addr %s225, 4
        %s227 = scalar_lea.vmem %s2, %s226
        %s228 = smul.u32 8, %s19
      $region32: #{intra_gcn_forward.8} parent=23 // pred_fallthru
        _
    $region24: #{intra_gcn_forward.8} parent=5 // pred_fallthru
      _
    %p229 = scmp.le.s32.totalorder 1, %s12
    %p230 = scmp.lt.s32.totalorder %s12, 3
    %p231 = pnand %p229, %p230
    %p232 = pneg %p231
    // Predicated region
    $region33: #{intra_gcn_forward.8} parent=5 // pred_check
      _
    $region34: #{intra_gcn_forward.8} parent=5 // pred_check_branch
      %234 = sbr.rel (%p231) target = $region36
    $region35: #{intra_gcn_forward.8} parent=5 // pred_region
      %s235 = ssub.s32 %s12, 1
      %s236 = smul.u32 8, %s21
      %p237 = scmp.lt.s32.totalorder %s236, 15
      %s238 = scalar_select %p237, %s236, 15
      %p239 = scmp.lt.s32.totalorder %s22, 0
      %s240 = scalar_select %p239, %s22, 0
      %s241 = sadd.s32 %s240, %s238
      %s242 = smul.addr %s241, 4
      %s243 = scalar_lea.vmem %s0, %s242
      %p244 = pneg %p52
      %p245 = pneg %p49
      %s246 = smul.u32 16, %s22
      %p247 = scmp.lt.s32.totalorder %s246, 15
      %s248 = scalar_select %p247, %s246, 15
      %s249 = smul.addr %s248, 4
      %s250 = scalar_lea.vmem %s1, %s249
      %p251 = pneg %p78
      %p252 = pneg %p75
      %s253 = smul.u32 8, %s21
      %p254 = scmp.lt.s32.totalorder %s253, 15
      %s255 = scalar_select %p254, %s253, 15
      %s256 = smul.addr %s255, 4
      %s257 = scalar_lea.vmem %s2, %s256
      %p258 = pneg %p104
      %p259 = pneg %p101
      %p260 = pneg %p125
      %p261 = pneg %p122
      %p262 = pneg %p151
      %p263 = pneg %p148
      %s264 = smul.u32 8, %s21
      %p265 = scmp.lt.s32.totalorder %s264, 15
      %s266 = scalar_select %p265, %s264, 15
      %s267 = smul.addr %s266, 4
      %s268 = scalar_lea.vmem %s4, %s267
      %p269 = pneg %p177
      %p270 = pneg %p174
      %s271 = smul.u32 8, %s21
      %p272 = scmp.lt.s32.totalorder %s271, 15
      %s273 = scalar_select %p272, %s271, 15
      %s274 = smul.addr %s273, 8
      %s275 = scalar_lea.vmem %s5, %s274
      %s276 = smul.u32 8, %s21
      %p277 = scmp.lt.s32.totalorder %s276, 15
      %s278 = scalar_select %p277, %s276, 15
      %p279 = scmp.lt.s32.totalorder %s22, 0
      %s280 = scalar_select %p279, %s22, 0
      %s281 = sadd.s32 %s280, %s278
      %s282 = smul.addr %s281, 4
      %s283 = scalar_lea.vmem %s0, %s282
      %s284 = smul.u32 8, %s21
      %s285 = smul.u32 16, %s22
      %p286 = scmp.lt.s32.totalorder %s285, 15
      %s287 = scalar_select %p286, %s285, 15
      %s288 = smul.addr %s287, 4
      %s289 = scalar_lea.vmem %s1, %s288
      %s290 = smul.u32 16, %s22
      %s291 = smul.u32 8, %s21
      %p292 = scmp.lt.s32.totalorder %s291, 15
      %s293 = scalar_select %p292, %s291, 15
      %s294 = smul.addr %s293, 4
      %s295 = scalar_lea.vmem %s2, %s294
      %s296 = smul.u32 8, %s21
      %s297 = smul.u32 8, %s21
      %p298 = scmp.lt.s32.totalorder %s297, 15
      %s299 = scalar_select %p298, %s297, 15
      %s300 = smul.addr %s299, 4
      %s301 = scalar_lea.vmem %s4, %s300
      %s302 = smul.u32 8, %s21
      %s303 = smul.u32 8, %s21
      %p304 = scmp.lt.s32.totalorder %s303, 15
      %s305 = scalar_select %p304, %s303, 15
      %s306 = smul.addr %s305, 8
      %s307 = scalar_lea.vmem %s5, %s306
      %s308 = smul.u32 8, %s21
      %p309 = scmp.eq.s32.totalorder %s22, 0
      // Predicated region
      $region37: #{intra_gcn_forward.8} parent=35 // pred_check
        %p310 = pneg %p309
      $region38: #{intra_gcn_forward.8} parent=35 // pred_check_branch
        %312 = sbr.rel (%p310) target = $region40
      $region39: #{intra_gcn_forward.8} parent=35 // pred_region
        %vm313 = vcmask 7168
        %314 = vst.msk [vmem:[#allocation2] sm:$0xff] %vm313, -1e+30
        %315 = vst.msk [vmem:[#allocation2 + $0x8] sm:$0xff] %vm313, -1e+30
        %316 = vst.msk [vmem:[#allocation2 + $0x10] sm:$0xff] %vm313, -1e+30
        %317 = vst.msk [vmem:[#allocation2 + $0x18] sm:$0xff] %vm313, -1e+30
        %318 = vst.msk [vmem:[#allocation2 + $0x20] sm:$0xff] %vm313, -1e+30
        %319 = vst.msk [vmem:[#allocation2 + $0x28] sm:$0xff] %vm313, -1e+30
        %320 = vst.msk [vmem:[#allocation2 + $0x30] sm:$0xff] %vm313, -1e+30
        %321 = vst.msk [vmem:[#allocation2 + $0x38] sm:$0xff] %vm313, -1e+30
        %322 = vst.msk [vmem:[#allocation3] sm:$0xff] %vm313, 0.0
        %323 = vst.msk [vmem:[#allocation3 + $0x8] sm:$0xff] %vm313, 0.0
        %324 = vst.msk [vmem:[#allocation3 + $0x10] sm:$0xff] %vm313, 0.0
        %325 = vst.msk [vmem:[#allocation3 + $0x18] sm:$0xff] %vm313, 0.0
        %326 = vst.msk [vmem:[#allocation3 + $0x20] sm:$0xff] %vm313, 0.0
        %327 = vst.msk [vmem:[#allocation3 + $0x28] sm:$0xff] %vm313, 0.0
        %328 = vst.msk [vmem:[#allocation3 + $0x30] sm:$0xff] %vm313, 0.0
        %329 = vst.msk [vmem:[#allocation3 + $0x38] sm:$0xff] %vm313, 0.0
        %330 = vst [vmem:[#allocation4] sm:$0xff] 0.0
        %331 = vst [vmem:[#allocation4 + $0x8] sm:$0xff] 0.0
        %332 = vst [vmem:[#allocation4 + $0x10] sm:$0xff] 0.0
        %333 = vst [vmem:[#allocation4 + $0x18] sm:$0xff] 0.0
        %334 = vst [vmem:[#allocation4 + $0x20] sm:$0xff] 0.0
        %335 = vst [vmem:[#allocation4 + $0x28] sm:$0xff] 0.0
        %336 = vst [vmem:[#allocation4 + $0x30] sm:$0xff] 0.0
        %337 = vst [vmem:[#allocation4 + $0x38] sm:$0xff] 0.0
      $region40: #{intra_gcn_forward.8} parent=35 // pred_fallthru
        _
      %v338 = vld [vmem:[%s289] sm:$0xf]
      %v339 = vld [vmem:[%s289 + $0x4] sm:$0xf]
      %v340 = vld [vmem:[%s289 + $0x8] sm:$0xf]
      %v341 = vld [vmem:[%s289 + $0xc] sm:$0xf]
      %v342 = vld [vmem:[%s289 + $0x10] sm:$0xf]
      %v343 = vld [vmem:[%s289 + $0x14] sm:$0xf]
      %v344 = vld [vmem:[%s289 + $0x18] sm:$0xf]
      %v345 = vld [vmem:[%s289 + $0x1c] sm:$0xf]
      %v346 = vld [vmem:[%s289 + $0x20] sm:$0xf]
      %v347 = vld [vmem:[%s289 + $0x24] sm:$0xf]
      %v348 = vld [vmem:[%s289 + $0x28] sm:$0xf]
      %v349 = vld [vmem:[%s289 + $0x2c] sm:$0xf]
      %v350 = vld [vmem:[%s289 + $0x30] sm:$0xf]
      %v351 = vld [vmem:[%s289 + $0x34] sm:$0xf]
      %v352 = vld [vmem:[%s289 + $0x38] sm:$0xf]
      %v353 = vld [vmem:[%s289 + $0x3c] sm:$0xf]
      %v354 = vld [vmem:[%s295] sm:$0xf]
      %v355 = vld [vmem:[%s295 + $0x4] sm:$0xf]
      %v356 = vld [vmem:[%s295 + $0x8] sm:$0xf]
      %v357 = vld [vmem:[%s295 + $0xc] sm:$0xf]
      %v358 = vld [vmem:[%s295 + $0x10] sm:$0xf]
      %v359 = vld [vmem:[%s295 + $0x14] sm:$0xf]
      %v360 = vld [vmem:[%s295 + $0x18] sm:$0xf]
      %v361 = vld [vmem:[%s295 + $0x1c] sm:$0xf]
      %v362 = vunpack.c.l.bf16 %v354
      %v363 = vunpack.c.l.bf16 %v355
      %v364 = vunpack.c.l.bf16 %v356
      %v365 = vunpack.c.l.bf16 %v357
      %v366 = vunpack.c.l.bf16 %v358
      %v367 = vunpack.c.l.bf16 %v359
      %v368 = vunpack.c.l.bf16 %v360
      %v369 = vunpack.c.l.bf16 %v361
      %v370 = vld [vmem:[%s3] sm:$0x1]
      %v371 = vpack.c.bf16 %v370, %v370
      %v388 = vunpack.c.l.b16 %v338
      %v389 = vunpack.c.l.b16 %v339
      %v390 = vunpack.c.l.b16 %v340
      %v391 = vunpack.c.l.b16 %v341
      %v392 = vunpack.c.l.b16 %v342
      %v393 = vunpack.c.l.b16 %v343
      %v394 = vunpack.c.l.b16 %v344
      %v395 = vunpack.c.l.b16 %v345
      %v396 = vunpack.c.l.b16 %v346
      %v397 = vunpack.c.l.b16 %v347
      %v398 = vunpack.c.l.b16 %v348
      %v399 = vunpack.c.l.b16 %v349
      %v400 = vunpack.c.l.b16 %v350
      %v401 = vunpack.c.l.b16 %v351
      %v402 = vunpack.c.l.b16 %v352
      %v403 = vunpack.c.l.b16 %v353
      %v404 = vpack.c.b16 %v389, %v388
      %v405 = vpack.c.b16 %v391, %v390
      %v406 = vpack.c.b16 %v393, %v392
      %v407 = vpack.c.b16 %v395, %v394
      %v408 = vpack.c.b16 %v397, %v396
      %v409 = vpack.c.b16 %v399, %v398
      %v410 = vpack.c.b16 %v401, %v400
      %v411 = vpack.c.b16 %v403, %v402
      %420 = vmatpush.bf16.xpose.msra.mxu0 %v411
      %421 = vmatpush.bf16.xpose.msra.mxu0 %v410
      %422 = vmatpush.bf16.xpose.msra.mxu0 %v409
      %423 = vmatpush.bf16.xpose.msra.mxu0 %v408
      %424 = vmatpush.bf16.xpose.msra.mxu0 %v407
      %425 = vmatpush.bf16.xpose.msra.mxu0 %v406
      %426 = vmatpush.bf16.xpose.msra.mxu0 %v405
      %427 = vmatpush.bf16.xpose.msra.mxu0 %v404
      %428 = vmatmul.bf16.gmra.mxu0 %v371
      %v429 = vpop.f32.mrf.mxu0
      %v430 = vadd.f32 0.0, %v429
      %v431 = vpop.f32.mrf.mxu0
      %432 = vdwg.mxu0
      %v433 = vlaneseq
      %v434 = vshrl.u32 %v433, 7
      %v435 = vadd.s32 %v434, 8
      %v436 = vadd.s32 %v434, 16
      %v437 = vadd.s32 %v434, 24
      %v438 = vadd.s32 %v434, 32
      %v439 = vadd.s32 %v434, 40
      %v440 = vadd.s32 %v434, 48
      %v441 = vadd.s32 %v434, 56
      %s442 = smul.u32 %s21, 64
      %v443 = vstv %s442
      %v444 = vadd.s32 %v434, %v443
      %v445 = vadd.s32 %v435, %v443
      %v446 = vadd.s32 %v436, %v443
      %v447 = vadd.s32 %v437, %v443
      %v448 = vadd.s32 %v438, %v443
      %v449 = vadd.s32 %v439, %v443
      %v450 = vadd.s32 %v440, %v443
      %v451 = vadd.s32 %v441, %v443
      %v452 = vlaneseq
      %v453 = vand.u32 %v452, 127
      %s454 = smul.u32 %s22, 128
      %v455 = vstv %s454
      %v456 = vadd.s32 %v453, %v455
      %vm457 = vcmp.eq.s32.totalorder %v444, %v456
      %vm458 = vcmp.eq.s32.totalorder %v445, %v456
      %vm459 = vcmp.eq.s32.totalorder %v446, %v456
      %vm460 = vcmp.eq.s32.totalorder %v447, %v456
      %vm461 = vcmp.eq.s32.totalorder %v448, %v456
      %vm462 = vcmp.eq.s32.totalorder %v449, %v456
      %vm463 = vcmp.eq.s32.totalorder %v450, %v456
      %vm464 = vcmp.eq.s32.totalorder %v451, %v456
      %v465 = vld [vmem:[%s283] sm:$0xf]
      %v466 = vld [vmem:[%s283 + $0x4] sm:$0xf]
      %v467 = vld [vmem:[%s283 + $0x8] sm:$0xf]
      %v468 = vld [vmem:[%s283 + $0xc] sm:$0xf]
      %v469 = vld [vmem:[%s283 + $0x10] sm:$0xf]
      %v470 = vld [vmem:[%s283 + $0x14] sm:$0xf]
      %v471 = vld [vmem:[%s283 + $0x18] sm:$0xf]
      %v472 = vld [vmem:[%s283 + $0x1c] sm:$0xf]
      %v473 = vunpack.c.l.bf16 %v465
      %v474 = vunpack.c.l.bf16 %v466
      %v475 = vunpack.c.l.bf16 %v467
      %v476 = vunpack.c.l.bf16 %v468
      %v477 = vunpack.c.l.bf16 %v469
      %v478 = vunpack.c.l.bf16 %v470
      %v479 = vunpack.c.l.bf16 %v471
      %v480 = vunpack.c.l.bf16 %v472
      %v481 = vsel %vm457, 1.0, %v473
      %v482 = vsel %vm458, 1.0, %v474
      %v483 = vsel %vm459, 1.0, %v475
      %v484 = vsel %vm460, 1.0, %v476
      %v485 = vsel %vm461, 1.0, %v477
      %v486 = vsel %vm462, 1.0, %v478
      %v487 = vsel %vm463, 1.0, %v479
      %v488 = vsel %vm464, 1.0, %v480
      %490 = vset.pattern.permute.xlu0 32
      %491 = vperm.xlu0 %490, %v362
      %v492 = vpop.permute.xlu0 %491
      %495 = vset.pattern.permute.xlu0 32
      %496 = vperm.xlu0 %495, %v363
      %v497 = vpop.permute.xlu0 %496
      %500 = vset.pattern.permute.xlu0 32
      %501 = vperm.xlu0 %500, %v364
      %v502 = vpop.permute.xlu0 %501
      %505 = vset.pattern.permute.xlu0 32
      %506 = vperm.xlu0 %505, %v365
      %v507 = vpop.permute.xlu0 %506
      %510 = vset.pattern.permute.xlu0 32
      %511 = vperm.xlu0 %510, %v366
      %v512 = vpop.permute.xlu0 %511
      %515 = vset.pattern.permute.xlu0 32
      %516 = vperm.xlu0 %515, %v367
      %v517 = vpop.permute.xlu0 %516
      %520 = vset.pattern.permute.xlu0 32
      %521 = vperm.xlu0 %520, %v368
      %v522 = vpop.permute.xlu0 %521
      %525 = vset.pattern.permute.xlu0 32
      %526 = vperm.xlu0 %525, %v369
      %v527 = vpop.permute.xlu0 %526
      %v529 = vperm.slane %v430, 0
      %v530 = vadd.f32 %v492, %v529
      %v531 = vadd.f32 %v497, %v529
      %v532 = vadd.f32 %v502, %v529
      %v533 = vadd.f32 %v507, %v529
      %v534 = vadd.f32 %v512, %v529
      %v535 = vadd.f32 %v517, %v529
      %v536 = vadd.f32 %v522, %v529
      %v537 = vadd.f32 %v527, %v529
      %vm538 = vcmp.gt.f32.partialorder %v530, 0.0
      %vm539 = vcmp.gt.f32.partialorder %v531, 0.0
      %vm540 = vcmp.gt.f32.partialorder %v532, 0.0
      %vm541 = vcmp.gt.f32.partialorder %v533, 0.0
      %vm542 = vcmp.gt.f32.partialorder %v534, 0.0
      %vm543 = vcmp.gt.f32.partialorder %v535, 0.0
      %vm544 = vcmp.gt.f32.partialorder %v536, 0.0
      %vm545 = vcmp.gt.f32.partialorder %v537, 0.0
      %v546 = vmul.f32 %v530, 0.2
      %v547 = vmul.f32 %v531, 0.2
      %v548 = vmul.f32 %v532, 0.2
      %v549 = vmul.f32 %v533, 0.2
      %v550 = vmul.f32 %v534, 0.2
      %v551 = vmul.f32 %v535, 0.2
      %v552 = vmul.f32 %v536, 0.2
      %v553 = vmul.f32 %v537, 0.2
      %v554 = vsel %vm538, %v530, %v546
      %v555 = vsel %vm539, %v531, %v547
      %v556 = vsel %vm540, %v532, %v548
      %v557 = vsel %vm541, %v533, %v549
      %v558 = vsel %vm542, %v534, %v550
      %v559 = vsel %vm543, %v535, %v551
      %v560 = vsel %vm544, %v536, %v552
      %v561 = vsel %vm545, %v537, %v553
      %vm562 = vcmp.gt.f32.partialorder %v481, 0.0
      %vm563 = vcmp.gt.f32.partialorder %v482, 0.0
      %vm564 = vcmp.gt.f32.partialorder %v483, 0.0
      %vm565 = vcmp.gt.f32.partialorder %v484, 0.0
      %vm566 = vcmp.gt.f32.partialorder %v485, 0.0
      %vm567 = vcmp.gt.f32.partialorder %v486, 0.0
      %vm568 = vcmp.gt.f32.partialorder %v487, 0.0
      %vm569 = vcmp.gt.f32.partialorder %v488, 0.0
      %v570 = vsel %vm562, %v554, -1e+30
      %v571 = vsel %vm563, %v555, -1e+30
      %v572 = vsel %vm564, %v556, -1e+30
      %v573 = vsel %vm565, %v557, -1e+30
      %v574 = vsel %vm566, %v558, -1e+30
      %v575 = vsel %vm567, %v559, -1e+30
      %v576 = vsel %vm568, %v560, -1e+30
      %v577 = vsel %vm569, %v561, -1e+30
      %v578 = vld [vmem:[#allocation2] sm:$0xff]
      %v579 = vld [vmem:[#allocation2 + $0x8] sm:$0xff]
      %v580 = vld [vmem:[#allocation2 + $0x10] sm:$0xff]
      %v581 = vld [vmem:[#allocation2 + $0x18] sm:$0xff]
      %v582 = vld [vmem:[#allocation2 + $0x20] sm:$0xff]
      %v583 = vld [vmem:[#allocation2 + $0x28] sm:$0xff]
      %v584 = vld [vmem:[#allocation2 + $0x30] sm:$0xff]
      %v585 = vld [vmem:[#allocation2 + $0x38] sm:$0xff]
      %586 = vmax.xlane.f32.xlu0 %v570
      %v587 = vpop.xlane.xlu0 %586
      %588 = vmax.xlane.f32.xlu0 %v571
      %v589 = vpop.xlane.xlu0 %588
      %590 = vmax.xlane.f32.xlu0 %v572
      %v591 = vpop.xlane.xlu0 %590
      %592 = vmax.xlane.f32.xlu0 %v573
      %v593 = vpop.xlane.xlu0 %592
      %594 = vmax.xlane.f32.xlu0 %v574
      %v595 = vpop.xlane.xlu0 %594
      %596 = vmax.xlane.f32.xlu0 %v575
      %v597 = vpop.xlane.xlu0 %596
      %598 = vmax.xlane.f32.xlu0 %v576
      %v599 = vpop.xlane.xlu0 %598
      %600 = vmax.xlane.f32.xlu0 %v577
      %v601 = vpop.xlane.xlu0 %600
      %v602 = vmax.f32 %v578, %v587
      %v603 = vmax.f32 %v579, %v589
      %v604 = vmax.f32 %v580, %v591
      %v605 = vmax.f32 %v581, %v593
      %v606 = vmax.f32 %v582, %v595
      %v607 = vmax.f32 %v583, %v597
      %v608 = vmax.f32 %v584, %v599
      %v609 = vmax.f32 %v585, %v601
      %v610 = vsub.f32 %v578, %v602
      %v611 = vsub.f32 %v579, %v603
      %v612 = vsub.f32 %v580, %v604
      %v613 = vsub.f32 %v581, %v605
      %v614 = vsub.f32 %v582, %v606
      %v615 = vsub.f32 %v583, %v607
      %v616 = vsub.f32 %v584, %v608
      %v617 = vsub.f32 %v585, %v609
      %v618 = vmul.f32 %v610, 1.442695
      %v619 = vpow.pop %v618
      %v620 = vmul.f32 %v611, 1.442695
      %v621 = vpow.pop %v620
      %v622 = vmul.f32 %v612, 1.442695
      %v623 = vpow.pop %v622
      %v624 = vmul.f32 %v613, 1.442695
      %v625 = vpow.pop %v624
      %v626 = vmul.f32 %v614, 1.442695
      %v627 = vpow.pop %v626
      %v628 = vmul.f32 %v615, 1.442695
      %v629 = vpow.pop %v628
      %v630 = vmul.f32 %v616, 1.442695
      %v631 = vpow.pop %v630
      %v632 = vmul.f32 %v617, 1.442695
      %v633 = vpow.pop %v632
      %635 = vset.pattern.permute.xlu0 0
      %636 = vperm.xlu0 %635, %v602
      %v637 = vpop.permute.xlu0 %636
      %640 = vset.pattern.permute.xlu0 0
      %641 = vperm.xlu0 %640, %v603
      %v642 = vpop.permute.xlu0 %641
      %645 = vset.pattern.permute.xlu0 0
      %646 = vperm.xlu0 %645, %v604
      %v647 = vpop.permute.xlu0 %646
      %650 = vset.pattern.permute.xlu0 0
      %651 = vperm.xlu0 %650, %v605
      %v652 = vpop.permute.xlu0 %651
      %655 = vset.pattern.permute.xlu0 0
      %656 = vperm.xlu0 %655, %v606
      %v657 = vpop.permute.xlu0 %656
      %660 = vset.pattern.permute.xlu0 0
      %661 = vperm.xlu0 %660, %v607
      %v662 = vpop.permute.xlu0 %661
      %665 = vset.pattern.permute.xlu0 0
      %666 = vperm.xlu0 %665, %v608
      %v667 = vpop.permute.xlu0 %666
      %670 = vset.pattern.permute.xlu0 0
      %671 = vperm.xlu0 %670, %v609
      %v672 = vpop.permute.xlu0 %671
      %v674 = vsub.f32 %v570, %v637
      %v675 = vsub.f32 %v571, %v642
      %v676 = vsub.f32 %v572, %v647
      %v677 = vsub.f32 %v573, %v652
      %v678 = vsub.f32 %v574, %v657
      %v679 = vsub.f32 %v575, %v662
      %v680 = vsub.f32 %v576, %v667
      %v681 = vsub.f32 %v577, %v672
      %v682 = vmul.f32 %v674, 1.442695
      %v683 = vpow.pop %v682
      %v684 = vmul.f32 %v675, 1.442695
      %v685 = vpow.pop %v684
      %v686 = vmul.f32 %v676, 1.442695
      %v687 = vpow.pop %v686
      %v688 = vmul.f32 %v677, 1.442695
      %v689 = vpow.pop %v688
      %v690 = vmul.f32 %v678, 1.442695
      %v691 = vpow.pop %v690
      %v692 = vmul.f32 %v679, 1.442695
      %v693 = vpow.pop %v692
      %v694 = vmul.f32 %v680, 1.442695
      %v695 = vpow.pop %v694
      %v696 = vmul.f32 %v681, 1.442695
      %v697 = vpow.pop %v696
      %v698 = vmul.f32 %v683, %v481
      %v699 = vmul.f32 %v685, %v482
      %v700 = vmul.f32 %v687, %v483
      %v701 = vmul.f32 %v689, %v484
      %v702 = vmul.f32 %v691, %v485
      %v703 = vmul.f32 %v693, %v486
      %v704 = vmul.f32 %v695, %v487
      %v705 = vmul.f32 %v697, %v488
      %v706 = vld [vmem:[#allocation3] sm:$0xff]
      %v707 = vld [vmem:[#allocation3 + $0x8] sm:$0xff]
      %v708 = vld [vmem:[#allocation3 + $0x10] sm:$0xff]
      %v709 = vld [vmem:[#allocation3 + $0x18] sm:$0xff]
      %v710 = vld [vmem:[#allocation3 + $0x20] sm:$0xff]
      %v711 = vld [vmem:[#allocation3 + $0x28] sm:$0xff]
      %v712 = vld [vmem:[#allocation3 + $0x30] sm:$0xff]
      %v713 = vld [vmem:[#allocation3 + $0x38] sm:$0xff]
      %v714 = vmul.f32 %v619, %v706
      %v715 = vmul.f32 %v621, %v707
      %v716 = vmul.f32 %v623, %v708
      %v717 = vmul.f32 %v625, %v709
      %v718 = vmul.f32 %v627, %v710
      %v719 = vmul.f32 %v629, %v711
      %v720 = vmul.f32 %v631, %v712
      %v721 = vmul.f32 %v633, %v713
      %722 = vadd.xlane.f32.xlu0 %v698
      %v723 = vpop.xlane.xlu0 %722
      %724 = vadd.xlane.f32.xlu0 %v699
      %v725 = vpop.xlane.xlu0 %724
      %726 = vadd.xlane.f32.xlu0 %v700
      %v727 = vpop.xlane.xlu0 %726
      %728 = vadd.xlane.f32.xlu0 %v701
      %v729 = vpop.xlane.xlu0 %728
      %730 = vadd.xlane.f32.xlu0 %v702
      %v731 = vpop.xlane.xlu0 %730
      %732 = vadd.xlane.f32.xlu0 %v703
      %v733 = vpop.xlane.xlu0 %732
      %734 = vadd.xlane.f32.xlu0 %v704
      %v735 = vpop.xlane.xlu0 %734
      %736 = vadd.xlane.f32.xlu0 %v705
      %v737 = vpop.xlane.xlu0 %736
      %v738 = vadd.f32 %v714, %v723
      %v739 = vadd.f32 %v715, %v725
      %v740 = vadd.f32 %v716, %v727
      %v741 = vadd.f32 %v717, %v729
      %v742 = vadd.f32 %v718, %v731
      %v743 = vadd.f32 %v719, %v733
      %v744 = vadd.f32 %v720, %v735
      %v745 = vadd.f32 %v721, %v737
      %vm746 = vcmask 7168
      %747 = vst.msk [vmem:[#allocation3] sm:$0xff] %vm746, %v738
      %748 = vst.msk [vmem:[#allocation3 + $0x8] sm:$0xff] %vm746, %v739
      %749 = vst.msk [vmem:[#allocation3 + $0x10] sm:$0xff] %vm746, %v740
      %750 = vst.msk [vmem:[#allocation3 + $0x18] sm:$0xff] %vm746, %v741
      %751 = vst.msk [vmem:[#allocation3 + $0x20] sm:$0xff] %vm746, %v742
      %752 = vst.msk [vmem:[#allocation3 + $0x28] sm:$0xff] %vm746, %v743
      %753 = vst.msk [vmem:[#allocation3 + $0x30] sm:$0xff] %vm746, %v744
      %754 = vst.msk [vmem:[#allocation3 + $0x38] sm:$0xff] %vm746, %v745
      %v755 = vld [vmem:[#allocation4] sm:$0xff]
      %v756 = vld [vmem:[#allocation4 + $0x8] sm:$0xff]
      %v757 = vld [vmem:[#allocation4 + $0x10] sm:$0xff]
      %v758 = vld [vmem:[#allocation4 + $0x18] sm:$0xff]
      %v759 = vld [vmem:[#allocation4 + $0x20] sm:$0xff]
      %v760 = vld [vmem:[#allocation4 + $0x28] sm:$0xff]
      %v761 = vld [vmem:[#allocation4 + $0x30] sm:$0xff]
      %v762 = vld [vmem:[#allocation4 + $0x38] sm:$0xff]
      %764 = vset.pattern.permute.xlu0 0
      %765 = vperm.xlu0 %764, %v619
      %v766 = vpop.permute.xlu0 %765
      %769 = vset.pattern.permute.xlu0 0
      %770 = vperm.xlu0 %769, %v621
      %v771 = vpop.permute.xlu0 %770
      %774 = vset.pattern.permute.xlu0 0
      %775 = vperm.xlu0 %774, %v623
      %v776 = vpop.permute.xlu0 %775
      %779 = vset.pattern.permute.xlu0 0
      %780 = vperm.xlu0 %779, %v625
      %v781 = vpop.permute.xlu0 %780
      %784 = vset.pattern.permute.xlu0 0
      %785 = vperm.xlu0 %784, %v627
      %v786 = vpop.permute.xlu0 %785
      %789 = vset.pattern.permute.xlu0 0
      %790 = vperm.xlu0 %789, %v629
      %v791 = vpop.permute.xlu0 %790
      %794 = vset.pattern.permute.xlu0 0
      %795 = vperm.xlu0 %794, %v631
      %v796 = vpop.permute.xlu0 %795
      %799 = vset.pattern.permute.xlu0 0
      %800 = vperm.xlu0 %799, %v633
      %v801 = vpop.permute.xlu0 %800
      %v803 = vmul.f32 %v766, %v755
      %v804 = vmul.f32 %v771, %v756
      %v805 = vmul.f32 %v776, %v757
      %v806 = vmul.f32 %v781, %v758
      %v807 = vmul.f32 %v786, %v759
      %v808 = vmul.f32 %v791, %v760
      %v809 = vmul.f32 %v796, %v761
      %v810 = vmul.f32 %v801, %v762
      %v811 = vpack.c.bf16 %v699, %v698
      %v812 = vpack.c.bf16 %v701, %v700
      %v813 = vpack.c.bf16 %v703, %v702
      %v814 = vpack.c.bf16 %v705, %v704
      %815 = vmatpush.bf16.msra.mxu0 %v411
      %816 = vmatpush.bf16.msra.mxu0 %v410
      %817 = vmatpush.bf16.msra.mxu0 %v409
      %818 = vmatpush.bf16.msra.mxu0 %v408
      %819 = vmatpush.bf16.msra.mxu0 %v407
      %820 = vmatpush.bf16.msra.mxu0 %v406
      %821 = vmatpush.bf16.msra.mxu0 %v405
      %822 = vmatpush.bf16.msra.mxu0 %v404
      %823 = vmatmul.bf16.gmra.mxu0 %v811
      %v824 = vpop.f32.mrf.mxu0
      %v825 = vadd.f32 0.0, %v824
      %v826 = vpop.f32.mrf.mxu0
      %v827 = vadd.f32 0.0, %v826
      %828 = vmatmul.bf16.gmra.mxu0 %v812
      %v829 = vpop.f32.mrf.mxu0
      %v830 = vadd.f32 0.0, %v829
      %v831 = vpop.f32.mrf.mxu0
      %v832 = vadd.f32 0.0, %v831
      %833 = vmatmul.bf16.gmra.mxu0 %v813
      %v834 = vpop.f32.mrf.mxu0
      %v835 = vadd.f32 0.0, %v834
      %v836 = vpop.f32.mrf.mxu0
      %v837 = vadd.f32 0.0, %v836
      %838 = vmatmul.bf16.gmra.mxu0 %v814
      %v839 = vpop.f32.mrf.mxu0
      %v840 = vadd.f32 0.0, %v839
      %v841 = vpop.f32.mrf.mxu0
      %v842 = vadd.f32 0.0, %v841
      %843 = vdwg.mxu0
      %v844 = vadd.f32 %v803, %v825
      %v845 = vadd.f32 %v804, %v827
      %v846 = vadd.f32 %v805, %v830
      %v847 = vadd.f32 %v806, %v832
      %v848 = vadd.f32 %v807, %v835
      %v849 = vadd.f32 %v808, %v837
      %v850 = vadd.f32 %v809, %v840
      %v851 = vadd.f32 %v810, %v842
      %852 = vst [vmem:[#allocation4] sm:$0xff] %v844
      %853 = vst [vmem:[#allocation4 + $0x8] sm:$0xff] %v845
      %854 = vst [vmem:[#allocation4 + $0x10] sm:$0xff] %v846
      %855 = vst [vmem:[#allocation4 + $0x18] sm:$0xff] %v847
      %856 = vst [vmem:[#allocation4 + $0x20] sm:$0xff] %v848
      %857 = vst [vmem:[#allocation4 + $0x28] sm:$0xff] %v849
      %858 = vst [vmem:[#allocation4 + $0x30] sm:$0xff] %v850
      %859 = vst [vmem:[#allocation4 + $0x38] sm:$0xff] %v851
      %860 = vst.msk [vmem:[#allocation2] sm:$0xff] %vm746, %v602
      %861 = vst.msk [vmem:[#allocation2 + $0x8] sm:$0xff] %vm746, %v603
      %862 = vst.msk [vmem:[#allocation2 + $0x10] sm:$0xff] %vm746, %v604
      %863 = vst.msk [vmem:[#allocation2 + $0x18] sm:$0xff] %vm746, %v605
      %864 = vst.msk [vmem:[#allocation2 + $0x20] sm:$0xff] %vm746, %v606
      %865 = vst.msk [vmem:[#allocation2 + $0x28] sm:$0xff] %vm746, %v607
      %866 = vst.msk [vmem:[#allocation2 + $0x30] sm:$0xff] %vm746, %v608
      %867 = vst.msk [vmem:[#allocation2 + $0x38] sm:$0xff] %vm746, %v609
      // Predicated region
      $region41: #{intra_gcn_forward.8} parent=35 // pred_check
        %p868 = pneg %p309
      $region42: #{intra_gcn_forward.8} parent=35 // pred_check_branch
        %870 = sbr.rel (%p868) target = $region44
      $region43: #{intra_gcn_forward.8} parent=35 // pred_region
        %v871 = vld [vmem:[#allocation3] sm:$0xff]
        %v872 = vld [vmem:[#allocation3 + $0x8] sm:$0xff]
        %v873 = vld [vmem:[#allocation3 + $0x10] sm:$0xff]
        %v874 = vld [vmem:[#allocation3 + $0x18] sm:$0xff]
        %v875 = vld [vmem:[#allocation3 + $0x20] sm:$0xff]
        %v876 = vld [vmem:[#allocation3 + $0x28] sm:$0xff]
        %v877 = vld [vmem:[#allocation3 + $0x30] sm:$0xff]
        %v878 = vld [vmem:[#allocation3 + $0x38] sm:$0xff]
        %v879 = vmax.f32 %v871, 1e-12
        %v880 = vmax.f32 %v872, 1e-12
        %v881 = vmax.f32 %v873, 1e-12
        %v882 = vmax.f32 %v874, 1e-12
        %v883 = vmax.f32 %v875, 1e-12
        %v884 = vmax.f32 %v876, 1e-12
        %v885 = vmax.f32 %v877, 1e-12
        %v886 = vmax.f32 %v878, 1e-12
        %v887 = vrcp.pop %v879
        %v888 = vrcp.pop %v880
        %v889 = vrcp.pop %v881
        %v890 = vrcp.pop %v882
        %v891 = vrcp.pop %v883
        %v892 = vrcp.pop %v884
        %v893 = vrcp.pop %v885
        %v894 = vrcp.pop %v886
        %v895 = vmul.f32 %v879, %v887
        %v896 = vmul.f32 %v880, %v888
        %v897 = vmul.f32 %v881, %v889
        %v898 = vmul.f32 %v882, %v890
        %v899 = vmul.f32 %v883, %v891
        %v900 = vmul.f32 %v884, %v892
        %v901 = vmul.f32 %v885, %v893
        %v902 = vmul.f32 %v886, %v894
        %v903 = vsub.f32 2.0, %v895
        %v904 = vsub.f32 2.0, %v896
        %v905 = vsub.f32 2.0, %v897
        %v906 = vsub.f32 2.0, %v898
        %v907 = vsub.f32 2.0, %v899
        %v908 = vsub.f32 2.0, %v900
        %v909 = vsub.f32 2.0, %v901
        %v910 = vsub.f32 2.0, %v902
        %v911 = vmul.f32 %v887, %v903
        %v912 = vmul.f32 %v888, %v904
        %v913 = vmul.f32 %v889, %v905
        %v914 = vmul.f32 %v890, %v906
        %v915 = vmul.f32 %v891, %v907
        %v916 = vmul.f32 %v892, %v908
        %v917 = vmul.f32 %v893, %v909
        %v918 = vmul.f32 %v894, %v910
        %vm919 = vcmp.gt.f32.partialorder %v871, 0.0
        %vm920 = vcmp.gt.f32.partialorder %v872, 0.0
        %vm921 = vcmp.gt.f32.partialorder %v873, 0.0
        %vm922 = vcmp.gt.f32.partialorder %v874, 0.0
        %vm923 = vcmp.gt.f32.partialorder %v875, 0.0
        %vm924 = vcmp.gt.f32.partialorder %v876, 0.0
        %vm925 = vcmp.gt.f32.partialorder %v877, 0.0
        %vm926 = vcmp.gt.f32.partialorder %v878, 0.0
        %v927 = vsel %vm919, %v911, 0.0
        %v928 = vsel %vm920, %v912, 0.0
        %v929 = vsel %vm921, %v913, 0.0
        %v930 = vsel %vm922, %v914, 0.0
        %v931 = vsel %vm923, %v915, 0.0
        %v932 = vsel %vm924, %v916, 0.0
        %v933 = vsel %vm925, %v917, 0.0
        %v934 = vsel %vm926, %v918, 0.0
        %v935 = vld [vmem:[#allocation4] sm:$0xff]
        %v936 = vld [vmem:[#allocation4 + $0x8] sm:$0xff]
        %v937 = vld [vmem:[#allocation4 + $0x10] sm:$0xff]
        %v938 = vld [vmem:[#allocation4 + $0x18] sm:$0xff]
        %v939 = vld [vmem:[#allocation4 + $0x20] sm:$0xff]
        %v940 = vld [vmem:[#allocation4 + $0x28] sm:$0xff]
        %v941 = vld [vmem:[#allocation4 + $0x30] sm:$0xff]
        %v942 = vld [vmem:[#allocation4 + $0x38] sm:$0xff]
        %944 = vset.pattern.permute.xlu0 0
        %945 = vperm.xlu0 %944, %v927
        %v946 = vpop.permute.xlu0 %945
        %949 = vset.pattern.permute.xlu0 0
        %950 = vperm.xlu0 %949, %v928
        %v951 = vpop.permute.xlu0 %950
        %954 = vset.pattern.permute.xlu0 0
        %955 = vperm.xlu0 %954, %v929
        %v956 = vpop.permute.xlu0 %955
        %959 = vset.pattern.permute.xlu0 0
        %960 = vperm.xlu0 %959, %v930
        %v961 = vpop.permute.xlu0 %960
        %964 = vset.pattern.permute.xlu0 0
        %965 = vperm.xlu0 %964, %v931
        %v966 = vpop.permute.xlu0 %965
        %969 = vset.pattern.permute.xlu0 0
        %970 = vperm.xlu0 %969, %v932
        %v971 = vpop.permute.xlu0 %970
        %974 = vset.pattern.permute.xlu0 0
        %975 = vperm.xlu0 %974, %v933
        %v976 = vpop.permute.xlu0 %975
        %979 = vset.pattern.permute.xlu0 0
        %980 = vperm.xlu0 %979, %v934
        %v981 = vpop.permute.xlu0 %980
        %v983 = vmul.f32 %v935, %v946
        %v984 = vmul.f32 %v936, %v951
        %v985 = vmul.f32 %v937, %v956
        %v986 = vmul.f32 %v938, %v961
        %v987 = vmul.f32 %v939, %v966
        %v988 = vmul.f32 %v940, %v971
        %v989 = vmul.f32 %v941, %v976
        %v990 = vmul.f32 %v942, %v981
        %v991 = vld [vmem:[%s3 + $0x8] sm:$0x1]
        %v992 = vperm.slane %v991, 0
        %v993 = vadd.f32 %v983, %v992
        %v994 = vadd.f32 %v984, %v992
        %v995 = vadd.f32 %v985, %v992
        %v996 = vadd.f32 %v986, %v992
        %v997 = vadd.f32 %v987, %v992
        %v998 = vadd.f32 %v988, %v992
        %v999 = vadd.f32 %v989, %v992
        %v1000 = vadd.f32 %v990, %v992
        %v1001 = vmax.f32 %v993, 0.0
        %v1002 = vmax.f32 %v994, 0.0
        %v1003 = vmax.f32 %v995, 0.0
        %v1004 = vmax.f32 %v996, 0.0
        %v1005 = vmax.f32 %v997, 0.0
        %v1006 = vmax.f32 %v998, 0.0
        %v1007 = vmax.f32 %v999, 0.0
        %v1008 = vmax.f32 %v1000, 0.0
        %v1009 = vld [vmem:[%s3 + $0x10] sm:$0xff]
        %v1010 = vld [vmem:[%s3 + $0x18] sm:$0xff]
        %v1011 = vld [vmem:[%s3 + $0x20] sm:$0xff]
        %v1012 = vld [vmem:[%s3 + $0x28] sm:$0xff]
        %v1013 = vld [vmem:[%s3 + $0x30] sm:$0xff]
        %v1014 = vld [vmem:[%s3 + $0x38] sm:$0xff]
        %v1015 = vld [vmem:[%s3 + $0x40] sm:$0xff]
        %v1016 = vld [vmem:[%s3 + $0x48] sm:$0xff]
        %v1017 = vld [vmem:[%s3 + $0x50] sm:$0xff]
        %v1018 = vld [vmem:[%s3 + $0x58] sm:$0xff]
        %v1019 = vld [vmem:[%s3 + $0x60] sm:$0xff]
        %v1020 = vld [vmem:[%s3 + $0x68] sm:$0xff]
        %v1021 = vld [vmem:[%s3 + $0x70] sm:$0xff]
        %v1022 = vld [vmem:[%s3 + $0x78] sm:$0xff]
        %v1023 = vld [vmem:[%s3 + $0x80] sm:$0xff]
        %v1024 = vld [vmem:[%s3 + $0x88] sm:$0xff]
        %1025 = vmatpush.msra.mxu0 %v1024
        %1026 = vmatpush.msra.mxu0 %v1023
        %1027 = vmatpush.msra.mxu0 %v1022
        %1028 = vmatpush.msra.mxu0 %v1021
        %1029 = vmatpush.msra.mxu0 %v1020
        %1030 = vmatpush.msra.mxu0 %v1019
        %1031 = vmatpush.msra.mxu0 %v1018
        %1032 = vmatpush.msra.mxu0 %v1017
        %1033 = vmatpush.msra.mxu0 %v1016
        %1034 = vmatpush.msra.mxu0 %v1015
        %1035 = vmatpush.msra.mxu0 %v1014
        %1036 = vmatpush.msra.mxu0 %v1013
        %1037 = vmatpush.msra.mxu0 %v1012
        %1038 = vmatpush.msra.mxu0 %v1011
        %1039 = vmatpush.msra.mxu0 %v1010
        %1040 = vmatpush.msra.mxu0 %v1009
        %1041 = vmatmul.f32.gmra.mxu0 %v1001
        %v1042 = vpop.f32.mrf.mxu0
        %v1043 = vadd.f32 0.0, %v1042
        %1044 = vmatmul.f32.gmra.mxu0 %v1002
        %v1045 = vpop.f32.mrf.mxu0
        %v1046 = vadd.f32 0.0, %v1045
        %1047 = vmatmul.f32.gmra.mxu0 %v1003
        %v1048 = vpop.f32.mrf.mxu0
        %v1049 = vadd.f32 0.0, %v1048
        %1050 = vmatmul.f32.gmra.mxu0 %v1004
        %v1051 = vpop.f32.mrf.mxu0
        %v1052 = vadd.f32 0.0, %v1051
        %1053 = vmatmul.f32.gmra.mxu0 %v1005
        %v1054 = vpop.f32.mrf.mxu0
        %v1055 = vadd.f32 0.0, %v1054
        %1056 = vmatmul.f32.gmra.mxu0 %v1006
        %v1057 = vpop.f32.mrf.mxu0
        %v1058 = vadd.f32 0.0, %v1057
        %1059 = vmatmul.f32.gmra.mxu0 %v1007
        %v1060 = vpop.f32.mrf.mxu0
        %v1061 = vadd.f32 0.0, %v1060
        %1062 = vmatmul.f32.gmra.mxu0 %v1008
        %v1063 = vpop.f32.mrf.mxu0
        %v1064 = vadd.f32 0.0, %v1063
        %1065 = vdwg.mxu0
        %v1066 = vpack.c.bf16 %v1043, %v1043
        %v1067 = vpack.c.bf16 %v1046, %v1046
        %v1068 = vpack.c.bf16 %v1049, %v1049
        %v1069 = vpack.c.bf16 %v1052, %v1052
        %v1070 = vpack.c.bf16 %v1055, %v1055
        %v1071 = vpack.c.bf16 %v1058, %v1058
        %v1072 = vpack.c.bf16 %v1061, %v1061
        %v1073 = vpack.c.bf16 %v1064, %v1064
        %1074 = vst [vmem:[%s301] sm:$0xf] %v1066
        %1075 = vst [vmem:[%s301 + $0x4] sm:$0xf] %v1067
        %1076 = vst [vmem:[%s301 + $0x8] sm:$0xf] %v1068
        %1077 = vst [vmem:[%s301 + $0xc] sm:$0xf] %v1069
        %1078 = vst [vmem:[%s301 + $0x10] sm:$0xf] %v1070
        %1079 = vst [vmem:[%s301 + $0x14] sm:$0xf] %v1071
        %1080 = vst [vmem:[%s301 + $0x18] sm:$0xf] %v1072
        %1081 = vst [vmem:[%s301 + $0x1c] sm:$0xf] %v1073
        %v1082 = vld [vmem:[%s3 + $0x90] sm:$0xff]
        %v1083 = vld [vmem:[%s3 + $0x98] sm:$0xff]
        %v1084 = vld [vmem:[%s3 + $0xa0] sm:$0xff]
        %v1085 = vld [vmem:[%s3 + $0xa8] sm:$0xff]
        %v1086 = vld [vmem:[%s3 + $0xb0] sm:$0xff]
        %v1087 = vld [vmem:[%s3 + $0xb8] sm:$0xff]
        %v1088 = vld [vmem:[%s3 + $0xc0] sm:$0xff]
        %v1089 = vld [vmem:[%s3 + $0xc8] sm:$0xff]
        %v1090 = vld [vmem:[%s3 + $0xd0] sm:$0xff]
        %v1091 = vld [vmem:[%s3 + $0xd8] sm:$0xff]
        %v1092 = vld [vmem:[%s3 + $0xe0] sm:$0xff]
        %v1093 = vld [vmem:[%s3 + $0xe8] sm:$0xff]
        %v1094 = vld [vmem:[%s3 + $0xf0] sm:$0xff]
        %v1095 = vld [vmem:[%s3 + $0xf8] sm:$0xff]
        %v1096 = vld [vmem:[%s3 + $0x100] sm:$0xff]
        %v1097 = vld [vmem:[%s3 + $0x108] sm:$0xff]
        %v1098 = vld [vmem:[%s3 + $0x110] sm:$0x1]
        %v1099 = vperm.slane %v1098, 0
        %1100 = vmatpush.msra.mxu0 %v1097
        %1101 = vmatpush.msra.mxu0 %v1096
        %1102 = vmatpush.msra.mxu0 %v1095
        %1103 = vmatpush.msra.mxu0 %v1094
        %1104 = vmatpush.msra.mxu0 %v1093
        %1105 = vmatpush.msra.mxu0 %v1092
        %1106 = vmatpush.msra.mxu0 %v1091
        %1107 = vmatpush.msra.mxu0 %v1090
        %1108 = vmatpush.msra.mxu0 %v1089
        %1109 = vmatpush.msra.mxu0 %v1088
        %1110 = vmatpush.msra.mxu0 %v1087
        %1111 = vmatpush.msra.mxu0 %v1086
        %1112 = vmatpush.msra.mxu0 %v1085
        %1113 = vmatpush.msra.mxu0 %v1084
        %1114 = vmatpush.msra.mxu0 %v1083
        %1115 = vmatpush.msra.mxu0 %v1082
        %1116 = vmatmul.f32.gmra.mxu0 %v1001
        %v1117 = vpop.f32.mrf.mxu0
        %v1118 = vadd.f32 %v1099, %v1117
        %1119 = vmatmul.f32.gmra.mxu0 %v1002
        %v1120 = vpop.f32.mrf.mxu0
        %v1121 = vadd.f32 %v1099, %v1120
        %1122 = vmatmul.f32.gmra.mxu0 %v1003
        %v1123 = vpop.f32.mrf.mxu0
        %v1124 = vadd.f32 %v1099, %v1123
        %1125 = vmatmul.f32.gmra.mxu0 %v1004
        %v1126 = vpop.f32.mrf.mxu0
        %v1127 = vadd.f32 %v1099, %v1126
        %1128 = vmatmul.f32.gmra.mxu0 %v1005
        %v1129 = vpop.f32.mrf.mxu0
        %v1130 = vadd.f32 %v1099, %v1129
        %1131 = vmatmul.f32.gmra.mxu0 %v1006
        %v1132 = vpop.f32.mrf.mxu0
        %v1133 = vadd.f32 %v1099, %v1132
        %1134 = vmatmul.f32.gmra.mxu0 %v1007
        %v1135 = vpop.f32.mrf.mxu0
        %v1136 = vadd.f32 %v1099, %v1135
        %1137 = vmatmul.f32.gmra.mxu0 %v1008
        %v1138 = vpop.f32.mrf.mxu0
        %v1139 = vadd.f32 %v1099, %v1138
        %1140 = vdwg.mxu0
        %1141 = vst [vmem:[%s307] sm:$0xff] %v1118
        %1142 = vst [vmem:[%s307 + $0x8] sm:$0xff] %v1121
        %1143 = vst [vmem:[%s307 + $0x10] sm:$0xff] %v1124
        %1144 = vst [vmem:[%s307 + $0x18] sm:$0xff] %v1127
        %1145 = vst [vmem:[%s307 + $0x20] sm:$0xff] %v1130
        %1146 = vst [vmem:[%s307 + $0x28] sm:$0xff] %v1133
        %1147 = vst [vmem:[%s307 + $0x30] sm:$0xff] %v1136
        %1148 = vst [vmem:[%s307 + $0x38] sm:$0xff] %v1139
      $region44: #{intra_gcn_forward.8} parent=35 // pred_fallthru
        _
      %s1149 = smul.u32 8, %s21
      %p1150 = scmp.lt.s32.totalorder %s1149, 15
      %s1151 = scalar_select %p1150, %s1149, 15
      %s1152 = smul.addr %s1151, 4
      %s1153 = scalar_lea.vmem %s4, %s1152
      %s1154 = smul.u32 8, %s21
      %p1155 = scmp.lt.s32.totalorder %s1154, 15
      %s1156 = scalar_select %p1155, %s1154, 15
      %s1157 = smul.addr %s1156, 8
      %s1158 = scalar_lea.vmem %s5, %s1157
      // Predicated region
      $region45: #{intra_gcn_forward.8} parent=35 // pred_check
        %p1159 = pneg %p148
      $region46: #{intra_gcn_forward.8} parent=35 // pred_check_branch
        %1161 = sbr.rel (%p1159) target = $region48
      $region47: #{intra_gcn_forward.8} parent=35 // pred_region
        %s1162 = smul.u32 8, %s21
      $region48: #{intra_gcn_forward.8} parent=35 // pred_fallthru
        _
      // Predicated region
      $region49: #{intra_gcn_forward.8} parent=35 // pred_check
        %p1163 = pneg %p174
      $region50: #{intra_gcn_forward.8} parent=35 // pred_check_branch
        %1165 = sbr.rel (%p1163) target = $region52
      $region51: #{intra_gcn_forward.8} parent=35 // pred_region
        %s1166 = smul.u32 8, %s21
      $region52: #{intra_gcn_forward.8} parent=35 // pred_fallthru
        _
    $region36: #{intra_gcn_forward.8} parent=5 // pred_fallthru
      _
    %p1167 = scmp.le.s32.totalorder 2, %s12
    // Predicated region
    $region53: #{intra_gcn_forward.8} parent=5 // pred_check
      %p1168 = pneg %p1167
    $region54: #{intra_gcn_forward.8} parent=5 // pred_check_branch
      %1170 = sbr.rel (%p1168) target = $region56
    $region55: #{intra_gcn_forward.8} parent=5 // pred_region
      %s1171 = ssub.s32 %s12, 2
      // Predicated region
      $region57: #{intra_gcn_forward.8} parent=55 // pred_check
        %p1172 = pneg %p154
      $region58: #{intra_gcn_forward.8} parent=55 // pred_check_branch
        %1174 = sbr.rel (%p1172) target = $region60
      $region59: #{intra_gcn_forward.8} parent=55 // pred_region
        %s1175 = smul.u32 8, %s23
        %p1176 = scmp.lt.s32.totalorder %s1175, 15
        %s1177 = scalar_select %p1176, %s1175, 15
        %s1178 = smul.addr %s1177, 4
        %s1179 = scalar_lea.vmem %s4, %s1178
      $region60: #{intra_gcn_forward.8} parent=55 // pred_fallthru
        _
      // Predicated region
      $region61: #{intra_gcn_forward.8} parent=55 // pred_check
        %p1180 = pneg %p180
      $region62: #{intra_gcn_forward.8} parent=55 // pred_check_branch
        %1182 = sbr.rel (%p1180) target = $region64
      $region63: #{intra_gcn_forward.8} parent=55 // pred_region
        %s1183 = smul.u32 8, %s23
        %p1184 = scmp.lt.s32.totalorder %s1183, 15
        %s1185 = scalar_select %p1184, %s1183, 15
        %s1186 = smul.addr %s1185, 8
        %s1187 = scalar_lea.vmem %s5, %s1186
      $region64: #{intra_gcn_forward.8} parent=55 // pred_fallthru
        _
    $region56: #{intra_gcn_forward.8} parent=5 // pred_fallthru
      _
  $region6: #{intra_gcn_forward.8} parent=0 // loop_footer
    %s16 = sadd.s32 1, %s12
  $region7: #{intra_gcn_forward.8} parent=0 // loop_footer_branch
    %11 = sbr.rel target = $region3
  $region8: #{intra_gcn_forward.8} parent=0 // loop_exit
    _

</llo_original>
